<compile_context>
chip_gen: v7x
topology: tpu7x:2x2x1
jax: 0.10.0
libtpu: 0.0.40
codegen_flags: <defaults>
</compile_context>

<pallas_src>
import functools

import jax
import jax.numpy as jnp
from jax.experimental import pallas as pl
from jax.experimental.pallas import tpu as pltpu


CFG = dict(vocab_size=100, hidden=32, num_heads=4, intermediate=64,
           max_pos=16, type_vocab=2, bert_layers=2, lstm_layers=2)

LN_EPS = 1e-12


def _ln(x, g, b, eps):
    mean = jnp.mean(x, axis=-1, keepdims=True)
    xc = x - mean
    var = jnp.mean(xc * xc, axis=-1, keepdims=True)
    return xc * jax.lax.rsqrt(var + eps) * g + b


# --------------------------------------------------------------------------
# The single fused kernel: embeddings -> LN -> BERT layers -> LSTM stack
# --------------------------------------------------------------------------

def _bert_lstm_kernel(*refs, B, S, nh, dh, V, n_bert, n_lstm, eps):
    H = nh * dh
    M = B * S

    idx = 0
    ids_ref = refs[idx]; idx += 1          # (M, 1) int32
    word_ref = refs[idx]; idx += 1         # (V, H)
    pos_ref = refs[idx]; idx += 1          # (P, H)
    type_ref = refs[idx]; idx += 1         # (TV, H)
    embg_ref = refs[idx]; idx += 1         # (1, H)
    embb_ref = refs[idx]; idx += 1         # (1, H)
    bert_refs = []
    for _ in range(n_bert):
        bert_refs.append(refs[idx:idx + 12]); idx += 12
    lstm_refs = []
    for _ in range(n_lstm):
        lstm_refs.append(refs[idx:idx + 3]); idx += 3
    o_ref = refs[idx]                      # (T=B, N=S, H)

    # ---- Embeddings: one-hot gather on the MXU + pos/type add + LayerNorm ----
    ids = ids_ref[...]                                           # (M, 1) int32
    iota = jax.lax.broadcasted_iota(jnp.int32, (M, V), 1)
    onehot = (iota == ids).astype(jnp.float32)                   # (M, V)
    emb = jnp.dot(onehot, word_ref[...], preferred_element_type=jnp.float32)
    pos = jnp.concatenate([pos_ref[0:S, :]] * B, axis=0)         # (M, H)
    emb = emb + pos + type_ref[0:1, :]                           # token type 0
    x = _ln(emb, embg_ref[...], embb_ref[...], eps)              # (M, H)

    scale = 1.0 / float(dh) ** 0.5

    # ---- BERT encoder layers (fused attention + FFN, all VMEM-resident) ----
    for (wqkv, bqkv, wo, bo, ln1g, ln1b, w1, b1, w2, b2, ln2g, ln2b) in bert_refs:
        # Fused QKV projection: one (M,H)@(H,3H) MXU pass.
        qkv = (jnp.dot(x, wqkv[...], preferred_element_type=jnp.float32)
               + bqkv[...])                                      # (M, 3H)

        def split_heads(off):
            # (M, H) head columns -> (nh*B, S, dh); batch index = h*B + b.
            return jnp.concatenate(
                [qkv[:, off + h * dh: off + (h + 1) * dh].reshape(B, S, dh)
                 for h in range(nh)], axis=0)

        q = split_heads(0)                                       # (nh*B, S, dh)
        k = split_heads(H)
        v = split_heads(2 * H)

        # One batched score matmul + one softmax + one batched context matmul
        # covering ALL heads and batches (single batch dim nh*B).
        s = jnp.einsum("bqd,bkd->bqk", q, k,
                       preferred_element_type=jnp.float32) * scale
        s = s - jnp.max(s, axis=-1, keepdims=True)
        p = jnp.exp(s)
        # TODO(synk): approx EUP reciprocal -> tiny relative error vs exact divide.
        p = p * pl.reciprocal(jnp.sum(p, axis=-1, keepdims=True), approx=True)
        ctx = jnp.einsum("bqk,bkd->bqd", p, v,
                         preferred_element_type=jnp.float32)     # (nh*B, S, dh)

        # Merge heads back to lane-dense (M, H) and do ONE output projection.
        ctx = jnp.concatenate(
            [ctx[h * B:(h + 1) * B].reshape(M, dh) for h in range(nh)], axis=-1)
        attn = (jnp.dot(ctx, wo[...], preferred_element_type=jnp.float32)
                + bo[...])

        x1 = _ln(attn + x, ln1g[...], ln1b[...], eps)

        inter = (jnp.dot(x1, w1[...], preferred_element_type=jnp.float32)
                 + b1[...])
        # TODO(synk): HF BERT default is exact (erf) GELU; tanh approximation used here.
        inter = jax.nn.gelu(inter, approximate=True)
        ffn = (jnp.dot(inter, w2[...], preferred_element_type=jnp.float32)
               + b2[...])
        x = _ln(ffn + x1, ln2g[...], ln2b[...], eps)

    # ---- nn.LSTM (batch_first=False): recurrence over leading axis of x ----
    T, N = B, S

    # Hoist layer-0 input projection over ALL time steps (one MXU pass);
    # only h @ W_hh remains on the serial critical path.
    w_ih0, w_hh0, b0 = lstm_refs[0]
    xg0 = (jnp.dot(x, w_ih0[...], preferred_element_type=jnp.float32)
           + b0[...])                                            # (M, 4H)

    def cell(gates_x, h, c, w_hh_ref):
        gates = gates_x + jnp.dot(h, w_hh_ref[...],
                                  preferred_element_type=jnp.float32)  # (N, 4H)
        sig = jax.nn.sigmoid(gates)      # one EUP pass on the full 128-lane vreg
        th = jnp.tanh(gates)             # one EUP pass
        i_g = sig[:, 0 * H:1 * H]
        f_g = sig[:, 1 * H:2 * H]
        g_g = th[:, 2 * H:3 * H]
        o_g = sig[:, 3 * H:4 * H]
        c_new = f_g * c + i_g * g_g
        h_new = o_g * jnp.tanh(c_new)
        return h_new, c_new

    z = jnp.zeros((N, H), jnp.float32)
    hc = [[z, z] for _ in range(n_lstm)]
    outs = []
    for t in range(T):                                 # T=2: static unroll
        h0, c0 = cell(xg0[t * N:(t + 1) * N, :], hc[0][0], hc[0][1], w_hh0)
        hc[0] = [h0, c0]
        inp = h0
        for l in range(1, n_lstm):
            w_ih, w_hh, b = lstm_refs[l]
            gx = (jnp.dot(inp, w_ih[...], preferred_element_type=jnp.float32)
                  + b[...])
            h, c = cell(gx, hc[l][0], hc[l][1], w_hh)
            hc[l] = [h, c]
            inp = h
        outs.append(inp)

    # Single store of the whole sequence (no per-step partial stores).
    o_ref[...] = jnp.stack(outs, axis=0)               # (T, N, H)


# --------------------------------------------------------------------------
# Wrapper: one pallas_call, no grid, everything whole-array in VMEM
# --------------------------------------------------------------------------

def bert_lstm_forward(params, ids, cfg):
    B, S = ids.shape
    H, nh = cfg["hidden"], cfg["num_heads"]
    dh = H // nh
    V = cfg["vocab_size"]
    n_bert = len(params["layers"])
    n_lstm = len(params["lstm"])

    args = [ids.reshape(B * S, 1).astype(jnp.int32),
            params["word_emb"], params["pos_emb"], params["type_emb"],
            params["emb_ln_g"].reshape(1, H), params["emb_ln_b"].reshape(1, H)]
    for lyr in params["layers"]:
        I = lyr["w1"].shape[1]
        args += [lyr["wqkv"], lyr["bqkv"].reshape(1, 3 * H),
                 lyr["wo"], lyr["bo"].reshape(1, H),
                 lyr["ln1_g"].reshape(1, H), lyr["ln1_b"].reshape(1, H),
                 lyr["w1"], lyr["b1"].reshape(1, I),
                 lyr["w2"], lyr["b2"].reshape(1, H),
                 lyr["ln2_g"].reshape(1, H), lyr["ln2_b"].reshape(1, H)]
    for lyr in params["lstm"]:
        args += [lyr["w_ih"], lyr["w_hh"], lyr["b"].reshape(1, 4 * H)]

    vmem = pl.BlockSpec(memory_space=pltpu.MemorySpace.VMEM)
    return pl.pallas_call(
        functools.partial(_bert_lstm_kernel, B=B, S=S, nh=nh, dh=dh, V=V,
                          n_bert=n_bert, n_lstm=n_lstm, eps=LN_EPS),
        out_shape=jax.ShapeDtypeStruct((B, S, H), jnp.float32),
        in_specs=[vmem] * len(args),
        out_specs=vmem,
    )(*args)


# --------------------------------------------------------------------------
# Parameters (deterministic synthetic init)
# --------------------------------------------------------------------------

def init_params(key, cfg):
    H, I = cfg["hidden"], cfg["intermediate"]
    keys = iter(jax.random.split(key, 256))

    def w(shape, scale=0.02):
        return jax.random.normal(next(keys), shape, jnp.float32) * scale

    params = dict(
        word_emb=w((cfg["vocab_size"], H)),
        pos_emb=w((cfg["max_pos"], H)),
        type_emb=w((cfg["type_vocab"], H)),
        emb_ln_g=jnp.ones((H,), jnp.float32),
        emb_ln_b=jnp.zeros((H,), jnp.float32),
        layers=[],
        lstm=[],
    )
    for _ in range(cfg["bert_layers"]):
        params["layers"].append(dict(
            wqkv=w((H, 3 * H)), bqkv=jnp.zeros((3 * H,), jnp.float32),
            wo=w((H, H)), bo=jnp.zeros((H,), jnp.float32),
            ln1_g=jnp.ones((H,), jnp.float32), ln1_b=jnp.zeros((H,), jnp.float32),
            w1=w((H, I)), b1=jnp.zeros((I,), jnp.float32),
            w2=w((I, H)), b2=jnp.zeros((H,), jnp.float32),
            ln2_g=jnp.ones((H,), jnp.float32), ln2_b=jnp.zeros((H,), jnp.float32),
        ))
    for _ in range(cfg["lstm_layers"]):
        params["lstm"].append(dict(
            w_ih=w((H, 4 * H), scale=0.1),
            w_hh=w((H, 4 * H), scale=0.1),
            b=jnp.zeros((4 * H,), jnp.float32),   # == bias_ih + bias_hh
        ))
    return params


if __name__ == "__main__":
    key = jax.random.PRNGKey(0)
    pkey, ikey = jax.random.split(key)
    params = init_params(pkey, CFG)
    # x: token ids, shape [batch=2, seq=8]
    ids = jax.random.randint(ikey, (2, 8), 0, CFG["vocab_size"], dtype=jnp.int32)

    fwd = jax.jit(functools.partial(bert_lstm_forward, cfg=CFG))
    out = fwd(params, ids)
    out = jax.block_until_ready(out)
    assert out.shape == (2, 8, CFG["hidden"]), out.shape
    assert out.dtype == jnp.float32
    print("KERNEL_OK")
</pallas_src>

<mosaic_0001>
module attributes {stable_mosaic.version = 11 : i64} {
  func.func @_bert_lstm_kernel(%arg0: memref<16x1xi32, #tpu.memory_space<vmem>>, %arg1: memref<100x32xf32, #tpu.memory_space<vmem>>, %arg2: memref<16x32xf32, #tpu.memory_space<vmem>>, %arg3: memref<2x32xf32, #tpu.memory_space<vmem>>, %arg4: memref<1x32xf32, #tpu.memory_space<vmem>>, %arg5: memref<1x32xf32, #tpu.memory_space<vmem>>, %arg6: memref<32x96xf32, #tpu.memory_space<vmem>>, %arg7: memref<1x96xf32, #tpu.memory_space<vmem>>, %arg8: memref<32x32xf32, #tpu.memory_space<vmem>>, %arg9: memref<1x32xf32, #tpu.memory_space<vmem>>, %arg10: memref<1x32xf32, #tpu.memory_space<vmem>>, %arg11: memref<1x32xf32, #tpu.memory_space<vmem>>, %arg12: memref<32x64xf32, #tpu.memory_space<vmem>>, %arg13: memref<1x64xf32, #tpu.memory_space<vmem>>, %arg14: memref<64x32xf32, #tpu.memory_space<vmem>>, %arg15: memref<1x32xf32, #tpu.memory_space<vmem>>, %arg16: memref<1x32xf32, #tpu.memory_space<vmem>>, %arg17: memref<1x32xf32, #tpu.memory_space<vmem>>, %arg18: memref<32x96xf32, #tpu.memory_space<vmem>>, %arg19: memref<1x96xf32, #tpu.memory_space<vmem>>, %arg20: memref<32x32xf32, #tpu.memory_space<vmem>>, %arg21: memref<1x32xf32, #tpu.memory_space<vmem>>, %arg22: memref<1x32xf32, #tpu.memory_space<vmem>>, %arg23: memref<1x32xf32, #tpu.memory_space<vmem>>, %arg24: memref<32x64xf32, #tpu.memory_space<vmem>>, %arg25: memref<1x64xf32, #tpu.memory_space<vmem>>, %arg26: memref<64x32xf32, #tpu.memory_space<vmem>>, %arg27: memref<1x32xf32, #tpu.memory_space<vmem>>, %arg28: memref<1x32xf32, #tpu.memory_space<vmem>>, %arg29: memref<1x32xf32, #tpu.memory_space<vmem>>, %arg30: memref<32x128xf32, #tpu.memory_space<vmem>>, %arg31: memref<32x128xf32, #tpu.memory_space<vmem>>, %arg32: memref<1x128xf32, #tpu.memory_space<vmem>>, %arg33: memref<32x128xf32, #tpu.memory_space<vmem>>, %arg34: memref<32x128xf32, #tpu.memory_space<vmem>>, %arg35: memref<1x128xf32, #tpu.memory_space<vmem>>, %arg36: memref<2x8x32xf32, #tpu.memory_space<vmem>>) attributes {dimension_semantics = [], scalar_prefetch = 0 : i64, scratch_operands = 0 : i64, tpu.core_type = #tpu.core_type<tc>} {
    %c0 = arith.constant 0 : index
    %c0_0 = arith.constant 0 : index
    %0 = vector.load %arg0[%c0, %c0_0] : memref<16x1xi32, #tpu.memory_space<vmem>>, vector<16x1xi32>
    %1 = tpu.iota {dimensions = array<i32: 1>} : vector<16x100xi32>
    %2 = vector.broadcast %0 : vector<16x1xi32> to vector<16x100xi32>
    %3 = arith.cmpi eq, %1, %2 : vector<16x100xi32>
    %4 = arith.extui %3 : vector<16x100xi1> to vector<16x100xi32>
    %5 = arith.sitofp %4 : vector<16x100xi32> to vector<16x100xf32>
    %c0_1 = arith.constant 0 : index
    %c0_2 = arith.constant 0 : index
    %6 = vector.load %arg1[%c0_1, %c0_2] : memref<100x32xf32, #tpu.memory_space<vmem>>, vector<100x32xf32>
    %cst = arith.constant dense<0.000000e+00> : vector<16x32xf32>
    %7 = tpu.matmul %5, %6, %cst {dimension_numbers = #tpu.dot_dimension_numbers<[1], [0], [0], [1], [0, 0, 1, 1], [], []>} : vector<16x100xf32>, vector<100x32xf32>, vector<16x32xf32> -> vector<16x32xf32>
    %c0_3 = arith.constant 0 : index
    %c0_4 = arith.constant 0 : index
    %8 = vector.load %arg2[%c0_3, %c0_4] : memref<16x32xf32, #tpu.memory_space<vmem>>, vector<8x32xf32>
    %9 = tpu.concatenate %8, %8 in 0 : vector<8x32xf32>, vector<8x32xf32> -> vector<16x32xf32>
    %10 = arith.addf %7, %9 : vector<16x32xf32>
    %c0_5 = arith.constant 0 : index
    %c0_6 = arith.constant 0 : index
    %11 = vector.load %arg3[%c0_5, %c0_6] : memref<2x32xf32, #tpu.memory_space<vmem>>, vector<1x32xf32>
    %12 = vector.broadcast %11 : vector<1x32xf32> to vector<16x32xf32>
    %13 = arith.addf %10, %12 : vector<16x32xf32>
    %c0_7 = arith.constant 0 : index
    %c0_8 = arith.constant 0 : index
    %14 = vector.load %arg4[%c0_7, %c0_8] : memref<1x32xf32, #tpu.memory_space<vmem>>, vector<1x32xf32>
    %c0_9 = arith.constant 0 : index
    %c0_10 = arith.constant 0 : index
    %15 = vector.load %arg5[%c0_9, %c0_10] : memref<1x32xf32, #tpu.memory_space<vmem>>, vector<1x32xf32>
    %cst_11 = arith.constant dense<0.000000e+00> : vector<16xf32>
    %16 = vector.multi_reduction <add>, %13, %cst_11 [1] : vector<16x32xf32> to vector<16xf32>
    %17 = vector.shape_cast %16 : vector<16xf32> to vector<16x1xf32>
    %cst_12 = arith.constant 3.200000e+01 : f32
    %18 = vector.broadcast %cst_12 : f32 to vector<16x1xf32>
    %19 = arith.divf %17, %18 : vector<16x1xf32>
    %20 = vector.broadcast %19 : vector<16x1xf32> to vector<16x32xf32>
    %21 = arith.subf %13, %20 : vector<16x32xf32>
    %22 = arith.mulf %21, %21 : vector<16x32xf32>
    %cst_13 = arith.constant dense<0.000000e+00> : vector<16xf32>
    %23 = vector.multi_reduction <add>, %22, %cst_13 [1] : vector<16x32xf32> to vector<16xf32>
    %24 = vector.shape_cast %23 : vector<16xf32> to vector<16x1xf32>
    %cst_14 = arith.constant 3.200000e+01 : f32
    %25 = vector.broadcast %cst_14 : f32 to vector<16x1xf32>
    %26 = arith.divf %24, %25 : vector<16x1xf32>
    %cst_15 = arith.constant 9.99999996E-13 : f32
    %27 = vector.broadcast %cst_15 : f32 to vector<16x1xf32>
    %28 = arith.addf %26, %27 : vector<16x1xf32>
    %29 = math.rsqrt %28 : vector<16x1xf32>
    %30 = vector.broadcast %29 : vector<16x1xf32> to vector<16x32xf32>
    %31 = arith.mulf %21, %30 : vector<16x32xf32>
    %32 = vector.broadcast %14 : vector<1x32xf32> to vector<16x32xf32>
    %33 = arith.mulf %31, %32 : vector<16x32xf32>
    %34 = vector.broadcast %15 : vector<1x32xf32> to vector<16x32xf32>
    %35 = arith.addf %33, %34 : vector<16x32xf32>
    %c0_16 = arith.constant 0 : index
    %c0_17 = arith.constant 0 : index
    %36 = vector.load %arg6[%c0_16, %c0_17] : memref<32x96xf32, #tpu.memory_space<vmem>>, vector<32x96xf32>
    %cst_18 = arith.constant dense<0.000000e+00> : vector<16x96xf32>
    %37 = tpu.matmul %35, %36, %cst_18 {dimension_numbers = #tpu.dot_dimension_numbers<[1], [0], [0], [1], [0, 0, 1, 1], [], []>} : vector<16x32xf32>, vector<32x96xf32>, vector<16x96xf32> -> vector<16x96xf32>
    %c0_19 = arith.constant 0 : index
    %c0_20 = arith.constant 0 : index
    %38 = vector.load %arg7[%c0_19, %c0_20] : memref<1x96xf32, #tpu.memory_space<vmem>>, vector<1x96xf32>
    %39 = vector.broadcast %38 : vector<1x96xf32> to vector<16x96xf32>
    %40 = arith.addf %37, %39 : vector<16x96xf32>
    %41 = vector.extract_strided_slice %40 {offsets = [0, 0], sizes = [16, 8], strides = [1, 1]} : vector<16x96xf32> to vector<16x8xf32>
    %42 = vector.shape_cast %41 : vector<16x8xf32> to vector<2x8x8xf32>
    %43 = vector.extract_strided_slice %40 {offsets = [0, 8], sizes = [16, 8], strides = [1, 1]} : vector<16x96xf32> to vector<16x8xf32>
    %44 = vector.shape_cast %43 : vector<16x8xf32> to vector<2x8x8xf32>
    %45 = vector.extract_strided_slice %40 {offsets = [0, 16], sizes = [16, 8], strides = [1, 1]} : vector<16x96xf32> to vector<16x8xf32>
    %46 = vector.shape_cast %45 : vector<16x8xf32> to vector<2x8x8xf32>
    %47 = vector.extract_strided_slice %40 {offsets = [0, 24], sizes = [16, 8], strides = [1, 1]} : vector<16x96xf32> to vector<16x8xf32>
    %48 = vector.shape_cast %47 : vector<16x8xf32> to vector<2x8x8xf32>
    %49 = tpu.concatenate %42, %44, %46, %48 in 0 : vector<2x8x8xf32>, vector<2x8x8xf32>, vector<2x8x8xf32>, vector<2x8x8xf32> -> vector<8x8x8xf32>
    %50 = vector.extract_strided_slice %40 {offsets = [0, 32], sizes = [16, 8], strides = [1, 1]} : vector<16x96xf32> to vector<16x8xf32>
    %51 = vector.shape_cast %50 : vector<16x8xf32> to vector<2x8x8xf32>
    %52 = vector.extract_strided_slice %40 {offsets = [0, 40], sizes = [16, 8], strides = [1, 1]} : vector<16x96xf32> to vector<16x8xf32>
    %53 = vector.shape_cast %52 : vector<16x8xf32> to vector<2x8x8xf32>
    %54 = vector.extract_strided_slice %40 {offsets = [0, 48], sizes = [16, 8], strides = [1, 1]} : vector<16x96xf32> to vector<16x8xf32>
    %55 = vector.shape_cast %54 : vector<16x8xf32> to vector<2x8x8xf32>
    %56 = vector.extract_strided_slice %40 {offsets = [0, 56], sizes = [16, 8], strides = [1, 1]} : vector<16x96xf32> to vector<16x8xf32>
    %57 = vector.shape_cast %56 : vector<16x8xf32> to vector<2x8x8xf32>
    %58 = tpu.concatenate %51, %53, %55, %57 in 0 : vector<2x8x8xf32>, vector<2x8x8xf32>, vector<2x8x8xf32>, vector<2x8x8xf32> -> vector<8x8x8xf32>
    %59 = vector.extract_strided_slice %40 {offsets = [0, 64], sizes = [16, 8], strides = [1, 1]} : vector<16x96xf32> to vector<16x8xf32>
    %60 = vector.shape_cast %59 : vector<16x8xf32> to vector<2x8x8xf32>
    %61 = vector.extract_strided_slice %40 {offsets = [0, 72], sizes = [16, 8], strides = [1, 1]} : vector<16x96xf32> to vector<16x8xf32>
    %62 = vector.shape_cast %61 : vector<16x8xf32> to vector<2x8x8xf32>
    %63 = vector.extract_strided_slice %40 {offsets = [0, 80], sizes = [16, 8], strides = [1, 1]} : vector<16x96xf32> to vector<16x8xf32>
    %64 = vector.shape_cast %63 : vector<16x8xf32> to vector<2x8x8xf32>
    %65 = vector.extract_strided_slice %40 {offsets = [0, 88], sizes = [16, 8], strides = [1, 1]} : vector<16x96xf32> to vector<16x8xf32>
    %66 = vector.shape_cast %65 : vector<16x8xf32> to vector<2x8x8xf32>
    %67 = tpu.concatenate %60, %62, %64, %66 in 0 : vector<2x8x8xf32>, vector<2x8x8xf32>, vector<2x8x8xf32>, vector<2x8x8xf32> -> vector<8x8x8xf32>
    "tpu.trace_start"() <{level = 10 : i32, message = "bqd,bkd->bqk"}> : () -> ()
    %cst_21 = arith.constant dense<0.000000e+00> : vector<8x8x8xf32>
    %68 = tpu.matmul %49, %58, %cst_21 {dimension_numbers = #tpu.dot_dimension_numbers<[2], [2], [1], [1], [0, 0, 0, 1, 1, 1], [0], [0]>} : vector<8x8x8xf32>, vector<8x8x8xf32>, vector<8x8x8xf32> -> vector<8x8x8xf32>
    "tpu.trace_stop"() : () -> ()
    %cst_22 = arith.constant 0.353553385 : f32
    %69 = vector.broadcast %cst_22 : f32 to vector<8x8x8xf32>
    %70 = arith.mulf %68, %69 : vector<8x8x8xf32>
    %cst_23 = arith.constant dense<0xFF800000> : vector<8x8xf32>
    %71 = vector.multi_reduction <maximumf>, %70, %cst_23 [2] : vector<8x8x8xf32> to vector<8x8xf32>
    %72 = vector.shape_cast %71 : vector<8x8xf32> to vector<8x8x1xf32>
    %73 = vector.broadcast %72 : vector<8x8x1xf32> to vector<8x8x8xf32>
    %74 = arith.subf %70, %73 : vector<8x8x8xf32>
    %75 = math.exp %74 : vector<8x8x8xf32>
    %cst_24 = arith.constant dense<0.000000e+00> : vector<8x8xf32>
    %76 = vector.multi_reduction <add>, %75, %cst_24 [2] : vector<8x8x8xf32> to vector<8x8xf32>
    %77 = vector.shape_cast %76 : vector<8x8xf32> to vector<8x8x1xf32>
    %78 = tpu.reciprocal %77 {approx = true} : vector<8x8x1xf32> -> vector<8x8x1xf32>
    %79 = vector.broadcast %78 : vector<8x8x1xf32> to vector<8x8x8xf32>
    %80 = arith.mulf %75, %79 : vector<8x8x8xf32>
    "tpu.trace_start"() <{level = 10 : i32, message = "bqk,bkd->bqd"}> : () -> ()
    %cst_25 = arith.constant dense<0.000000e+00> : vector<8x8x8xf32>
    %81 = tpu.matmul %80, %67, %cst_25 {dimension_numbers = #tpu.dot_dimension_numbers<[2], [1], [1], [2], [0, 0, 0, 1, 1, 2], [0], [0]>} : vector<8x8x8xf32>, vector<8x8x8xf32>, vector<8x8x8xf32> -> vector<8x8x8xf32>
    "tpu.trace_stop"() : () -> ()
    %82 = vector.extract_strided_slice %81 {offsets = [0, 0, 0], sizes = [2, 8, 8], strides = [1, 1, 1]} : vector<8x8x8xf32> to vector<2x8x8xf32>
    %83 = vector.shape_cast %82 : vector<2x8x8xf32> to vector<16x8xf32>
    %84 = vector.extract_strided_slice %81 {offsets = [2, 0, 0], sizes = [2, 8, 8], strides = [1, 1, 1]} : vector<8x8x8xf32> to vector<2x8x8xf32>
    %85 = vector.shape_cast %84 : vector<2x8x8xf32> to vector<16x8xf32>
    %86 = vector.extract_strided_slice %81 {offsets = [4, 0, 0], sizes = [2, 8, 8], strides = [1, 1, 1]} : vector<8x8x8xf32> to vector<2x8x8xf32>
    %87 = vector.shape_cast %86 : vector<2x8x8xf32> to vector<16x8xf32>
    %88 = vector.extract_strided_slice %81 {offsets = [6, 0, 0], sizes = [2, 8, 8], strides = [1, 1, 1]} : vector<8x8x8xf32> to vector<2x8x8xf32>
    %89 = vector.shape_cast %88 : vector<2x8x8xf32> to vector<16x8xf32>
    %90 = tpu.concatenate %83, %85, %87, %89 in 1 : vector<16x8xf32>, vector<16x8xf32>, vector<16x8xf32>, vector<16x8xf32> -> vector<16x32xf32>
    %c0_26 = arith.constant 0 : index
    %c0_27 = arith.constant 0 : index
    %91 = vector.load %arg8[%c0_26, %c0_27] : memref<32x32xf32, #tpu.memory_space<vmem>>, vector<32x32xf32>
    %cst_28 = arith.constant dense<0.000000e+00> : vector<16x32xf32>
    %92 = tpu.matmul %90, %91, %cst_28 {dimension_numbers = #tpu.dot_dimension_numbers<[1], [0], [0], [1], [0, 0, 1, 1], [], []>} : vector<16x32xf32>, vector<32x32xf32>, vector<16x32xf32> -> vector<16x32xf32>
    %c0_29 = arith.constant 0 : index
    %c0_30 = arith.constant 0 : index
    %93 = vector.load %arg9[%c0_29, %c0_30] : memref<1x32xf32, #tpu.memory_space<vmem>>, vector<1x32xf32>
    %94 = vector.broadcast %93 : vector<1x32xf32> to vector<16x32xf32>
    %95 = arith.addf %92, %94 : vector<16x32xf32>
    %96 = arith.addf %95, %35 : vector<16x32xf32>
    %c0_31 = arith.constant 0 : index
    %c0_32 = arith.constant 0 : index
    %97 = vector.load %arg10[%c0_31, %c0_32] : memref<1x32xf32, #tpu.memory_space<vmem>>, vector<1x32xf32>
    %c0_33 = arith.constant 0 : index
    %c0_34 = arith.constant 0 : index
    %98 = vector.load %arg11[%c0_33, %c0_34] : memref<1x32xf32, #tpu.memory_space<vmem>>, vector<1x32xf32>
    %cst_35 = arith.constant dense<0.000000e+00> : vector<16xf32>
    %99 = vector.multi_reduction <add>, %96, %cst_35 [1] : vector<16x32xf32> to vector<16xf32>
    %100 = vector.shape_cast %99 : vector<16xf32> to vector<16x1xf32>
    %cst_36 = arith.constant 3.200000e+01 : f32
    %101 = vector.broadcast %cst_36 : f32 to vector<16x1xf32>
    %102 = arith.divf %100, %101 : vector<16x1xf32>
    %103 = vector.broadcast %102 : vector<16x1xf32> to vector<16x32xf32>
    %104 = arith.subf %96, %103 : vector<16x32xf32>
    %105 = arith.mulf %104, %104 : vector<16x32xf32>
    %cst_37 = arith.constant dense<0.000000e+00> : vector<16xf32>
    %106 = vector.multi_reduction <add>, %105, %cst_37 [1] : vector<16x32xf32> to vector<16xf32>
    %107 = vector.shape_cast %106 : vector<16xf32> to vector<16x1xf32>
    %cst_38 = arith.constant 3.200000e+01 : f32
    %108 = vector.broadcast %cst_38 : f32 to vector<16x1xf32>
    %109 = arith.divf %107, %108 : vector<16x1xf32>
    %cst_39 = arith.constant 9.99999996E-13 : f32
    %110 = vector.broadcast %cst_39 : f32 to vector<16x1xf32>
    %111 = arith.addf %109, %110 : vector<16x1xf32>
    %112 = math.rsqrt %111 : vector<16x1xf32>
    %113 = vector.broadcast %112 : vector<16x1xf32> to vector<16x32xf32>
    %114 = arith.mulf %104, %113 : vector<16x32xf32>
    %115 = vector.broadcast %97 : vector<1x32xf32> to vector<16x32xf32>
    %116 = arith.mulf %114, %115 : vector<16x32xf32>
    %117 = vector.broadcast %98 : vector<1x32xf32> to vector<16x32xf32>
    %118 = arith.addf %116, %117 : vector<16x32xf32>
    %c0_40 = arith.constant 0 : index
    %c0_41 = arith.constant 0 : index
    %119 = vector.load %arg12[%c0_40, %c0_41] : memref<32x64xf32, #tpu.memory_space<vmem>>, vector<32x64xf32>
    %cst_42 = arith.constant dense<0.000000e+00> : vector<16x64xf32>
    %120 = tpu.matmul %118, %119, %cst_42 {dimension_numbers = #tpu.dot_dimension_numbers<[1], [0], [0], [1], [0, 0, 1, 1], [], []>} : vector<16x32xf32>, vector<32x64xf32>, vector<16x64xf32> -> vector<16x64xf32>
    %c0_43 = arith.constant 0 : index
    %c0_44 = arith.constant 0 : index
    %121 = vector.load %arg13[%c0_43, %c0_44] : memref<1x64xf32, #tpu.memory_space<vmem>>, vector<1x64xf32>
    %122 = vector.broadcast %121 : vector<1x64xf32> to vector<16x64xf32>
    %123 = arith.addf %120, %122 : vector<16x64xf32>
    %124 = arith.mulf %123, %123 : vector<16x64xf32>
    %125 = arith.mulf %123, %124 : vector<16x64xf32>
    %cst_45 = arith.constant 4.471500e-02 : f32
    %126 = vector.broadcast %cst_45 : f32 to vector<16x64xf32>
    %127 = arith.mulf %126, %125 : vector<16x64xf32>
    %128 = arith.addf %123, %127 : vector<16x64xf32>
    %cst_46 = arith.constant 0.797884583 : f32
    %129 = vector.broadcast %cst_46 : f32 to vector<16x64xf32>
    %130 = arith.mulf %129, %128 : vector<16x64xf32>
    %131 = math.tanh %130 : vector<16x64xf32>
    %cst_47 = arith.constant 1.000000e+00 : f32
    %132 = vector.broadcast %cst_47 : f32 to vector<16x64xf32>
    %133 = arith.addf %132, %131 : vector<16x64xf32>
    %cst_48 = arith.constant 5.000000e-01 : f32
    %134 = vector.broadcast %cst_48 : f32 to vector<16x64xf32>
    %135 = arith.mulf %134, %133 : vector<16x64xf32>
    %136 = arith.mulf %123, %135 : vector<16x64xf32>
    %c0_49 = arith.constant 0 : index
    %c0_50 = arith.constant 0 : index
    %137 = vector.load %arg14[%c0_49, %c0_50] : memref<64x32xf32, #tpu.memory_space<vmem>>, vector<64x32xf32>
    %cst_51 = arith.constant dense<0.000000e+00> : vector<16x32xf32>
    %138 = tpu.matmul %136, %137, %cst_51 {dimension_numbers = #tpu.dot_dimension_numbers<[1], [0], [0], [1], [0, 0, 1, 1], [], []>} : vector<16x64xf32>, vector<64x32xf32>, vector<16x32xf32> -> vector<16x32xf32>
    %c0_52 = arith.constant 0 : index
    %c0_53 = arith.constant 0 : index
    %139 = vector.load %arg15[%c0_52, %c0_53] : memref<1x32xf32, #tpu.memory_space<vmem>>, vector<1x32xf32>
    %140 = vector.broadcast %139 : vector<1x32xf32> to vector<16x32xf32>
    %141 = arith.addf %138, %140 : vector<16x32xf32>
    %142 = arith.addf %141, %118 : vector<16x32xf32>
    %c0_54 = arith.constant 0 : index
    %c0_55 = arith.constant 0 : index
    %143 = vector.load %arg16[%c0_54, %c0_55] : memref<1x32xf32, #tpu.memory_space<vmem>>, vector<1x32xf32>
    %c0_56 = arith.constant 0 : index
    %c0_57 = arith.constant 0 : index
    %144 = vector.load %arg17[%c0_56, %c0_57] : memref<1x32xf32, #tpu.memory_space<vmem>>, vector<1x32xf32>
    %cst_58 = arith.constant dense<0.000000e+00> : vector<16xf32>
    %145 = vector.multi_reduction <add>, %142, %cst_58 [1] : vector<16x32xf32> to vector<16xf32>
    %146 = vector.shape_cast %145 : vector<16xf32> to vector<16x1xf32>
    %cst_59 = arith.constant 3.200000e+01 : f32
    %147 = vector.broadcast %cst_59 : f32 to vector<16x1xf32>
    %148 = arith.divf %146, %147 : vector<16x1xf32>
    %149 = vector.broadcast %148 : vector<16x1xf32> to vector<16x32xf32>
    %150 = arith.subf %142, %149 : vector<16x32xf32>
    %151 = arith.mulf %150, %150 : vector<16x32xf32>
    %cst_60 = arith.constant dense<0.000000e+00> : vector<16xf32>
    %152 = vector.multi_reduction <add>, %151, %cst_60 [1] : vector<16x32xf32> to vector<16xf32>
    %153 = vector.shape_cast %152 : vector<16xf32> to vector<16x1xf32>
    %cst_61 = arith.constant 3.200000e+01 : f32
    %154 = vector.broadcast %cst_61 : f32 to vector<16x1xf32>
    %155 = arith.divf %153, %154 : vector<16x1xf32>
    %cst_62 = arith.constant 9.99999996E-13 : f32
    %156 = vector.broadcast %cst_62 : f32 to vector<16x1xf32>
    %157 = arith.addf %155, %156 : vector<16x1xf32>
    %158 = math.rsqrt %157 : vector<16x1xf32>
    %159 = vector.broadcast %158 : vector<16x1xf32> to vector<16x32xf32>
    %160 = arith.mulf %150, %159 : vector<16x32xf32>
    %161 = vector.broadcast %143 : vector<1x32xf32> to vector<16x32xf32>
    %162 = arith.mulf %160, %161 : vector<16x32xf32>
    %163 = vector.broadcast %144 : vector<1x32xf32> to vector<16x32xf32>
    %164 = arith.addf %162, %163 : vector<16x32xf32>
    %c0_63 = arith.constant 0 : index
    %c0_64 = arith.constant 0 : index
    %165 = vector.load %arg18[%c0_63, %c0_64] : memref<32x96xf32, #tpu.memory_space<vmem>>, vector<32x96xf32>
    %cst_65 = arith.constant dense<0.000000e+00> : vector<16x96xf32>
    %166 = tpu.matmul %164, %165, %cst_65 {dimension_numbers = #tpu.dot_dimension_numbers<[1], [0], [0], [1], [0, 0, 1, 1], [], []>} : vector<16x32xf32>, vector<32x96xf32>, vector<16x96xf32> -> vector<16x96xf32>
    %c0_66 = arith.constant 0 : index
    %c0_67 = arith.constant 0 : index
    %167 = vector.load %arg19[%c0_66, %c0_67] : memref<1x96xf32, #tpu.memory_space<vmem>>, vector<1x96xf32>
    %168 = vector.broadcast %167 : vector<1x96xf32> to vector<16x96xf32>
    %169 = arith.addf %166, %168 : vector<16x96xf32>
    %170 = vector.extract_strided_slice %169 {offsets = [0, 0], sizes = [16, 8], strides = [1, 1]} : vector<16x96xf32> to vector<16x8xf32>
    %171 = vector.shape_cast %170 : vector<16x8xf32> to vector<2x8x8xf32>
    %172 = vector.extract_strided_slice %169 {offsets = [0, 8], sizes = [16, 8], strides = [1, 1]} : vector<16x96xf32> to vector<16x8xf32>
    %173 = vector.shape_cast %172 : vector<16x8xf32> to vector<2x8x8xf32>
    %174 = vector.extract_strided_slice %169 {offsets = [0, 16], sizes = [16, 8], strides = [1, 1]} : vector<16x96xf32> to vector<16x8xf32>
    %175 = vector.shape_cast %174 : vector<16x8xf32> to vector<2x8x8xf32>
    %176 = vector.extract_strided_slice %169 {offsets = [0, 24], sizes = [16, 8], strides = [1, 1]} : vector<16x96xf32> to vector<16x8xf32>
    %177 = vector.shape_cast %176 : vector<16x8xf32> to vector<2x8x8xf32>
    %178 = tpu.concatenate %171, %173, %175, %177 in 0 : vector<2x8x8xf32>, vector<2x8x8xf32>, vector<2x8x8xf32>, vector<2x8x8xf32> -> vector<8x8x8xf32>
    %179 = vector.extract_strided_slice %169 {offsets = [0, 32], sizes = [16, 8], strides = [1, 1]} : vector<16x96xf32> to vector<16x8xf32>
    %180 = vector.shape_cast %179 : vector<16x8xf32> to vector<2x8x8xf32>
    %181 = vector.extract_strided_slice %169 {offsets = [0, 40], sizes = [16, 8], strides = [1, 1]} : vector<16x96xf32> to vector<16x8xf32>
    %182 = vector.shape_cast %181 : vector<16x8xf32> to vector<2x8x8xf32>
    %183 = vector.extract_strided_slice %169 {offsets = [0, 48], sizes = [16, 8], strides = [1, 1]} : vector<16x96xf32> to vector<16x8xf32>
    %184 = vector.shape_cast %183 : vector<16x8xf32> to vector<2x8x8xf32>
    %185 = vector.extract_strided_slice %169 {offsets = [0, 56], sizes = [16, 8], strides = [1, 1]} : vector<16x96xf32> to vector<16x8xf32>
    %186 = vector.shape_cast %185 : vector<16x8xf32> to vector<2x8x8xf32>
    %187 = tpu.concatenate %180, %182, %184, %186 in 0 : vector<2x8x8xf32>, vector<2x8x8xf32>, vector<2x8x8xf32>, vector<2x8x8xf32> -> vector<8x8x8xf32>
    %188 = vector.extract_strided_slice %169 {offsets = [0, 64], sizes = [16, 8], strides = [1, 1]} : vector<16x96xf32> to vector<16x8xf32>
    %189 = vector.shape_cast %188 : vector<16x8xf32> to vector<2x8x8xf32>
    %190 = vector.extract_strided_slice %169 {offsets = [0, 72], sizes = [16, 8], strides = [1, 1]} : vector<16x96xf32> to vector<16x8xf32>
    %191 = vector.shape_cast %190 : vector<16x8xf32> to vector<2x8x8xf32>
    %192 = vector.extract_strided_slice %169 {offsets = [0, 80], sizes = [16, 8], strides = [1, 1]} : vector<16x96xf32> to vector<16x8xf32>
    %193 = vector.shape_cast %192 : vector<16x8xf32> to vector<2x8x8xf32>
    %194 = vector.extract_strided_slice %169 {offsets = [0, 88], sizes = [16, 8], strides = [1, 1]} : vector<16x96xf32> to vector<16x8xf32>
    %195 = vector.shape_cast %194 : vector<16x8xf32> to vector<2x8x8xf32>
    %196 = tpu.concatenate %189, %191, %193, %195 in 0 : vector<2x8x8xf32>, vector<2x8x8xf32>, vector<2x8x8xf32>, vector<2x8x8xf32> -> vector<8x8x8xf32>
    "tpu.trace_start"() <{level = 10 : i32, message = "bqd,bkd->bqk"}> : () -> ()
    %cst_68 = arith.constant dense<0.000000e+00> : vector<8x8x8xf32>
    %197 = tpu.matmul %178, %187, %cst_68 {dimension_numbers = #tpu.dot_dimension_numbers<[2], [2], [1], [1], [0, 0, 0, 1, 1, 1], [0], [0]>} : vector<8x8x8xf32>, vector<8x8x8xf32>, vector<8x8x8xf32> -> vector<8x8x8xf32>
    "tpu.trace_stop"() : () -> ()
    %cst_69 = arith.constant 0.353553385 : f32
    %198 = vector.broadcast %cst_69 : f32 to vector<8x8x8xf32>
    %199 = arith.mulf %197, %198 : vector<8x8x8xf32>
    %cst_70 = arith.constant dense<0xFF800000> : vector<8x8xf32>
    %200 = vector.multi_reduction <maximumf>, %199, %cst_70 [2] : vector<8x8x8xf32> to vector<8x8xf32>
    %201 = vector.shape_cast %200 : vector<8x8xf32> to vector<8x8x1xf32>
    %202 = vector.broadcast %201 : vector<8x8x1xf32> to vector<8x8x8xf32>
    %203 = arith.subf %199, %202 : vector<8x8x8xf32>
    %204 = math.exp %203 : vector<8x8x8xf32>
    %cst_71 = arith.constant dense<0.000000e+00> : vector<8x8xf32>
    %205 = vector.multi_reduction <add>, %204, %cst_71 [2] : vector<8x8x8xf32> to vector<8x8xf32>
    %206 = vector.shape_cast %205 : vector<8x8xf32> to vector<8x8x1xf32>
    %207 = tpu.reciprocal %206 {approx = true} : vector<8x8x1xf32> -> vector<8x8x1xf32>
    %208 = vector.broadcast %207 : vector<8x8x1xf32> to vector<8x8x8xf32>
    %209 = arith.mulf %204, %208 : vector<8x8x8xf32>
    "tpu.trace_start"() <{level = 10 : i32, message = "bqk,bkd->bqd"}> : () -> ()
    %cst_72 = arith.constant dense<0.000000e+00> : vector<8x8x8xf32>
    %210 = tpu.matmul %209, %196, %cst_72 {dimension_numbers = #tpu.dot_dimension_numbers<[2], [1], [1], [2], [0, 0, 0, 1, 1, 2], [0], [0]>} : vector<8x8x8xf32>, vector<8x8x8xf32>, vector<8x8x8xf32> -> vector<8x8x8xf32>
    "tpu.trace_stop"() : () -> ()
    %211 = vector.extract_strided_slice %210 {offsets = [0, 0, 0], sizes = [2, 8, 8], strides = [1, 1, 1]} : vector<8x8x8xf32> to vector<2x8x8xf32>
    %212 = vector.shape_cast %211 : vector<2x8x8xf32> to vector<16x8xf32>
    %213 = vector.extract_strided_slice %210 {offsets = [2, 0, 0], sizes = [2, 8, 8], strides = [1, 1, 1]} : vector<8x8x8xf32> to vector<2x8x8xf32>
    %214 = vector.shape_cast %213 : vector<2x8x8xf32> to vector<16x8xf32>
    %215 = vector.extract_strided_slice %210 {offsets = [4, 0, 0], sizes = [2, 8, 8], strides = [1, 1, 1]} : vector<8x8x8xf32> to vector<2x8x8xf32>
    %216 = vector.shape_cast %215 : vector<2x8x8xf32> to vector<16x8xf32>
    %217 = vector.extract_strided_slice %210 {offsets = [6, 0, 0], sizes = [2, 8, 8], strides = [1, 1, 1]} : vector<8x8x8xf32> to vector<2x8x8xf32>
    %218 = vector.shape_cast %217 : vector<2x8x8xf32> to vector<16x8xf32>
    %219 = tpu.concatenate %212, %214, %216, %218 in 1 : vector<16x8xf32>, vector<16x8xf32>, vector<16x8xf32>, vector<16x8xf32> -> vector<16x32xf32>
    %c0_73 = arith.constant 0 : index
    %c0_74 = arith.constant 0 : index
    %220 = vector.load %arg20[%c0_73, %c0_74] : memref<32x32xf32, #tpu.memory_space<vmem>>, vector<32x32xf32>
    %cst_75 = arith.constant dense<0.000000e+00> : vector<16x32xf32>
    %221 = tpu.matmul %219, %220, %cst_75 {dimension_numbers = #tpu.dot_dimension_numbers<[1], [0], [0], [1], [0, 0, 1, 1], [], []>} : vector<16x32xf32>, vector<32x32xf32>, vector<16x32xf32> -> vector<16x32xf32>
    %c0_76 = arith.constant 0 : index
    %c0_77 = arith.constant 0 : index
    %222 = vector.load %arg21[%c0_76, %c0_77] : memref<1x32xf32, #tpu.memory_space<vmem>>, vector<1x32xf32>
    %223 = vector.broadcast %222 : vector<1x32xf32> to vector<16x32xf32>
    %224 = arith.addf %221, %223 : vector<16x32xf32>
    %225 = arith.addf %224, %164 : vector<16x32xf32>
    %c0_78 = arith.constant 0 : index
    %c0_79 = arith.constant 0 : index
    %226 = vector.load %arg22[%c0_78, %c0_79] : memref<1x32xf32, #tpu.memory_space<vmem>>, vector<1x32xf32>
    %c0_80 = arith.constant 0 : index
    %c0_81 = arith.constant 0 : index
    %227 = vector.load %arg23[%c0_80, %c0_81] : memref<1x32xf32, #tpu.memory_space<vmem>>, vector<1x32xf32>
    %cst_82 = arith.constant dense<0.000000e+00> : vector<16xf32>
    %228 = vector.multi_reduction <add>, %225, %cst_82 [1] : vector<16x32xf32> to vector<16xf32>
    %229 = vector.shape_cast %228 : vector<16xf32> to vector<16x1xf32>
    %cst_83 = arith.constant 3.200000e+01 : f32
    %230 = vector.broadcast %cst_83 : f32 to vector<16x1xf32>
    %231 = arith.divf %229, %230 : vector<16x1xf32>
    %232 = vector.broadcast %231 : vector<16x1xf32> to vector<16x32xf32>
    %233 = arith.subf %225, %232 : vector<16x32xf32>
    %234 = arith.mulf %233, %233 : vector<16x32xf32>
    %cst_84 = arith.constant dense<0.000000e+00> : vector<16xf32>
    %235 = vector.multi_reduction <add>, %234, %cst_84 [1] : vector<16x32xf32> to vector<16xf32>
    %236 = vector.shape_cast %235 : vector<16xf32> to vector<16x1xf32>
    %cst_85 = arith.constant 3.200000e+01 : f32
    %237 = vector.broadcast %cst_85 : f32 to vector<16x1xf32>
    %238 = arith.divf %236, %237 : vector<16x1xf32>
    %cst_86 = arith.constant 9.99999996E-13 : f32
    %239 = vector.broadcast %cst_86 : f32 to vector<16x1xf32>
    %240 = arith.addf %238, %239 : vector<16x1xf32>
    %241 = math.rsqrt %240 : vector<16x1xf32>
    %242 = vector.broadcast %241 : vector<16x1xf32> to vector<16x32xf32>
    %243 = arith.mulf %233, %242 : vector<16x32xf32>
    %244 = vector.broadcast %226 : vector<1x32xf32> to vector<16x32xf32>
    %245 = arith.mulf %243, %244 : vector<16x32xf32>
    %246 = vector.broadcast %227 : vector<1x32xf32> to vector<16x32xf32>
    %247 = arith.addf %245, %246 : vector<16x32xf32>
    %c0_87 = arith.constant 0 : index
    %c0_88 = arith.constant 0 : index
    %248 = vector.load %arg24[%c0_87, %c0_88] : memref<32x64xf32, #tpu.memory_space<vmem>>, vector<32x64xf32>
    %cst_89 = arith.constant dense<0.000000e+00> : vector<16x64xf32>
    %249 = tpu.matmul %247, %248, %cst_89 {dimension_numbers = #tpu.dot_dimension_numbers<[1], [0], [0], [1], [0, 0, 1, 1], [], []>} : vector<16x32xf32>, vector<32x64xf32>, vector<16x64xf32> -> vector<16x64xf32>
    %c0_90 = arith.constant 0 : index
    %c0_91 = arith.constant 0 : index
    %250 = vector.load %arg25[%c0_90, %c0_91] : memref<1x64xf32, #tpu.memory_space<vmem>>, vector<1x64xf32>
    %251 = vector.broadcast %250 : vector<1x64xf32> to vector<16x64xf32>
    %252 = arith.addf %249, %251 : vector<16x64xf32>
    %253 = arith.mulf %252, %252 : vector<16x64xf32>
    %254 = arith.mulf %252, %253 : vector<16x64xf32>
    %cst_92 = arith.constant 4.471500e-02 : f32
    %255 = vector.broadcast %cst_92 : f32 to vector<16x64xf32>
    %256 = arith.mulf %255, %254 : vector<16x64xf32>
    %257 = arith.addf %252, %256 : vector<16x64xf32>
    %cst_93 = arith.constant 0.797884583 : f32
    %258 = vector.broadcast %cst_93 : f32 to vector<16x64xf32>
    %259 = arith.mulf %258, %257 : vector<16x64xf32>
    %260 = math.tanh %259 : vector<16x64xf32>
    %cst_94 = arith.constant 1.000000e+00 : f32
    %261 = vector.broadcast %cst_94 : f32 to vector<16x64xf32>
    %262 = arith.addf %261, %260 : vector<16x64xf32>
    %cst_95 = arith.constant 5.000000e-01 : f32
    %263 = vector.broadcast %cst_95 : f32 to vector<16x64xf32>
    %264 = arith.mulf %263, %262 : vector<16x64xf32>
    %265 = arith.mulf %252, %264 : vector<16x64xf32>
    %c0_96 = arith.constant 0 : index
    %c0_97 = arith.constant 0 : index
    %266 = vector.load %arg26[%c0_96, %c0_97] : memref<64x32xf32, #tpu.memory_space<vmem>>, vector<64x32xf32>
    %cst_98 = arith.constant dense<0.000000e+00> : vector<16x32xf32>
    %267 = tpu.matmul %265, %266, %cst_98 {dimension_numbers = #tpu.dot_dimension_numbers<[1], [0], [0], [1], [0, 0, 1, 1], [], []>} : vector<16x64xf32>, vector<64x32xf32>, vector<16x32xf32> -> vector<16x32xf32>
    %c0_99 = arith.constant 0 : index
    %c0_100 = arith.constant 0 : index
    %268 = vector.load %arg27[%c0_99, %c0_100] : memref<1x32xf32, #tpu.memory_space<vmem>>, vector<1x32xf32>
    %269 = vector.broadcast %268 : vector<1x32xf32> to vector<16x32xf32>
    %270 = arith.addf %267, %269 : vector<16x32xf32>
    %271 = arith.addf %270, %247 : vector<16x32xf32>
    %c0_101 = arith.constant 0 : index
    %c0_102 = arith.constant 0 : index
    %272 = vector.load %arg28[%c0_101, %c0_102] : memref<1x32xf32, #tpu.memory_space<vmem>>, vector<1x32xf32>
    %c0_103 = arith.constant 0 : index
    %c0_104 = arith.constant 0 : index
    %273 = vector.load %arg29[%c0_103, %c0_104] : memref<1x32xf32, #tpu.memory_space<vmem>>, vector<1x32xf32>
    %cst_105 = arith.constant dense<0.000000e+00> : vector<16xf32>
    %274 = vector.multi_reduction <add>, %271, %cst_105 [1] : vector<16x32xf32> to vector<16xf32>
    %275 = vector.shape_cast %274 : vector<16xf32> to vector<16x1xf32>
    %cst_106 = arith.constant 3.200000e+01 : f32
    %276 = vector.broadcast %cst_106 : f32 to vector<16x1xf32>
    %277 = arith.divf %275, %276 : vector<16x1xf32>
    %278 = vector.broadcast %277 : vector<16x1xf32> to vector<16x32xf32>
    %279 = arith.subf %271, %278 : vector<16x32xf32>
    %280 = arith.mulf %279, %279 : vector<16x32xf32>
    %cst_107 = arith.constant dense<0.000000e+00> : vector<16xf32>
    %281 = vector.multi_reduction <add>, %280, %cst_107 [1] : vector<16x32xf32> to vector<16xf32>
    %282 = vector.shape_cast %281 : vector<16xf32> to vector<16x1xf32>
    %cst_108 = arith.constant 3.200000e+01 : f32
    %283 = vector.broadcast %cst_108 : f32 to vector<16x1xf32>
    %284 = arith.divf %282, %283 : vector<16x1xf32>
    %cst_109 = arith.constant 9.99999996E-13 : f32
    %285 = vector.broadcast %cst_109 : f32 to vector<16x1xf32>
    %286 = arith.addf %284, %285 : vector<16x1xf32>
    %287 = math.rsqrt %286 : vector<16x1xf32>
    %288 = vector.broadcast %287 : vector<16x1xf32> to vector<16x32xf32>
    %289 = arith.mulf %279, %288 : vector<16x32xf32>
    %290 = vector.broadcast %272 : vector<1x32xf32> to vector<16x32xf32>
    %291 = arith.mulf %289, %290 : vector<16x32xf32>
    %292 = vector.broadcast %273 : vector<1x32xf32> to vector<16x32xf32>
    %293 = arith.addf %291, %292 : vector<16x32xf32>
    %c0_110 = arith.constant 0 : index
    %c0_111 = arith.constant 0 : index
    %294 = vector.load %arg30[%c0_110, %c0_111] : memref<32x128xf32, #tpu.memory_space<vmem>>, vector<32x128xf32>
    %cst_112 = arith.constant dense<0.000000e+00> : vector<16x128xf32>
    %295 = tpu.matmul %293, %294, %cst_112 {dimension_numbers = #tpu.dot_dimension_numbers<[1], [0], [0], [1], [0, 0, 1, 1], [], []>} : vector<16x32xf32>, vector<32x128xf32>, vector<16x128xf32> -> vector<16x128xf32>
    %c0_113 = arith.constant 0 : index
    %c0_114 = arith.constant 0 : index
    %296 = vector.load %arg32[%c0_113, %c0_114] : memref<1x128xf32, #tpu.memory_space<vmem>>, vector<1x128xf32>
    %297 = vector.broadcast %296 : vector<1x128xf32> to vector<16x128xf32>
    %298 = arith.addf %295, %297 : vector<16x128xf32>
    %cst_115 = arith.constant 0.000000e+00 : f32
    %299 = vector.broadcast %cst_115 : f32 to vector<8x32xf32>
    %300 = vector.extract_strided_slice %298 {offsets = [0, 0], sizes = [8, 128], strides = [1, 1]} : vector<16x128xf32> to vector<8x128xf32>
    %c0_116 = arith.constant 0 : index
    %c0_117 = arith.constant 0 : index
    %301 = vector.load %arg31[%c0_116, %c0_117] : memref<32x128xf32, #tpu.memory_space<vmem>>, vector<32x128xf32>
    %cst_118 = arith.constant dense<0.000000e+00> : vector<8x128xf32>
    %302 = tpu.matmul %299, %301, %cst_118 {dimension_numbers = #tpu.dot_dimension_numbers<[1], [0], [0], [1], [0, 0, 1, 1], [], []>} : vector<8x32xf32>, vector<32x128xf32>, vector<8x128xf32> -> vector<8x128xf32>
    %303 = arith.addf %300, %302 : vector<8x128xf32>
    %304 = arith.negf %303 : vector<8x128xf32>
    %305 = math.exp %304 : vector<8x128xf32>
    %cst_119 = arith.constant 1.000000e+00 : f32
    %306 = vector.broadcast %cst_119 : f32 to vector<8x128xf32>
    %307 = arith.addf %306, %305 : vector<8x128xf32>
    %308 = arith.divf %306, %307 : vector<8x128xf32>
    %309 = math.tanh %303 : vector<8x128xf32>
    %310 = vector.extract_strided_slice %308 {offsets = [0, 0], sizes = [8, 32], strides = [1, 1]} : vector<8x128xf32> to vector<8x32xf32>
    %311 = vector.extract_strided_slice %308 {offsets = [0, 32], sizes = [8, 32], strides = [1, 1]} : vector<8x128xf32> to vector<8x32xf32>
    %312 = vector.extract_strided_slice %309 {offsets = [0, 64], sizes = [8, 32], strides = [1, 1]} : vector<8x128xf32> to vector<8x32xf32>
    %313 = vector.extract_strided_slice %308 {offsets = [0, 96], sizes = [8, 32], strides = [1, 1]} : vector<8x128xf32> to vector<8x32xf32>
    %314 = arith.mulf %311, %299 : vector<8x32xf32>
    %315 = arith.mulf %310, %312 : vector<8x32xf32>
    %316 = arith.addf %314, %315 : vector<8x32xf32>
    %317 = math.tanh %316 : vector<8x32xf32>
    %318 = arith.mulf %313, %317 : vector<8x32xf32>
    %c0_120 = arith.constant 0 : index
    %c0_121 = arith.constant 0 : index
    %319 = vector.load %arg33[%c0_120, %c0_121] : memref<32x128xf32, #tpu.memory_space<vmem>>, vector<32x128xf32>
    %cst_122 = arith.constant dense<0.000000e+00> : vector<8x128xf32>
    %320 = tpu.matmul %318, %319, %cst_122 {dimension_numbers = #tpu.dot_dimension_numbers<[1], [0], [0], [1], [0, 0, 1, 1], [], []>} : vector<8x32xf32>, vector<32x128xf32>, vector<8x128xf32> -> vector<8x128xf32>
    %c0_123 = arith.constant 0 : index
    %c0_124 = arith.constant 0 : index
    %321 = vector.load %arg35[%c0_123, %c0_124] : memref<1x128xf32, #tpu.memory_space<vmem>>, vector<1x128xf32>
    %322 = vector.broadcast %321 : vector<1x128xf32> to vector<8x128xf32>
    %323 = arith.addf %320, %322 : vector<8x128xf32>
    %c0_125 = arith.constant 0 : index
    %c0_126 = arith.constant 0 : index
    %324 = vector.load %arg34[%c0_125, %c0_126] : memref<32x128xf32, #tpu.memory_space<vmem>>, vector<32x128xf32>
    %cst_127 = arith.constant dense<0.000000e+00> : vector<8x128xf32>
    %325 = tpu.matmul %299, %324, %cst_127 {dimension_numbers = #tpu.dot_dimension_numbers<[1], [0], [0], [1], [0, 0, 1, 1], [], []>} : vector<8x32xf32>, vector<32x128xf32>, vector<8x128xf32> -> vector<8x128xf32>
    %326 = arith.addf %323, %325 : vector<8x128xf32>
    %327 = arith.negf %326 : vector<8x128xf32>
    %328 = math.exp %327 : vector<8x128xf32>
    %cst_128 = arith.constant 1.000000e+00 : f32
    %329 = vector.broadcast %cst_128 : f32 to vector<8x128xf32>
    %330 = arith.addf %329, %328 : vector<8x128xf32>
    %331 = arith.divf %329, %330 : vector<8x128xf32>
    %332 = math.tanh %326 : vector<8x128xf32>
    %333 = vector.extract_strided_slice %331 {offsets = [0, 0], sizes = [8, 32], strides = [1, 1]} : vector<8x128xf32> to vector<8x32xf32>
    %334 = vector.extract_strided_slice %331 {offsets = [0, 32], sizes = [8, 32], strides = [1, 1]} : vector<8x128xf32> to vector<8x32xf32>
    %335 = vector.extract_strided_slice %332 {offsets = [0, 64], sizes = [8, 32], strides = [1, 1]} : vector<8x128xf32> to vector<8x32xf32>
    %336 = vector.extract_strided_slice %331 {offsets = [0, 96], sizes = [8, 32], strides = [1, 1]} : vector<8x128xf32> to vector<8x32xf32>
    %337 = arith.mulf %334, %299 : vector<8x32xf32>
    %338 = arith.mulf %333, %335 : vector<8x32xf32>
    %339 = arith.addf %337, %338 : vector<8x32xf32>
    %340 = math.tanh %339 : vector<8x32xf32>
    %341 = arith.mulf %336, %340 : vector<8x32xf32>
    %342 = vector.extract_strided_slice %298 {offsets = [8, 0], sizes = [8, 128], strides = [1, 1]} : vector<16x128xf32> to vector<8x128xf32>
    %c0_129 = arith.constant 0 : index
    %c0_130 = arith.constant 0 : index
    %343 = vector.load %arg31[%c0_129, %c0_130] : memref<32x128xf32, #tpu.memory_space<vmem>>, vector<32x128xf32>
    %cst_131 = arith.constant dense<0.000000e+00> : vector<8x128xf32>
    %344 = tpu.matmul %318, %343, %cst_131 {dimension_numbers = #tpu.dot_dimension_numbers<[1], [0], [0], [1], [0, 0, 1, 1], [], []>} : vector<8x32xf32>, vector<32x128xf32>, vector<8x128xf32> -> vector<8x128xf32>
    %345 = arith.addf %342, %344 : vector<8x128xf32>
    %346 = arith.negf %345 : vector<8x128xf32>
    %347 = math.exp %346 : vector<8x128xf32>
    %cst_132 = arith.constant 1.000000e+00 : f32
    %348 = vector.broadcast %cst_132 : f32 to vector<8x128xf32>
    %349 = arith.addf %348, %347 : vector<8x128xf32>
    %350 = arith.divf %348, %349 : vector<8x128xf32>
    %351 = math.tanh %345 : vector<8x128xf32>
    %352 = vector.extract_strided_slice %350 {offsets = [0, 0], sizes = [8, 32], strides = [1, 1]} : vector<8x128xf32> to vector<8x32xf32>
    %353 = vector.extract_strided_slice %350 {offsets = [0, 32], sizes = [8, 32], strides = [1, 1]} : vector<8x128xf32> to vector<8x32xf32>
    %354 = vector.extract_strided_slice %351 {offsets = [0, 64], sizes = [8, 32], strides = [1, 1]} : vector<8x128xf32> to vector<8x32xf32>
    %355 = vector.extract_strided_slice %350 {offsets = [0, 96], sizes = [8, 32], strides = [1, 1]} : vector<8x128xf32> to vector<8x32xf32>
    %356 = arith.mulf %353, %316 : vector<8x32xf32>
    %357 = arith.mulf %352, %354 : vector<8x32xf32>
    %358 = arith.addf %356, %357 : vector<8x32xf32>
    %359 = math.tanh %358 : vector<8x32xf32>
    %360 = arith.mulf %355, %359 : vector<8x32xf32>
    %c0_133 = arith.constant 0 : index
    %c0_134 = arith.constant 0 : index
    %361 = vector.load %arg33[%c0_133, %c0_134] : memref<32x128xf32, #tpu.memory_space<vmem>>, vector<32x128xf32>
    %cst_135 = arith.constant dense<0.000000e+00> : vector<8x128xf32>
    %362 = tpu.matmul %360, %361, %cst_135 {dimension_numbers = #tpu.dot_dimension_numbers<[1], [0], [0], [1], [0, 0, 1, 1], [], []>} : vector<8x32xf32>, vector<32x128xf32>, vector<8x128xf32> -> vector<8x128xf32>
    %c0_136 = arith.constant 0 : index
    %c0_137 = arith.constant 0 : index
    %363 = vector.load %arg35[%c0_136, %c0_137] : memref<1x128xf32, #tpu.memory_space<vmem>>, vector<1x128xf32>
    %364 = vector.broadcast %363 : vector<1x128xf32> to vector<8x128xf32>
    %365 = arith.addf %362, %364 : vector<8x128xf32>
    %c0_138 = arith.constant 0 : index
    %c0_139 = arith.constant 0 : index
    %366 = vector.load %arg34[%c0_138, %c0_139] : memref<32x128xf32, #tpu.memory_space<vmem>>, vector<32x128xf32>
    %cst_140 = arith.constant dense<0.000000e+00> : vector<8x128xf32>
    %367 = tpu.matmul %341, %366, %cst_140 {dimension_numbers = #tpu.dot_dimension_numbers<[1], [0], [0], [1], [0, 0, 1, 1], [], []>} : vector<8x32xf32>, vector<32x128xf32>, vector<8x128xf32> -> vector<8x128xf32>
    %368 = arith.addf %365, %367 : vector<8x128xf32>
    %369 = arith.negf %368 : vector<8x128xf32>
    %370 = math.exp %369 : vector<8x128xf32>
    %cst_141 = arith.constant 1.000000e+00 : f32
    %371 = vector.broadcast %cst_141 : f32 to vector<8x128xf32>
    %372 = arith.addf %371, %370 : vector<8x128xf32>
    %373 = arith.divf %371, %372 : vector<8x128xf32>
    %374 = math.tanh %368 : vector<8x128xf32>
    %375 = vector.extract_strided_slice %373 {offsets = [0, 0], sizes = [8, 32], strides = [1, 1]} : vector<8x128xf32> to vector<8x32xf32>
    %376 = vector.extract_strided_slice %373 {offsets = [0, 32], sizes = [8, 32], strides = [1, 1]} : vector<8x128xf32> to vector<8x32xf32>
    %377 = vector.extract_strided_slice %374 {offsets = [0, 64], sizes = [8, 32], strides = [1, 1]} : vector<8x128xf32> to vector<8x32xf32>
    %378 = vector.extract_strided_slice %373 {offsets = [0, 96], sizes = [8, 32], strides = [1, 1]} : vector<8x128xf32> to vector<8x32xf32>
    %379 = arith.mulf %376, %339 : vector<8x32xf32>
    %380 = arith.mulf %375, %377 : vector<8x32xf32>
    %381 = arith.addf %379, %380 : vector<8x32xf32>
    %382 = math.tanh %381 : vector<8x32xf32>
    %383 = arith.mulf %378, %382 : vector<8x32xf32>
    %384 = vector.shape_cast %341 : vector<8x32xf32> to vector<1x8x32xf32>
    %385 = vector.shape_cast %383 : vector<8x32xf32> to vector<1x8x32xf32>
    %386 = tpu.concatenate %384, %385 in 0 : vector<1x8x32xf32>, vector<1x8x32xf32> -> vector<2x8x32xf32>
    %c0_142 = arith.constant 0 : index
    %c0_143 = arith.constant 0 : index
    %c0_144 = arith.constant 0 : index
    %387 = vector.load %arg36[%c0_142, %c0_143, %c0_144] : memref<2x8x32xf32, #tpu.memory_space<vmem>>, vector<2x8x32xf32>
    tpu.vector_store %arg36[%c0_142, %c0_143, %c0_144], %386 {strides = array<i32>} : memref<2x8x32xf32, #tpu.memory_space<vmem>>, vector<2x8x32xf32>,
    return
  }
}

</mosaic_0001>

<llo_original>
// kernel: bert_lstm_forward.1
$region0: #{bert_lstm_forward.1}
  #allocation0 [shape = 'u32[]', space=smem, size = 0x4, offset = 0x4, fixed_abs, tag = 'smem constant byte address 0x4 - core index']
  #allocation1 [shape = 'u32[144,128]{1,0:T(1,128)}', space=vmem, size = 0x12000, scoped, tag = 'internal scratch']
  %s0 = inlined_call_operand.smem [shape: u32[37], index: -1, kind: input, shape index: {}]
  %s1 = sld [smem:[%s0]]
  %s2 = scalar_lea.smem %s0, 1
  %s3 = sld [smem:[%s2]]
  %s4 = scalar_lea.smem %s0, 2
  %s5 = sld [smem:[%s4]]
  %s6 = scalar_lea.smem %s0, 3
  %s7 = sld [smem:[%s6]]
  %s8 = scalar_lea.smem %s0, 4
  %s9 = sld [smem:[%s8]]
  %s10 = scalar_lea.smem %s0, 5
  %s11 = sld [smem:[%s10]]
  %s12 = scalar_lea.smem %s0, 6
  %s13 = sld [smem:[%s12]]
  %s14 = scalar_lea.smem %s0, 7
  %s15 = sld [smem:[%s14]]
  %s16 = scalar_lea.smem %s0, 8
  %s17 = sld [smem:[%s16]]
  %s18 = scalar_lea.smem %s0, 9
  %s19 = sld [smem:[%s18]]
  %s20 = scalar_lea.smem %s0, 10
  %s21 = sld [smem:[%s20]]
  %s22 = scalar_lea.smem %s0, 11
  %s23 = sld [smem:[%s22]]
  %s24 = scalar_lea.smem %s0, 12
  %s25 = sld [smem:[%s24]]
  %s26 = scalar_lea.smem %s0, 13
  %s27 = sld [smem:[%s26]]
  %s28 = scalar_lea.smem %s0, 14
  %s29 = sld [smem:[%s28]]
  %s30 = scalar_lea.smem %s0, 15
  %s31 = sld [smem:[%s30]]
  %s32 = scalar_lea.smem %s0, 16
  %s33 = sld [smem:[%s32]]
  %s34 = scalar_lea.smem %s0, 17
  %s35 = sld [smem:[%s34]]
  %s36 = scalar_lea.smem %s0, 18
  %s37 = sld [smem:[%s36]]
  %s38 = scalar_lea.smem %s0, 19
  %s39 = sld [smem:[%s38]]
  %s40 = scalar_lea.smem %s0, 20
  %s41 = sld [smem:[%s40]]
  %s42 = scalar_lea.smem %s0, 21
  %s43 = sld [smem:[%s42]]
  %s44 = scalar_lea.smem %s0, 22
  %s45 = sld [smem:[%s44]]
  %s46 = scalar_lea.smem %s0, 23
  %s47 = sld [smem:[%s46]]
  %s48 = scalar_lea.smem %s0, 24
  %s49 = sld [smem:[%s48]]
  %s50 = scalar_lea.smem %s0, 25
  %s51 = sld [smem:[%s50]]
  %s52 = scalar_lea.smem %s0, 26
  %s53 = sld [smem:[%s52]]
  %s54 = scalar_lea.smem %s0, 27
  %s55 = sld [smem:[%s54]]
  %s56 = scalar_lea.smem %s0, 28
  %s57 = sld [smem:[%s56]]
  %s58 = scalar_lea.smem %s0, 29
  %s59 = sld [smem:[%s58]]
  %s60 = scalar_lea.smem %s0, 30
  %s61 = sld [smem:[%s60]]
  %s62 = scalar_lea.smem %s0, 31
  %s63 = sld [smem:[%s62]]
  %s64 = scalar_lea.smem %s0, 32
  %s65 = sld [smem:[%s64]]
  %s66 = scalar_lea.smem %s0, 33
  %s67 = sld [smem:[%s66]]
  %s68 = scalar_lea.smem %s0, 34
  %s69 = sld [smem:[%s68]]
  %s70 = scalar_lea.smem %s0, 35
  %s71 = sld [smem:[%s70]]
  %s72 = scalar_lea.smem %s0, 36
  %s73 = sld [smem:[%s72]]
  %s74 = sld [smem:[#allocation0]]
  $region178: #{bert_lstm_forward.1} parent=0
    _
  %s76 = ssub.s32 1, %s74
  %s77 = scalar_select 0, %s76, %s74
  $region1: #{bert_lstm_forward.1} parent=0
    #allocation2 [shape = 'u8[512]{0}', space=vmem, size = 0x400, scoped, tag = 'input window, operand 4, single buffered']
    #allocation3 [shape = 's32[1]{0}', space=sflag, size = 0x4, scoped, tag = 'scoped memory for bert_lstm_forward.1']
    #allocation4 [shape = 's32[1]{0}', space=sflag, size = 0x4, scoped, tag = 'scoped memory for bert_lstm_forward.1']
    #allocation5 [shape = 'u8[512]{0}', space=vmem, size = 0x400, scoped, tag = 'input window, operand 5, single buffered']
    #allocation6 [shape = 's32[1]{0}', space=sflag, size = 0x4, scoped, tag = 'scoped memory for bert_lstm_forward.1']
    #allocation7 [shape = 'u8[512]{0}', space=vmem, size = 0x400, scoped, tag = 'input window, operand 7, single buffered']
    #allocation8 [shape = 'u8[512]{0}', space=vmem, size = 0x400, scoped, tag = 'input window, operand 9, single buffered']
    #allocation9 [shape = 's32[1]{0}', space=sflag, size = 0x4, scoped, tag = 'scoped memory for bert_lstm_forward.1']
    #allocation10 [shape = 'u8[512]{0}', space=vmem, size = 0x400, scoped, tag = 'input window, operand 13, single buffered']
    #allocation11 [shape = 'u8[512]{0}', space=vmem, size = 0x400, scoped, tag = 'input window, operand 15, single buffered']
    #allocation12 [shape = 's32[1]{0}', space=sflag, size = 0x4, scoped, tag = 'scoped memory for bert_lstm_forward.1']
    #allocation13 [shape = 'u8[8192]{0}', space=vmem, size = 0x2000, scoped, tag = 'output window, operand 0, single buffered']
    %78 = vsyncpa [#allocation3], 0
    %79 = vsyncpa [#allocation6], 0
    %80 = vsyncpa [#allocation9], 0
    %81 = vsyncpa [#allocation12], 0
    %82 = vsyncpa [#allocation4], 0
    // Predicated region
    $region2: #{bert_lstm_forward.1} parent=1 // pred_check
      _
    $region3: #{bert_lstm_forward.1} parent=1 // pred_check_branch
      %84 = sbr.rel (0) target = $region5
    $region4: #{bert_lstm_forward.1} parent=1 // pred_region
      _
    $region5: #{bert_lstm_forward.1} parent=1 // pred_fallthru
      _
    // Predicated region
    $region6: #{bert_lstm_forward.1} parent=1 // pred_check
      _
    $region7: #{bert_lstm_forward.1} parent=1 // pred_check_branch
      %86 = sbr.rel (0) target = $region9
    $region8: #{bert_lstm_forward.1} parent=1 // pred_region
      _
    $region9: #{bert_lstm_forward.1} parent=1 // pred_fallthru
      _
    // Predicated region
    $region10: #{bert_lstm_forward.1} parent=1 // pred_check
      _
    $region11: #{bert_lstm_forward.1} parent=1 // pred_check_branch
      %88 = sbr.rel (0) target = $region13
    $region12: #{bert_lstm_forward.1} parent=1 // pred_region
      _
    $region13: #{bert_lstm_forward.1} parent=1 // pred_fallthru
      _
    // Predicated region
    $region14: #{bert_lstm_forward.1} parent=1 // pred_check
      _
    $region15: #{bert_lstm_forward.1} parent=1 // pred_check_branch
      %90 = sbr.rel (0) target = $region17
    $region16: #{bert_lstm_forward.1} parent=1 // pred_region
      _
    $region17: #{bert_lstm_forward.1} parent=1 // pred_fallthru
      _
    // Predicated region
    $region18: #{bert_lstm_forward.1} parent=1 // pred_check
      _
    $region19: #{bert_lstm_forward.1} parent=1 // pred_check_branch
      %92 = sbr.rel (0) target = $region21
    $region20: #{bert_lstm_forward.1} parent=1 // pred_region
      %s94 = ssub.s32 16, 16
      %95 = vsyncadd [#allocation3], %s94
      %s97 = sshll.u32 [#allocation2], 4
      %s98 = int_to_ptr.vmem [resolvable:$true] %s97
      %100 = dma.hbm_to_vmem [thread:$0]  %s9, 16, %s98, [#allocation3]
    $region21: #{bert_lstm_forward.1} parent=1 // pred_fallthru
      _
    // Predicated region
    $region22: #{bert_lstm_forward.1} parent=1 // pred_check
      _
    $region23: #{bert_lstm_forward.1} parent=1 // pred_check_branch
      %102 = sbr.rel (0) target = $region25
    $region24: #{bert_lstm_forward.1} parent=1 // pred_region
      %s104 = ssub.s32 16, 16
      %105 = vsyncadd [#allocation6], %s104
      %s107 = sshll.u32 [#allocation5], 4
      %s108 = int_to_ptr.vmem [resolvable:$true] %s107
      %110 = dma.hbm_to_vmem [thread:$0]  %s11, 16, %s108, [#allocation6]
    $region25: #{bert_lstm_forward.1} parent=1 // pred_fallthru
      _
    // Predicated region
    $region26: #{bert_lstm_forward.1} parent=1 // pred_check
      _
    $region27: #{bert_lstm_forward.1} parent=1 // pred_check_branch
      %112 = sbr.rel (0) target = $region29
    $region28: #{bert_lstm_forward.1} parent=1 // pred_region
      _
    $region29: #{bert_lstm_forward.1} parent=1 // pred_fallthru
      _
    // Predicated region
    $region30: #{bert_lstm_forward.1} parent=1 // pred_check
      _
    $region31: #{bert_lstm_forward.1} parent=1 // pred_check_branch
      %114 = sbr.rel (0) target = $region33
    $region32: #{bert_lstm_forward.1} parent=1 // pred_region
      %s116 = ssub.s32 16, 16
      %117 = vsyncadd [#allocation6], %s116
      %s119 = sshll.u32 [#allocation7], 4
      %s120 = int_to_ptr.vmem [resolvable:$true] %s119
      %122 = dma.hbm_to_vmem [thread:$0]  %s15, 16, %s120, [#allocation6]
    $region33: #{bert_lstm_forward.1} parent=1 // pred_fallthru
      _
    // Predicated region
    $region34: #{bert_lstm_forward.1} parent=1 // pred_check
      _
    $region35: #{bert_lstm_forward.1} parent=1 // pred_check_branch
      %124 = sbr.rel (0) target = $region37
    $region36: #{bert_lstm_forward.1} parent=1 // pred_region
      _
    $region37: #{bert_lstm_forward.1} parent=1 // pred_fallthru
      _
    // Predicated region
    $region38: #{bert_lstm_forward.1} parent=1 // pred_check
      _
    $region39: #{bert_lstm_forward.1} parent=1 // pred_check_branch
      %126 = sbr.rel (0) target = $region41
    $region40: #{bert_lstm_forward.1} parent=1 // pred_region
      %s128 = ssub.s32 16, 16
      %129 = vsyncadd [#allocation9], %s128
      %s131 = sshll.u32 [#allocation8], 4
      %s132 = int_to_ptr.vmem [resolvable:$true] %s131
      %134 = dma.hbm_to_vmem [thread:$0]  %s19, 16, %s132, [#allocation9]
    $region41: #{bert_lstm_forward.1} parent=1 // pred_fallthru
      _
    // Predicated region
    $region42: #{bert_lstm_forward.1} parent=1 // pred_check
      _
    $region43: #{bert_lstm_forward.1} parent=1 // pred_check_branch
      %136 = sbr.rel (0) target = $region45
    $region44: #{bert_lstm_forward.1} parent=1 // pred_region
      _
    $region45: #{bert_lstm_forward.1} parent=1 // pred_fallthru
      _
    // Predicated region
    $region46: #{bert_lstm_forward.1} parent=1 // pred_check
      _
    $region47: #{bert_lstm_forward.1} parent=1 // pred_check_branch
      %138 = sbr.rel (0) target = $region49
    $region48: #{bert_lstm_forward.1} parent=1 // pred_region
      _
    $region49: #{bert_lstm_forward.1} parent=1 // pred_fallthru
      _
    // Predicated region
    $region50: #{bert_lstm_forward.1} parent=1 // pred_check
      _
    $region51: #{bert_lstm_forward.1} parent=1 // pred_check_branch
      %140 = sbr.rel (0) target = $region53
    $region52: #{bert_lstm_forward.1} parent=1 // pred_region
      _
    $region53: #{bert_lstm_forward.1} parent=1 // pred_fallthru
      _
    // Predicated region
    $region54: #{bert_lstm_forward.1} parent=1 // pred_check
      _
    $region55: #{bert_lstm_forward.1} parent=1 // pred_check_branch
      %142 = sbr.rel (0) target = $region57
    $region56: #{bert_lstm_forward.1} parent=1 // pred_region
      %s144 = ssub.s32 16, 16
      %145 = vsyncadd [#allocation9], %s144
      %s147 = sshll.u32 [#allocation10], 4
      %s148 = int_to_ptr.vmem [resolvable:$true] %s147
      %150 = dma.hbm_to_vmem [thread:$0]  %s27, 16, %s148, [#allocation9]
    $region57: #{bert_lstm_forward.1} parent=1 // pred_fallthru
      _
    // Predicated region
    $region58: #{bert_lstm_forward.1} parent=1 // pred_check
      _
    $region59: #{bert_lstm_forward.1} parent=1 // pred_check_branch
      %152 = sbr.rel (0) target = $region61
    $region60: #{bert_lstm_forward.1} parent=1 // pred_region
      _
    $region61: #{bert_lstm_forward.1} parent=1 // pred_fallthru
      _
    // Predicated region
    $region62: #{bert_lstm_forward.1} parent=1 // pred_check
      _
    $region63: #{bert_lstm_forward.1} parent=1 // pred_check_branch
      %154 = sbr.rel (0) target = $region65
    $region64: #{bert_lstm_forward.1} parent=1 // pred_region
      %s156 = ssub.s32 16, 16
      %157 = vsyncadd [#allocation12], %s156
      %s159 = sshll.u32 [#allocation11], 4
      %s160 = int_to_ptr.vmem [resolvable:$true] %s159
      %162 = dma.hbm_to_vmem [thread:$0]  %s31, 16, %s160, [#allocation12]
    $region65: #{bert_lstm_forward.1} parent=1 // pred_fallthru
      _
    // Predicated region
    $region66: #{bert_lstm_forward.1} parent=1 // pred_check
      _
    $region67: #{bert_lstm_forward.1} parent=1 // pred_check_branch
      %164 = sbr.rel (0) target = $region69
    $region68: #{bert_lstm_forward.1} parent=1 // pred_region
      _
    $region69: #{bert_lstm_forward.1} parent=1 // pred_fallthru
      _
    // Predicated region
    $region70: #{bert_lstm_forward.1} parent=1 // pred_check
      _
    $region71: #{bert_lstm_forward.1} parent=1 // pred_check_branch
      %166 = sbr.rel (0) target = $region73
    $region72: #{bert_lstm_forward.1} parent=1 // pred_region
      _
    $region73: #{bert_lstm_forward.1} parent=1 // pred_fallthru
      _
    // Predicated region
    $region74: #{bert_lstm_forward.1} parent=1 // pred_check
      _
    $region75: #{bert_lstm_forward.1} parent=1 // pred_check_branch
      %168 = sbr.rel (0) target = $region77
    $region76: #{bert_lstm_forward.1} parent=1 // pred_region
      _
    $region77: #{bert_lstm_forward.1} parent=1 // pred_fallthru
      _
    // Predicated region
    $region78: #{bert_lstm_forward.1} parent=1 // pred_check
      _
    $region79: #{bert_lstm_forward.1} parent=1 // pred_check_branch
      %170 = sbr.rel (0) target = $region81
    $region80: #{bert_lstm_forward.1} parent=1 // pred_region
      _
    $region81: #{bert_lstm_forward.1} parent=1 // pred_fallthru
      _
    // Predicated region
    $region82: #{bert_lstm_forward.1} parent=1 // pred_check
      _
    $region83: #{bert_lstm_forward.1} parent=1 // pred_check_branch
      %172 = sbr.rel (0) target = $region85
    $region84: #{bert_lstm_forward.1} parent=1 // pred_region
      _
    $region85: #{bert_lstm_forward.1} parent=1 // pred_fallthru
      _
    // Predicated region
    $region86: #{bert_lstm_forward.1} parent=1 // pred_check
      _
    $region87: #{bert_lstm_forward.1} parent=1 // pred_check_branch
      %174 = sbr.rel (0) target = $region89
    $region88: #{bert_lstm_forward.1} parent=1 // pred_region
      _
    $region89: #{bert_lstm_forward.1} parent=1 // pred_fallthru
      _
    // Predicated region
    $region90: #{bert_lstm_forward.1} parent=1 // pred_check
      _
    $region91: #{bert_lstm_forward.1} parent=1 // pred_check_branch
      %176 = sbr.rel (0) target = $region93
    $region92: #{bert_lstm_forward.1} parent=1 // pred_region
      _
    $region93: #{bert_lstm_forward.1} parent=1 // pred_fallthru
      _
    // Predicated region
    $region94: #{bert_lstm_forward.1} parent=1 // pred_check
      _
    $region95: #{bert_lstm_forward.1} parent=1 // pred_check_branch
      %178 = sbr.rel (0) target = $region97
    $region96: #{bert_lstm_forward.1} parent=1 // pred_region
      _
    $region97: #{bert_lstm_forward.1} parent=1 // pred_fallthru
      _
    // Predicated region
    $region98: #{bert_lstm_forward.1} parent=1 // pred_check
      _
    $region99: #{bert_lstm_forward.1} parent=1 // pred_check_branch
      %180 = sbr.rel (0) target = $region101
    $region100: #{bert_lstm_forward.1} parent=1 // pred_region
      _
    $region101: #{bert_lstm_forward.1} parent=1 // pred_fallthru
      _
    // Predicated region
    $region102: #{bert_lstm_forward.1} parent=1 // pred_check
      _
    $region103: #{bert_lstm_forward.1} parent=1 // pred_check_branch
      %182 = sbr.rel (0) target = $region105
    $region104: #{bert_lstm_forward.1} parent=1 // pred_region
      _
    $region105: #{bert_lstm_forward.1} parent=1 // pred_fallthru
      _
    // Predicated region
    $region106: #{bert_lstm_forward.1} parent=1 // pred_check
      _
    $region107: #{bert_lstm_forward.1} parent=1 // pred_check_branch
      %184 = sbr.rel (0) target = $region109
    $region108: #{bert_lstm_forward.1} parent=1 // pred_region
      _
    $region109: #{bert_lstm_forward.1} parent=1 // pred_fallthru
      _
    // Predicated region
    $region110: #{bert_lstm_forward.1} parent=1 // pred_check
      _
    $region111: #{bert_lstm_forward.1} parent=1 // pred_check_branch
      %186 = sbr.rel (0) target = $region113
    $region112: #{bert_lstm_forward.1} parent=1 // pred_region
      _
    $region113: #{bert_lstm_forward.1} parent=1 // pred_fallthru
      _
    // Predicated region
    $region114: #{bert_lstm_forward.1} parent=1 // pred_check
      _
    $region115: #{bert_lstm_forward.1} parent=1 // pred_check_branch
      %188 = sbr.rel (0) target = $region117
    $region116: #{bert_lstm_forward.1} parent=1 // pred_region
      _
    $region117: #{bert_lstm_forward.1} parent=1 // pred_fallthru
      _
    // Predicated region
    $region118: #{bert_lstm_forward.1} parent=1 // pred_check
      _
    $region119: #{bert_lstm_forward.1} parent=1 // pred_check_branch
      %190 = sbr.rel (0) target = $region121
    $region120: #{bert_lstm_forward.1} parent=1 // pred_region
      _
    $region121: #{bert_lstm_forward.1} parent=1 // pred_fallthru
      _
    // Predicated region
    $region122: #{bert_lstm_forward.1} parent=1 // pred_check
      _
    $region123: #{bert_lstm_forward.1} parent=1 // pred_check_branch
      %192 = sbr.rel (0) target = $region125
    $region124: #{bert_lstm_forward.1} parent=1 // pred_region
      _
    $region125: #{bert_lstm_forward.1} parent=1 // pred_fallthru
      _
    // Predicated region
    $region126: #{bert_lstm_forward.1} parent=1 // pred_check
      _
    $region127: #{bert_lstm_forward.1} parent=1 // pred_check_branch
      %194 = sbr.rel (0) target = $region129
    $region128: #{bert_lstm_forward.1} parent=1 // pred_region
      _
    $region129: #{bert_lstm_forward.1} parent=1 // pred_fallthru
      _
    // Predicated region
    $region130: #{bert_lstm_forward.1} parent=1 // pred_check
      _
    $region131: #{bert_lstm_forward.1} parent=1 // pred_check_branch
      %196 = sbr.rel (0) target = $region133
    $region132: #{bert_lstm_forward.1} parent=1 // pred_region
      _
    $region133: #{bert_lstm_forward.1} parent=1 // pred_fallthru
      _
    // Predicated region
    $region134: #{bert_lstm_forward.1} parent=1 // pred_check
      _
    $region135: #{bert_lstm_forward.1} parent=1 // pred_check_branch
      %198 = sbr.rel (0) target = $region137
    $region136: #{bert_lstm_forward.1} parent=1 // pred_region
      _
    $region137: #{bert_lstm_forward.1} parent=1 // pred_fallthru
      _
    // Predicated region
    $region138: #{bert_lstm_forward.1} parent=1 // pred_check
      _
    $region139: #{bert_lstm_forward.1} parent=1 // pred_check_branch
      %200 = sbr.rel (0) target = $region141
    $region140: #{bert_lstm_forward.1} parent=1 // pred_region
      _
    $region141: #{bert_lstm_forward.1} parent=1 // pred_fallthru
      _
    // Predicated region
    $region142: #{bert_lstm_forward.1} parent=1 // pred_check
      _
    $region143: #{bert_lstm_forward.1} parent=1 // pred_check_branch
      %202 = sbr.rel (0) target = $region145
    $region144: #{bert_lstm_forward.1} parent=1 // pred_region
      _
    $region145: #{bert_lstm_forward.1} parent=1 // pred_fallthru
      _
    // Predicated region
    $region146: #{bert_lstm_forward.1} parent=1 // pred_check
      _
    $region147: #{bert_lstm_forward.1} parent=1 // pred_check_branch
      %204 = sbr.rel (0) target = $region149
    $region148: #{bert_lstm_forward.1} parent=1 // pred_region
      %205 = dma.done [#allocation3], 16
    $region149: #{bert_lstm_forward.1} parent=1 // pred_fallthru
      _
    // Predicated region
    $region150: #{bert_lstm_forward.1} parent=1 // pred_check
      _
    $region151: #{bert_lstm_forward.1} parent=1 // pred_check_branch
      %207 = sbr.rel (0) target = $region153
    $region152: #{bert_lstm_forward.1} parent=1 // pred_region
      %208 = dma.done [#allocation6], 16
    $region153: #{bert_lstm_forward.1} parent=1 // pred_fallthru
      _
    // Predicated region
    $region154: #{bert_lstm_forward.1} parent=1 // pred_check
      _
    $region155: #{bert_lstm_forward.1} parent=1 // pred_check_branch
      %210 = sbr.rel (0) target = $region157
    $region156: #{bert_lstm_forward.1} parent=1 // pred_region
      %211 = dma.done [#allocation6], 16
    $region157: #{bert_lstm_forward.1} parent=1 // pred_fallthru
      _
    // Predicated region
    $region158: #{bert_lstm_forward.1} parent=1 // pred_check
      _
    $region159: #{bert_lstm_forward.1} parent=1 // pred_check_branch
      %213 = sbr.rel (0) target = $region161
    $region160: #{bert_lstm_forward.1} parent=1 // pred_region
      %214 = dma.done [#allocation9], 16
    $region161: #{bert_lstm_forward.1} parent=1 // pred_fallthru
      _
    // Predicated region
    $region162: #{bert_lstm_forward.1} parent=1 // pred_check
      _
    $region163: #{bert_lstm_forward.1} parent=1 // pred_check_branch
      %216 = sbr.rel (0) target = $region165
    $region164: #{bert_lstm_forward.1} parent=1 // pred_region
      %217 = dma.done [#allocation9], 16
    $region165: #{bert_lstm_forward.1} parent=1 // pred_fallthru
      _
    // Predicated region
    $region166: #{bert_lstm_forward.1} parent=1 // pred_check
      _
    $region167: #{bert_lstm_forward.1} parent=1 // pred_check_branch
      %219 = sbr.rel (0) target = $region169
    $region168: #{bert_lstm_forward.1} parent=1 // pred_region
      %220 = dma.done [#allocation12], 16
    $region169: #{bert_lstm_forward.1} parent=1 // pred_fallthru
      _
    %v221 = vld [vmem:[%s1] sm:$0xff]
    %v222 = vld [vmem:[%s1 + $0x8] sm:$0xff]
    %v223 = vlaneseq
    %v224 = vand.u32 %v223, 127
    %225 = vset.pattern.permute.xlu0 0
    %226 = vperm.xlu0 %225, %v221
    %v227 = vpop.permute.xlu0 %226
    %228 = vset.pattern.permute.xlu0 0
    %229 = vperm.xlu0 %228, %v222
    %v230 = vpop.permute.xlu0 %229
    %vm231 = vcmp.eq.s32.totalorder %v224, %v227
    %vm232 = vcmp.eq.s32.totalorder %v224, %v230
    %v233 = vsel %vm231, 1, 0
    %v234 = vsel %vm232, 1, 0
    %v235 = vcvt.s32.f32 %v233
    %v236 = vcvt.s32.f32 %v234
    %v237 = vld [vmem:[%s3] sm:$0xff]
    %v238 = vld [vmem:[%s3 + $0x8] sm:$0xff]
    %v239 = vld [vmem:[%s3 + $0x10] sm:$0xff]
    %v240 = vld [vmem:[%s3 + $0x18] sm:$0xff]
    %v241 = vld [vmem:[%s3 + $0x20] sm:$0xff]
    %v242 = vld [vmem:[%s3 + $0x28] sm:$0xff]
    %v243 = vld [vmem:[%s3 + $0x30] sm:$0xff]
    %v244 = vld [vmem:[%s3 + $0x38] sm:$0xff]
    %v245 = vld [vmem:[%s3 + $0x40] sm:$0xff]
    %v246 = vld [vmem:[%s3 + $0x48] sm:$0xff]
    %v247 = vld [vmem:[%s3 + $0x50] sm:$0xff]
    %v248 = vld [vmem:[%s3 + $0x58] sm:$0xff]
    %v249 = vld [vmem:[%s3 + $0x60] sm:$0xf]
    %v250 = vld [vmem:[%s5] sm:$0xff]
    %vm251 = vcmask 818176
    %v253 = vsel %vm251, %v235, 0
    %v256 = vsel %vm251, %v236, 0
    %vm258 = vcmask 1043456
    %v260 = vsel %vm258, %v249, 0
    %262 = vmatprep.subr.mxu0 0.0
    %263 = vmatpush1.msra.mxu0 %v237
    %264 = vmatprep.subr.mxu0 0.0
    %265 = vmatpush1.msra.mxu0 %v238
    %266 = vmatprep.subr.mxu0 0.0
    %267 = vmatpush1.msra.mxu0 %v239
    %268 = vmatprep.subr.mxu0 0.0
    %269 = vmatpush1.msra.mxu0 %v240
    %270 = vmatprep.subr.mxu0 0.0
    %271 = vmatpush1.msra.mxu0 %v241
    %272 = vmatprep.subr.mxu0 0.0
    %273 = vmatpush1.msra.mxu0 %v242
    %274 = vmatprep.subr.mxu0 0.0
    %275 = vmatpush1.msra.mxu0 %v243
    %276 = vmatprep.subr.mxu0 0.0
    %277 = vmatpush1.msra.mxu0 %v244
    %278 = vmatprep.subr.mxu0 0.0
    %279 = vmatpush1.msra.mxu0 %v245
    %280 = vmatprep.subr.mxu0 0.0
    %281 = vmatpush1.msra.mxu0 %v246
    %282 = vmatprep.subr.mxu0 0.0
    %283 = vmatpush1.msra.mxu0 %v247
    %284 = vmatprep.subr.mxu0 0.0
    %285 = vmatpush1.msra.mxu0 %v248
    %286 = vmatprep.subr.mxu0 0.0
    %287 = vmatpush1.msra.mxu0 %v260
    %288 = vmatprep.subr.mxu0 0.0
    %289 = vmatpush1.msra.mxu0 0.0
    %290 = vmatprep.subr.mxu0 0.0
    %291 = vmatpush1.msra.mxu0 0.0
    %292 = vmatprep.subr.mxu0 0.0
    %293 = vmatpush1.msra.mxu0 0.0
    %294 = vmatprep.subr.mxu0 0.0
    %295 = vmatpush1.msra.mxu0 0.0
    %296 = vmatprep.subr.mxu0 0.0
    %297 = vmatpush1.msra.mxu0 0.0
    %298 = vmatprep.subr.mxu0 0.0
    %299 = vmatpush1.msra.mxu0 0.0
    %300 = vmatprep.subr.mxu0 0.0
    %301 = vmatpush1.msra.mxu0 0.0
    %302 = vmatprep.subr.mxu0 0.0
    %303 = vmatpush1.msra.mxu0 0.0
    %304 = vmatprep.subr.mxu0 0.0
    %305 = vmatpush1.msra.mxu0 0.0
    %306 = vmatprep.subr.mxu0 0.0
    %307 = vmatpush1.msra.mxu0 0.0
    %308 = vmatprep.subr.mxu0 0.0
    %309 = vmatpush1.msra.mxu0 0.0
    %310 = vmatprep.subr.mxu0 0.0
    %311 = vmatpush1.msra.mxu0 0.0
    %312 = vmatprep.subr.mxu0 0.0
    %313 = vmatpush1.msra.mxu0 0.0
    %314 = vmatprep.subr.mxu0 0.0
    %315 = vmatpush1.msra.mxu0 0.0
    %316 = vmatprep.subr.mxu0 0.0
    %317 = vmatpush1.msra.mxu0 0.0
    %318 = vmatprep.subr.mxu0 0.0
    %319 = vmatpush1.msra.mxu0 0.0
    %320 = vmatprep.subr.mxu0 0.0
    %321 = vmatpush1.msra.mxu0 0.0
    %322 = vmatprep.subr.mxu0 0.0
    %323 = vmatpush1.msra.mxu0 0.0
    %324 = vmatprep.subr.mxu0 0.0
    %325 = vmatpush1.msra.mxu0 0.0
    %326 = vmatprep.mubr.f32.mxu0 0.0
    %327 = vmatmul.mubr.f32.gmra.mrb[0].mxu0 %v253
    %v328 = vpop.f32.mrb[0].mxu0
    %v329 = vadd.f32 %v250, %v328
    %v330 = vpop.f32.mrb[0].mxu0
    %331 = vmatprep.mubr.f32.mxu0 0.0
    %332 = vmatmul.mubr.f32.gmra.mrb[0].mxu0 %v256
    %v333 = vpop.f32.mrb[0].mxu0
    %v334 = vadd.f32 %v250, %v333
    %v335 = vpop.f32.mrb[0].mxu0
    %336 = vdwg.mxu0
    %v337 = vld [vmem:[%s7] sm:$0x1]
    %v338 = vlaneseq
    %v339 = vshrl.u32 %v338, 7
    %v340 = vsub.s32 0, %v339
    %v341 = vrot.slane %v337, %v340
    %v342 = vadd.f32 %v329, %v341
    %v343 = vadd.f32 %v334, %v341
    %v344 = vld [vmem:[#allocation2] sm:$0x1]
    %v345 = vld [vmem:[#allocation5] sm:$0x1]
    %vm346 = vcmask 261120
    %v347 = vsel %vm346, %v342, 0.0
    %348 = vadd.xlane.f32.xlu0 %v347
    %v349 = vpop.xlane.xlu0 %348
    %v350 = vsel %vm346, %v343, 0.0
    %351 = vadd.xlane.f32.xlu0 %v350
    %v352 = vpop.xlane.xlu0 %351
    %v353 = vrcp.pop 32.0
    %v354 = vmul.f32 %v349, %v353
    %v355 = vmul.f32 %v352, %v353
    %v356 = vsub.f32 %v342, %v354
    %v357 = vsub.f32 %v343, %v355
    %v358 = vmul.f32 %v356, %v356
    %v359 = vmul.f32 %v357, %v357
    %v360 = vsel %vm346, %v358, 0.0
    %361 = vadd.xlane.f32.xlu0 %v360
    %v362 = vpop.xlane.xlu0 %361
    %v363 = vsel %vm346, %v359, 0.0
    %364 = vadd.xlane.f32.xlu0 %v363
    %v365 = vpop.xlane.xlu0 %364
    %v366 = vmul.f32 %v362, %v353
    %v367 = vmul.f32 %v365, %v353
    %v368 = vadd.f32 %v366, 1e-12
    %v369 = vadd.f32 %v367, 1e-12
    %v370 = vrsqrt.pop %v368
    %v371 = vrsqrt.pop %v369
    %v372 = vmul.f32 %v356, %v370
    %v373 = vmul.f32 %v357, %v371
    %v375 = vlaneseq
    %v376 = vshrl.u32 %v375, 7
    %v377 = vsub.s32 0, %v376
    %v378 = vrot.slane %v344, %v377
    %v380 = vmul.f32 %v372, %v378
    %v381 = vmul.f32 %v373, %v378
    %v383 = vlaneseq
    %v384 = vshrl.u32 %v383, 7
    %v385 = vsub.s32 0, %v384
    %v386 = vrot.slane %v345, %v385
    %v388 = vadd.f32 %v380, %v386
    %v389 = vadd.f32 %v381, %v386
    %v390 = vld [vmem:[%s13] sm:$0xff]
    %v391 = vld [vmem:[%s13 + $0x8] sm:$0xff]
    %v392 = vld [vmem:[%s13 + $0x10] sm:$0xff]
    %v393 = vld [vmem:[%s13 + $0x18] sm:$0xff]
    %v394 = vld [vmem:[#allocation7] sm:$0x1]
    %v396 = vlaneseq
    %v397 = vshrl.u32 %v396, 7
    %v398 = vsub.s32 0, %v397
    %v399 = vrot.slane %v394, %v398
    %v402 = vsel %vm346, %v388, 0
    %v405 = vsel %vm346, %v389, 0
    %407 = vmatprep.subr.mxu0 0.0
    %408 = vmatpush1.msra.mxu0 %v390
    %409 = vmatprep.subr.mxu0 0.0
    %410 = vmatpush1.msra.mxu0 %v391
    %411 = vmatprep.subr.mxu0 0.0
    %412 = vmatpush1.msra.mxu0 %v392
    %413 = vmatprep.subr.mxu0 0.0
    %414 = vmatpush1.msra.mxu0 %v393
    %415 = vmatprep.subr.mxu0 0.0
    %416 = vmatpush1.msra.mxu0 0.0
    %417 = vmatprep.subr.mxu0 0.0
    %418 = vmatpush1.msra.mxu0 0.0
    %419 = vmatprep.subr.mxu0 0.0
    %420 = vmatpush1.msra.mxu0 0.0
    %421 = vmatprep.subr.mxu0 0.0
    %422 = vmatpush1.msra.mxu0 0.0
    %423 = vmatprep.subr.mxu0 0.0
    %424 = vmatpush1.msra.mxu0 0.0
    %425 = vmatprep.subr.mxu0 0.0
    %426 = vmatpush1.msra.mxu0 0.0
    %427 = vmatprep.subr.mxu0 0.0
    %428 = vmatpush1.msra.mxu0 0.0
    %429 = vmatprep.subr.mxu0 0.0
    %430 = vmatpush1.msra.mxu0 0.0
    %431 = vmatprep.subr.mxu0 0.0
    %432 = vmatpush1.msra.mxu0 0.0
    %433 = vmatprep.subr.mxu0 0.0
    %434 = vmatpush1.msra.mxu0 0.0
    %435 = vmatprep.subr.mxu0 0.0
    %436 = vmatpush1.msra.mxu0 0.0
    %437 = vmatprep.subr.mxu0 0.0
    %438 = vmatpush1.msra.mxu0 0.0
    %439 = vmatprep.subr.mxu0 0.0
    %440 = vmatpush1.msra.mxu0 0.0
    %441 = vmatprep.subr.mxu0 0.0
    %442 = vmatpush1.msra.mxu0 0.0
    %443 = vmatprep.subr.mxu0 0.0
    %444 = vmatpush1.msra.mxu0 0.0
    %445 = vmatprep.subr.mxu0 0.0
    %446 = vmatpush1.msra.mxu0 0.0
    %447 = vmatprep.subr.mxu0 0.0
    %448 = vmatpush1.msra.mxu0 0.0
    %449 = vmatprep.subr.mxu0 0.0
    %450 = vmatpush1.msra.mxu0 0.0
    %451 = vmatprep.subr.mxu0 0.0
    %452 = vmatpush1.msra.mxu0 0.0
    %453 = vmatprep.subr.mxu0 0.0
    %454 = vmatpush1.msra.mxu0 0.0
    %455 = vmatprep.subr.mxu0 0.0
    %456 = vmatpush1.msra.mxu0 0.0
    %457 = vmatprep.subr.mxu0 0.0
    %458 = vmatpush1.msra.mxu0 0.0
    %459 = vmatprep.subr.mxu0 0.0
    %460 = vmatpush1.msra.mxu0 0.0
    %461 = vmatprep.subr.mxu0 0.0
    %462 = vmatpush1.msra.mxu0 0.0
    %463 = vmatprep.subr.mxu0 0.0
    %464 = vmatpush1.msra.mxu0 0.0
    %465 = vmatprep.subr.mxu0 0.0
    %466 = vmatpush1.msra.mxu0 0.0
    %467 = vmatprep.subr.mxu0 0.0
    %468 = vmatpush1.msra.mxu0 0.0
    %469 = vmatprep.subr.mxu0 0.0
    %470 = vmatpush1.msra.mxu0 0.0
    %471 = vmatprep.mubr.f32.mxu0 0.0
    %472 = vmatmul.mubr.f32.gmra.mrb[0].mxu0 %v402
    %v473 = vpop.f32.mrb[0].mxu0
    %v474 = vadd.f32 %v399, %v473
    %v475 = vpop.f32.mrb[0].mxu0
    %476 = vmatprep.mubr.f32.mxu0 0.0
    %477 = vmatmul.mubr.f32.gmra.mrb[0].mxu0 %v405
    %v478 = vpop.f32.mrb[0].mxu0
    %v479 = vadd.f32 %v399, %v478
    %v480 = vpop.f32.mrb[0].mxu0
    %481 = vdwg.mxu0
    %484 = vrot.lane.b32.xlu0 %v474, 120
    %v485 = vpop.permute.xlu0 %484
    %486 = vrot.lane.b32.xlu0 %v479, 120
    %v487 = vpop.permute.xlu0 %486
    %488 = vrot.lane.b32.xlu0 %v474, 112
    %v489 = vpop.permute.xlu0 %488
    %490 = vrot.lane.b32.xlu0 %v479, 112
    %v491 = vpop.permute.xlu0 %490
    %492 = vrot.lane.b32.xlu0 %v474, 104
    %v493 = vpop.permute.xlu0 %492
    %494 = vrot.lane.b32.xlu0 %v479, 104
    %v495 = vpop.permute.xlu0 %494
    %496 = vrot.lane.b32.xlu0 %v474, 96
    %v497 = vpop.permute.xlu0 %496
    %vm498 = vcmask 64512
    %v499 = vsel %vm498, %v474, 0
    %v501 = vsel %vm498, %v497, 0
    %503 = vmatprep.subr.mxu0 0.0
    %504 = vmatpush1.xpose.msra.mxu0 %v501
    %505 = vmatprep.subr.mxu0 0.0
    %506 = vmatpush1.xpose.msra.mxu0 0.0
    %507 = vmatprep.subr.mxu0 0.0
    %508 = vmatpush1.xpose.msra.mxu0 0.0
    %509 = vmatprep.subr.mxu0 0.0
    %510 = vmatpush1.xpose.msra.mxu0 0.0
    %511 = vmatprep.subr.mxu0 0.0
    %512 = vmatpush1.xpose.msra.mxu0 0.0
    %513 = vmatprep.subr.mxu0 0.0
    %514 = vmatpush1.xpose.msra.mxu0 0.0
    %515 = vmatprep.subr.mxu0 0.0
    %516 = vmatpush1.xpose.msra.mxu0 0.0
    %517 = vmatprep.subr.mxu0 0.0
    %518 = vmatpush1.xpose.msra.mxu0 0.0
    %519 = vmatprep.subr.mxu0 0.0
    %520 = vmatpush1.xpose.msra.mxu0 0.0
    %521 = vmatprep.subr.mxu0 0.0
    %522 = vmatpush1.xpose.msra.mxu0 0.0
    %523 = vmatprep.subr.mxu0 0.0
    %524 = vmatpush1.xpose.msra.mxu0 0.0
    %525 = vmatprep.subr.mxu0 0.0
    %526 = vmatpush1.xpose.msra.mxu0 0.0
    %527 = vmatprep.subr.mxu0 0.0
    %528 = vmatpush1.xpose.msra.mxu0 0.0
    %529 = vmatprep.subr.mxu0 0.0
    %530 = vmatpush1.xpose.msra.mxu0 0.0
    %531 = vmatprep.subr.mxu0 0.0
    %532 = vmatpush1.xpose.msra.mxu0 0.0
    %533 = vmatprep.subr.mxu0 0.0
    %534 = vmatpush1.xpose.msra.mxu0 0.0
    %535 = vmatprep.subr.mxu0 0.0
    %536 = vmatpush1.xpose.msra.mxu0 0.0
    %537 = vmatprep.subr.mxu0 0.0
    %538 = vmatpush1.xpose.msra.mxu0 0.0
    %539 = vmatprep.subr.mxu0 0.0
    %540 = vmatpush1.xpose.msra.mxu0 0.0
    %541 = vmatprep.subr.mxu0 0.0
    %542 = vmatpush1.xpose.msra.mxu0 0.0
    %543 = vmatprep.subr.mxu0 0.0
    %544 = vmatpush1.xpose.msra.mxu0 0.0
    %545 = vmatprep.subr.mxu0 0.0
    %546 = vmatpush1.xpose.msra.mxu0 0.0
    %547 = vmatprep.subr.mxu0 0.0
    %548 = vmatpush1.xpose.msra.mxu0 0.0
    %549 = vmatprep.subr.mxu0 0.0
    %550 = vmatpush1.xpose.msra.mxu0 0.0
    %551 = vmatprep.subr.mxu0 0.0
    %552 = vmatpush1.xpose.msra.mxu0 0.0
    %553 = vmatprep.subr.mxu0 0.0
    %554 = vmatpush1.xpose.msra.mxu0 0.0
    %555 = vmatprep.subr.mxu0 0.0
    %556 = vmatpush1.xpose.msra.mxu0 0.0
    %557 = vmatprep.subr.mxu0 0.0
    %558 = vmatpush1.xpose.msra.mxu0 0.0
    %559 = vmatprep.subr.mxu0 0.0
    %560 = vmatpush1.xpose.msra.mxu0 0.0
    %561 = vmatprep.subr.mxu0 0.0
    %562 = vmatpush1.xpose.msra.mxu0 0.0
    %563 = vmatprep.subr.mxu0 0.0
    %564 = vmatpush1.xpose.msra.mxu0 0.0
    %565 = vmatprep.subr.mxu0 0.0
    %566 = vmatpush1.xpose.msra.mxu0 0.0
    %567 = vmatprep.mubr.f32.mxu0 0.0
    %568 = vmatmul.mubr.f32.gmra.mrb[0].mxu0 %v499
    %v569 = vpop.f32.mrb[0].mxu0
    %v570 = vadd.f32 0.0, %v569
    %v571 = vpop.f32.mrb[0].mxu0
    %572 = vdwg.mxu0
    %573 = vrot.lane.b32.xlu0 %v479, 96
    %v574 = vpop.permute.xlu0 %573
    %v575 = vsel %vm498, %v479, 0
    %v577 = vsel %vm498, %v574, 0
    %579 = vmatprep.subr.mxu0 0.0
    %580 = vmatpush1.xpose.msra.mxu0 %v577
    %581 = vmatprep.subr.mxu0 0.0
    %582 = vmatpush1.xpose.msra.mxu0 0.0
    %583 = vmatprep.subr.mxu0 0.0
    %584 = vmatpush1.xpose.msra.mxu0 0.0
    %585 = vmatprep.subr.mxu0 0.0
    %586 = vmatpush1.xpose.msra.mxu0 0.0
    %587 = vmatprep.subr.mxu0 0.0
    %588 = vmatpush1.xpose.msra.mxu0 0.0
    %589 = vmatprep.subr.mxu0 0.0
    %590 = vmatpush1.xpose.msra.mxu0 0.0
    %591 = vmatprep.subr.mxu0 0.0
    %592 = vmatpush1.xpose.msra.mxu0 0.0
    %593 = vmatprep.subr.mxu0 0.0
    %594 = vmatpush1.xpose.msra.mxu0 0.0
    %595 = vmatprep.subr.mxu0 0.0
    %596 = vmatpush1.xpose.msra.mxu0 0.0
    %597 = vmatprep.subr.mxu0 0.0
    %598 = vmatpush1.xpose.msra.mxu0 0.0
    %599 = vmatprep.subr.mxu0 0.0
    %600 = vmatpush1.xpose.msra.mxu0 0.0
    %601 = vmatprep.subr.mxu0 0.0
    %602 = vmatpush1.xpose.msra.mxu0 0.0
    %603 = vmatprep.subr.mxu0 0.0
    %604 = vmatpush1.xpose.msra.mxu0 0.0
    %605 = vmatprep.subr.mxu0 0.0
    %606 = vmatpush1.xpose.msra.mxu0 0.0
    %607 = vmatprep.subr.mxu0 0.0
    %608 = vmatpush1.xpose.msra.mxu0 0.0
    %609 = vmatprep.subr.mxu0 0.0
    %610 = vmatpush1.xpose.msra.mxu0 0.0
    %611 = vmatprep.subr.mxu0 0.0
    %612 = vmatpush1.xpose.msra.mxu0 0.0
    %613 = vmatprep.subr.mxu0 0.0
    %614 = vmatpush1.xpose.msra.mxu0 0.0
    %615 = vmatprep.subr.mxu0 0.0
    %616 = vmatpush1.xpose.msra.mxu0 0.0
    %617 = vmatprep.subr.mxu0 0.0
    %618 = vmatpush1.xpose.msra.mxu0 0.0
    %619 = vmatprep.subr.mxu0 0.0
    %620 = vmatpush1.xpose.msra.mxu0 0.0
    %621 = vmatprep.subr.mxu0 0.0
    %622 = vmatpush1.xpose.msra.mxu0 0.0
    %623 = vmatprep.subr.mxu0 0.0
    %624 = vmatpush1.xpose.msra.mxu0 0.0
    %625 = vmatprep.subr.mxu0 0.0
    %626 = vmatpush1.xpose.msra.mxu0 0.0
    %627 = vmatprep.subr.mxu0 0.0
    %628 = vmatpush1.xpose.msra.mxu0 0.0
    %629 = vmatprep.subr.mxu0 0.0
    %630 = vmatpush1.xpose.msra.mxu0 0.0
    %631 = vmatprep.subr.mxu0 0.0
    %632 = vmatpush1.xpose.msra.mxu0 0.0
    %633 = vmatprep.subr.mxu0 0.0
    %634 = vmatpush1.xpose.msra.mxu0 0.0
    %635 = vmatprep.subr.mxu0 0.0
    %636 = vmatpush1.xpose.msra.mxu0 0.0
    %637 = vmatprep.subr.mxu0 0.0
    %638 = vmatpush1.xpose.msra.mxu0 0.0
    %639 = vmatprep.subr.mxu0 0.0
    %640 = vmatpush1.xpose.msra.mxu0 0.0
    %641 = vmatprep.subr.mxu0 0.0
    %642 = vmatpush1.xpose.msra.mxu0 0.0
    %643 = vmatprep.mubr.f32.mxu0 0.0
    %644 = vmatmul.mubr.f32.gmra.mrb[0].mxu0 %v575
    %v645 = vpop.f32.mrb[0].mxu0
    %v646 = vadd.f32 0.0, %v645
    %v647 = vpop.f32.mrb[0].mxu0
    %648 = vdwg.mxu0
    %649 = vrot.lane.b32.xlu0 %v485, 96
    %v650 = vpop.permute.xlu0 %649
    %v651 = vsel %vm498, %v485, 0
    %v653 = vsel %vm498, %v650, 0
    %655 = vmatprep.subr.mxu0 0.0
    %656 = vmatpush1.xpose.msra.mxu0 %v653
    %657 = vmatprep.subr.mxu0 0.0
    %658 = vmatpush1.xpose.msra.mxu0 0.0
    %659 = vmatprep.subr.mxu0 0.0
    %660 = vmatpush1.xpose.msra.mxu0 0.0
    %661 = vmatprep.subr.mxu0 0.0
    %662 = vmatpush1.xpose.msra.mxu0 0.0
    %663 = vmatprep.subr.mxu0 0.0
    %664 = vmatpush1.xpose.msra.mxu0 0.0
    %665 = vmatprep.subr.mxu0 0.0
    %666 = vmatpush1.xpose.msra.mxu0 0.0
    %667 = vmatprep.subr.mxu0 0.0
    %668 = vmatpush1.xpose.msra.mxu0 0.0
    %669 = vmatprep.subr.mxu0 0.0
    %670 = vmatpush1.xpose.msra.mxu0 0.0
    %671 = vmatprep.subr.mxu0 0.0
    %672 = vmatpush1.xpose.msra.mxu0 0.0
    %673 = vmatprep.subr.mxu0 0.0
    %674 = vmatpush1.xpose.msra.mxu0 0.0
    %675 = vmatprep.subr.mxu0 0.0
    %676 = vmatpush1.xpose.msra.mxu0 0.0
    %677 = vmatprep.subr.mxu0 0.0
    %678 = vmatpush1.xpose.msra.mxu0 0.0
    %679 = vmatprep.subr.mxu0 0.0
    %680 = vmatpush1.xpose.msra.mxu0 0.0
    %681 = vmatprep.subr.mxu0 0.0
    %682 = vmatpush1.xpose.msra.mxu0 0.0
    %683 = vmatprep.subr.mxu0 0.0
    %684 = vmatpush1.xpose.msra.mxu0 0.0
    %685 = vmatprep.subr.mxu0 0.0
    %686 = vmatpush1.xpose.msra.mxu0 0.0
    %687 = vmatprep.subr.mxu0 0.0
    %688 = vmatpush1.xpose.msra.mxu0 0.0
    %689 = vmatprep.subr.mxu0 0.0
    %690 = vmatpush1.xpose.msra.mxu0 0.0
    %691 = vmatprep.subr.mxu0 0.0
    %692 = vmatpush1.xpose.msra.mxu0 0.0
    %693 = vmatprep.subr.mxu0 0.0
    %694 = vmatpush1.xpose.msra.mxu0 0.0
    %695 = vmatprep.subr.mxu0 0.0
    %696 = vmatpush1.xpose.msra.mxu0 0.0
    %697 = vmatprep.subr.mxu0 0.0
    %698 = vmatpush1.xpose.msra.mxu0 0.0
    %699 = vmatprep.subr.mxu0 0.0
    %700 = vmatpush1.xpose.msra.mxu0 0.0
    %701 = vmatprep.subr.mxu0 0.0
    %702 = vmatpush1.xpose.msra.mxu0 0.0
    %703 = vmatprep.subr.mxu0 0.0
    %704 = vmatpush1.xpose.msra.mxu0 0.0
    %705 = vmatprep.subr.mxu0 0.0
    %706 = vmatpush1.xpose.msra.mxu0 0.0
    %707 = vmatprep.subr.mxu0 0.0
    %708 = vmatpush1.xpose.msra.mxu0 0.0
    %709 = vmatprep.subr.mxu0 0.0
    %710 = vmatpush1.xpose.msra.mxu0 0.0
    %711 = vmatprep.subr.mxu0 0.0
    %712 = vmatpush1.xpose.msra.mxu0 0.0
    %713 = vmatprep.subr.mxu0 0.0
    %714 = vmatpush1.xpose.msra.mxu0 0.0
    %715 = vmatprep.subr.mxu0 0.0
    %716 = vmatpush1.xpose.msra.mxu0 0.0
    %717 = vmatprep.subr.mxu0 0.0
    %718 = vmatpush1.xpose.msra.mxu0 0.0
    %719 = vmatprep.mubr.f32.mxu0 0.0
    %720 = vmatmul.mubr.f32.gmra.mrb[0].mxu0 %v651
    %v721 = vpop.f32.mrb[0].mxu0
    %v722 = vadd.f32 0.0, %v721
    %v723 = vpop.f32.mrb[0].mxu0
    %724 = vdwg.mxu0
    %725 = vrot.lane.b32.xlu0 %v487, 96
    %v726 = vpop.permute.xlu0 %725
    %v727 = vsel %vm498, %v487, 0
    %v729 = vsel %vm498, %v726, 0
    %731 = vmatprep.subr.mxu0 0.0
    %732 = vmatpush1.xpose.msra.mxu0 %v729
    %733 = vmatprep.subr.mxu0 0.0
    %734 = vmatpush1.xpose.msra.mxu0 0.0
    %735 = vmatprep.subr.mxu0 0.0
    %736 = vmatpush1.xpose.msra.mxu0 0.0
    %737 = vmatprep.subr.mxu0 0.0
    %738 = vmatpush1.xpose.msra.mxu0 0.0
    %739 = vmatprep.subr.mxu0 0.0
    %740 = vmatpush1.xpose.msra.mxu0 0.0
    %741 = vmatprep.subr.mxu0 0.0
    %742 = vmatpush1.xpose.msra.mxu0 0.0
    %743 = vmatprep.subr.mxu0 0.0
    %744 = vmatpush1.xpose.msra.mxu0 0.0
    %745 = vmatprep.subr.mxu0 0.0
    %746 = vmatpush1.xpose.msra.mxu0 0.0
    %747 = vmatprep.subr.mxu0 0.0
    %748 = vmatpush1.xpose.msra.mxu0 0.0
    %749 = vmatprep.subr.mxu0 0.0
    %750 = vmatpush1.xpose.msra.mxu0 0.0
    %751 = vmatprep.subr.mxu0 0.0
    %752 = vmatpush1.xpose.msra.mxu0 0.0
    %753 = vmatprep.subr.mxu0 0.0
    %754 = vmatpush1.xpose.msra.mxu0 0.0
    %755 = vmatprep.subr.mxu0 0.0
    %756 = vmatpush1.xpose.msra.mxu0 0.0
    %757 = vmatprep.subr.mxu0 0.0
    %758 = vmatpush1.xpose.msra.mxu0 0.0
    %759 = vmatprep.subr.mxu0 0.0
    %760 = vmatpush1.xpose.msra.mxu0 0.0
    %761 = vmatprep.subr.mxu0 0.0
    %762 = vmatpush1.xpose.msra.mxu0 0.0
    %763 = vmatprep.subr.mxu0 0.0
    %764 = vmatpush1.xpose.msra.mxu0 0.0
    %765 = vmatprep.subr.mxu0 0.0
    %766 = vmatpush1.xpose.msra.mxu0 0.0
    %767 = vmatprep.subr.mxu0 0.0
    %768 = vmatpush1.xpose.msra.mxu0 0.0
    %769 = vmatprep.subr.mxu0 0.0
    %770 = vmatpush1.xpose.msra.mxu0 0.0
    %771 = vmatprep.subr.mxu0 0.0
    %772 = vmatpush1.xpose.msra.mxu0 0.0
    %773 = vmatprep.subr.mxu0 0.0
    %774 = vmatpush1.xpose.msra.mxu0 0.0
    %775 = vmatprep.subr.mxu0 0.0
    %776 = vmatpush1.xpose.msra.mxu0 0.0
    %777 = vmatprep.subr.mxu0 0.0
    %778 = vmatpush1.xpose.msra.mxu0 0.0
    %779 = vmatprep.subr.mxu0 0.0
    %780 = vmatpush1.xpose.msra.mxu0 0.0
    %781 = vmatprep.subr.mxu0 0.0
    %782 = vmatpush1.xpose.msra.mxu0 0.0
    %783 = vmatprep.subr.mxu0 0.0
    %784 = vmatpush1.xpose.msra.mxu0 0.0
    %785 = vmatprep.subr.mxu0 0.0
    %786 = vmatpush1.xpose.msra.mxu0 0.0
    %787 = vmatprep.subr.mxu0 0.0
    %788 = vmatpush1.xpose.msra.mxu0 0.0
    %789 = vmatprep.subr.mxu0 0.0
    %790 = vmatpush1.xpose.msra.mxu0 0.0
    %791 = vmatprep.subr.mxu0 0.0
    %792 = vmatpush1.xpose.msra.mxu0 0.0
    %793 = vmatprep.subr.mxu0 0.0
    %794 = vmatpush1.xpose.msra.mxu0 0.0
    %795 = vmatprep.mubr.f32.mxu0 0.0
    %796 = vmatmul.mubr.f32.gmra.mrb[0].mxu0 %v727
    %v797 = vpop.f32.mrb[0].mxu0
    %v798 = vadd.f32 0.0, %v797
    %v799 = vpop.f32.mrb[0].mxu0
    %800 = vdwg.mxu0
    %801 = vrot.lane.b32.xlu0 %v489, 96
    %v802 = vpop.permute.xlu0 %801
    %v803 = vsel %vm498, %v489, 0
    %v805 = vsel %vm498, %v802, 0
    %807 = vmatprep.subr.mxu0 0.0
    %808 = vmatpush1.xpose.msra.mxu0 %v805
    %809 = vmatprep.subr.mxu0 0.0
    %810 = vmatpush1.xpose.msra.mxu0 0.0
    %811 = vmatprep.subr.mxu0 0.0
    %812 = vmatpush1.xpose.msra.mxu0 0.0
    %813 = vmatprep.subr.mxu0 0.0
    %814 = vmatpush1.xpose.msra.mxu0 0.0
    %815 = vmatprep.subr.mxu0 0.0
    %816 = vmatpush1.xpose.msra.mxu0 0.0
    %817 = vmatprep.subr.mxu0 0.0
    %818 = vmatpush1.xpose.msra.mxu0 0.0
    %819 = vmatprep.subr.mxu0 0.0
    %820 = vmatpush1.xpose.msra.mxu0 0.0
    %821 = vmatprep.subr.mxu0 0.0
    %822 = vmatpush1.xpose.msra.mxu0 0.0
    %823 = vmatprep.subr.mxu0 0.0
    %824 = vmatpush1.xpose.msra.mxu0 0.0
    %825 = vmatprep.subr.mxu0 0.0
    %826 = vmatpush1.xpose.msra.mxu0 0.0
    %827 = vmatprep.subr.mxu0 0.0
    %828 = vmatpush1.xpose.msra.mxu0 0.0
    %829 = vmatprep.subr.mxu0 0.0
    %830 = vmatpush1.xpose.msra.mxu0 0.0
    %831 = vmatprep.subr.mxu0 0.0
    %832 = vmatpush1.xpose.msra.mxu0 0.0
    %833 = vmatprep.subr.mxu0 0.0
    %834 = vmatpush1.xpose.msra.mxu0 0.0
    %835 = vmatprep.subr.mxu0 0.0
    %836 = vmatpush1.xpose.msra.mxu0 0.0
    %837 = vmatprep.subr.mxu0 0.0
    %838 = vmatpush1.xpose.msra.mxu0 0.0
    %839 = vmatprep.subr.mxu0 0.0
    %840 = vmatpush1.xpose.msra.mxu0 0.0
    %841 = vmatprep.subr.mxu0 0.0
    %842 = vmatpush1.xpose.msra.mxu0 0.0
    %843 = vmatprep.subr.mxu0 0.0
    %844 = vmatpush1.xpose.msra.mxu0 0.0
    %845 = vmatprep.subr.mxu0 0.0
    %846 = vmatpush1.xpose.msra.mxu0 0.0
    %847 = vmatprep.subr.mxu0 0.0
    %848 = vmatpush1.xpose.msra.mxu0 0.0
    %849 = vmatprep.subr.mxu0 0.0
    %850 = vmatpush1.xpose.msra.mxu0 0.0
    %851 = vmatprep.subr.mxu0 0.0
    %852 = vmatpush1.xpose.msra.mxu0 0.0
    %853 = vmatprep.subr.mxu0 0.0
    %854 = vmatpush1.xpose.msra.mxu0 0.0
    %855 = vmatprep.subr.mxu0 0.0
    %856 = vmatpush1.xpose.msra.mxu0 0.0
    %857 = vmatprep.subr.mxu0 0.0
    %858 = vmatpush1.xpose.msra.mxu0 0.0
    %859 = vmatprep.subr.mxu0 0.0
    %860 = vmatpush1.xpose.msra.mxu0 0.0
    %861 = vmatprep.subr.mxu0 0.0
    %862 = vmatpush1.xpose.msra.mxu0 0.0
    %863 = vmatprep.subr.mxu0 0.0
    %864 = vmatpush1.xpose.msra.mxu0 0.0
    %865 = vmatprep.subr.mxu0 0.0
    %866 = vmatpush1.xpose.msra.mxu0 0.0
    %867 = vmatprep.subr.mxu0 0.0
    %868 = vmatpush1.xpose.msra.mxu0 0.0
    %869 = vmatprep.subr.mxu0 0.0
    %870 = vmatpush1.xpose.msra.mxu0 0.0
    %871 = vmatprep.mubr.f32.mxu0 0.0
    %872 = vmatmul.mubr.f32.gmra.mrb[0].mxu0 %v803
    %v873 = vpop.f32.mrb[0].mxu0
    %v874 = vadd.f32 0.0, %v873
    %v875 = vpop.f32.mrb[0].mxu0
    %876 = vdwg.mxu0
    %877 = vrot.lane.b32.xlu0 %v491, 96
    %v878 = vpop.permute.xlu0 %877
    %v879 = vsel %vm498, %v491, 0
    %v881 = vsel %vm498, %v878, 0
    %883 = vmatprep.subr.mxu0 0.0
    %884 = vmatpush1.xpose.msra.mxu0 %v881
    %885 = vmatprep.subr.mxu0 0.0
    %886 = vmatpush1.xpose.msra.mxu0 0.0
    %887 = vmatprep.subr.mxu0 0.0
    %888 = vmatpush1.xpose.msra.mxu0 0.0
    %889 = vmatprep.subr.mxu0 0.0
    %890 = vmatpush1.xpose.msra.mxu0 0.0
    %891 = vmatprep.subr.mxu0 0.0
    %892 = vmatpush1.xpose.msra.mxu0 0.0
    %893 = vmatprep.subr.mxu0 0.0
    %894 = vmatpush1.xpose.msra.mxu0 0.0
    %895 = vmatprep.subr.mxu0 0.0
    %896 = vmatpush1.xpose.msra.mxu0 0.0
    %897 = vmatprep.subr.mxu0 0.0
    %898 = vmatpush1.xpose.msra.mxu0 0.0
    %899 = vmatprep.subr.mxu0 0.0
    %900 = vmatpush1.xpose.msra.mxu0 0.0
    %901 = vmatprep.subr.mxu0 0.0
    %902 = vmatpush1.xpose.msra.mxu0 0.0
    %903 = vmatprep.subr.mxu0 0.0
    %904 = vmatpush1.xpose.msra.mxu0 0.0
    %905 = vmatprep.subr.mxu0 0.0
    %906 = vmatpush1.xpose.msra.mxu0 0.0
    %907 = vmatprep.subr.mxu0 0.0
    %908 = vmatpush1.xpose.msra.mxu0 0.0
    %909 = vmatprep.subr.mxu0 0.0
    %910 = vmatpush1.xpose.msra.mxu0 0.0
    %911 = vmatprep.subr.mxu0 0.0
    %912 = vmatpush1.xpose.msra.mxu0 0.0
    %913 = vmatprep.subr.mxu0 0.0
    %914 = vmatpush1.xpose.msra.mxu0 0.0
    %915 = vmatprep.subr.mxu0 0.0
    %916 = vmatpush1.xpose.msra.mxu0 0.0
    %917 = vmatprep.subr.mxu0 0.0
    %918 = vmatpush1.xpose.msra.mxu0 0.0
    %919 = vmatprep.subr.mxu0 0.0
    %920 = vmatpush1.xpose.msra.mxu0 0.0
    %921 = vmatprep.subr.mxu0 0.0
    %922 = vmatpush1.xpose.msra.mxu0 0.0
    %923 = vmatprep.subr.mxu0 0.0
    %924 = vmatpush1.xpose.msra.mxu0 0.0
    %925 = vmatprep.subr.mxu0 0.0
    %926 = vmatpush1.xpose.msra.mxu0 0.0
    %927 = vmatprep.subr.mxu0 0.0
    %928 = vmatpush1.xpose.msra.mxu0 0.0
    %929 = vmatprep.subr.mxu0 0.0
    %930 = vmatpush1.xpose.msra.mxu0 0.0
    %931 = vmatprep.subr.mxu0 0.0
    %932 = vmatpush1.xpose.msra.mxu0 0.0
    %933 = vmatprep.subr.mxu0 0.0
    %934 = vmatpush1.xpose.msra.mxu0 0.0
    %935 = vmatprep.subr.mxu0 0.0
    %936 = vmatpush1.xpose.msra.mxu0 0.0
    %937 = vmatprep.subr.mxu0 0.0
    %938 = vmatpush1.xpose.msra.mxu0 0.0
    %939 = vmatprep.subr.mxu0 0.0
    %940 = vmatpush1.xpose.msra.mxu0 0.0
    %941 = vmatprep.subr.mxu0 0.0
    %942 = vmatpush1.xpose.msra.mxu0 0.0
    %943 = vmatprep.subr.mxu0 0.0
    %944 = vmatpush1.xpose.msra.mxu0 0.0
    %945 = vmatprep.subr.mxu0 0.0
    %946 = vmatpush1.xpose.msra.mxu0 0.0
    %947 = vmatprep.mubr.f32.mxu0 0.0
    %948 = vmatmul.mubr.f32.gmra.mrb[0].mxu0 %v879
    %v949 = vpop.f32.mrb[0].mxu0
    %v950 = vadd.f32 0.0, %v949
    %v951 = vpop.f32.mrb[0].mxu0
    %952 = vdwg.mxu0
    %953 = vrot.lane.b32.xlu0 %v493, 96
    %v954 = vpop.permute.xlu0 %953
    %v955 = vsel %vm498, %v493, 0
    %v957 = vsel %vm498, %v954, 0
    %959 = vmatprep.subr.mxu0 0.0
    %960 = vmatpush1.xpose.msra.mxu0 %v957
    %961 = vmatprep.subr.mxu0 0.0
    %962 = vmatpush1.xpose.msra.mxu0 0.0
    %963 = vmatprep.subr.mxu0 0.0
    %964 = vmatpush1.xpose.msra.mxu0 0.0
    %965 = vmatprep.subr.mxu0 0.0
    %966 = vmatpush1.xpose.msra.mxu0 0.0
    %967 = vmatprep.subr.mxu0 0.0
    %968 = vmatpush1.xpose.msra.mxu0 0.0
    %969 = vmatprep.subr.mxu0 0.0
    %970 = vmatpush1.xpose.msra.mxu0 0.0
    %971 = vmatprep.subr.mxu0 0.0
    %972 = vmatpush1.xpose.msra.mxu0 0.0
    %973 = vmatprep.subr.mxu0 0.0
    %974 = vmatpush1.xpose.msra.mxu0 0.0
    %975 = vmatprep.subr.mxu0 0.0
    %976 = vmatpush1.xpose.msra.mxu0 0.0
    %977 = vmatprep.subr.mxu0 0.0
    %978 = vmatpush1.xpose.msra.mxu0 0.0
    %979 = vmatprep.subr.mxu0 0.0
    %980 = vmatpush1.xpose.msra.mxu0 0.0
    %981 = vmatprep.subr.mxu0 0.0
    %982 = vmatpush1.xpose.msra.mxu0 0.0
    %983 = vmatprep.subr.mxu0 0.0
    %984 = vmatpush1.xpose.msra.mxu0 0.0
    %985 = vmatprep.subr.mxu0 0.0
    %986 = vmatpush1.xpose.msra.mxu0 0.0
    %987 = vmatprep.subr.mxu0 0.0
    %988 = vmatpush1.xpose.msra.mxu0 0.0
    %989 = vmatprep.subr.mxu0 0.0
    %990 = vmatpush1.xpose.msra.mxu0 0.0
    %991 = vmatprep.subr.mxu0 0.0
    %992 = vmatpush1.xpose.msra.mxu0 0.0
    %993 = vmatprep.subr.mxu0 0.0
    %994 = vmatpush1.xpose.msra.mxu0 0.0
    %995 = vmatprep.subr.mxu0 0.0
    %996 = vmatpush1.xpose.msra.mxu0 0.0
    %997 = vmatprep.subr.mxu0 0.0
    %998 = vmatpush1.xpose.msra.mxu0 0.0
    %999 = vmatprep.subr.mxu0 0.0
    %1000 = vmatpush1.xpose.msra.mxu0 0.0
    %1001 = vmatprep.subr.mxu0 0.0
    %1002 = vmatpush1.xpose.msra.mxu0 0.0
    %1003 = vmatprep.subr.mxu0 0.0
    %1004 = vmatpush1.xpose.msra.mxu0 0.0
    %1005 = vmatprep.subr.mxu0 0.0
    %1006 = vmatpush1.xpose.msra.mxu0 0.0
    %1007 = vmatprep.subr.mxu0 0.0
    %1008 = vmatpush1.xpose.msra.mxu0 0.0
    %1009 = vmatprep.subr.mxu0 0.0
    %1010 = vmatpush1.xpose.msra.mxu0 0.0
    %1011 = vmatprep.subr.mxu0 0.0
    %1012 = vmatpush1.xpose.msra.mxu0 0.0
    %1013 = vmatprep.subr.mxu0 0.0
    %1014 = vmatpush1.xpose.msra.mxu0 0.0
    %1015 = vmatprep.subr.mxu0 0.0
    %1016 = vmatpush1.xpose.msra.mxu0 0.0
    %1017 = vmatprep.subr.mxu0 0.0
    %1018 = vmatpush1.xpose.msra.mxu0 0.0
    %1019 = vmatprep.subr.mxu0 0.0
    %1020 = vmatpush1.xpose.msra.mxu0 0.0
    %1021 = vmatprep.subr.mxu0 0.0
    %1022 = vmatpush1.xpose.msra.mxu0 0.0
    %1023 = vmatprep.mubr.f32.mxu0 0.0
    %1024 = vmatmul.mubr.f32.gmra.mrb[0].mxu0 %v955
    %v1025 = vpop.f32.mrb[0].mxu0
    %v1026 = vadd.f32 0.0, %v1025
    %v1027 = vpop.f32.mrb[0].mxu0
    %1028 = vdwg.mxu0
    %1029 = vrot.lane.b32.xlu0 %v495, 96
    %v1030 = vpop.permute.xlu0 %1029
    %v1031 = vsel %vm498, %v495, 0
    %v1033 = vsel %vm498, %v1030, 0
    %1035 = vmatprep.subr.mxu0 0.0
    %1036 = vmatpush1.xpose.msra.mxu0 %v1033
    %1037 = vmatprep.subr.mxu0 0.0
    %1038 = vmatpush1.xpose.msra.mxu0 0.0
    %1039 = vmatprep.subr.mxu0 0.0
    %1040 = vmatpush1.xpose.msra.mxu0 0.0
    %1041 = vmatprep.subr.mxu0 0.0
    %1042 = vmatpush1.xpose.msra.mxu0 0.0
    %1043 = vmatprep.subr.mxu0 0.0
    %1044 = vmatpush1.xpose.msra.mxu0 0.0
    %1045 = vmatprep.subr.mxu0 0.0
    %1046 = vmatpush1.xpose.msra.mxu0 0.0
    %1047 = vmatprep.subr.mxu0 0.0
    %1048 = vmatpush1.xpose.msra.mxu0 0.0
    %1049 = vmatprep.subr.mxu0 0.0
    %1050 = vmatpush1.xpose.msra.mxu0 0.0
    %1051 = vmatprep.subr.mxu0 0.0
    %1052 = vmatpush1.xpose.msra.mxu0 0.0
    %1053 = vmatprep.subr.mxu0 0.0
    %1054 = vmatpush1.xpose.msra.mxu0 0.0
    %1055 = vmatprep.subr.mxu0 0.0
    %1056 = vmatpush1.xpose.msra.mxu0 0.0
    %1057 = vmatprep.subr.mxu0 0.0
    %1058 = vmatpush1.xpose.msra.mxu0 0.0
    %1059 = vmatprep.subr.mxu0 0.0
    %1060 = vmatpush1.xpose.msra.mxu0 0.0
    %1061 = vmatprep.subr.mxu0 0.0
    %1062 = vmatpush1.xpose.msra.mxu0 0.0
    %1063 = vmatprep.subr.mxu0 0.0
    %1064 = vmatpush1.xpose.msra.mxu0 0.0
    %1065 = vmatprep.subr.mxu0 0.0
    %1066 = vmatpush1.xpose.msra.mxu0 0.0
    %1067 = vmatprep.subr.mxu0 0.0
    %1068 = vmatpush1.xpose.msra.mxu0 0.0
    %1069 = vmatprep.subr.mxu0 0.0
    %1070 = vmatpush1.xpose.msra.mxu0 0.0
    %1071 = vmatprep.subr.mxu0 0.0
    %1072 = vmatpush1.xpose.msra.mxu0 0.0
    %1073 = vmatprep.subr.mxu0 0.0
    %1074 = vmatpush1.xpose.msra.mxu0 0.0
    %1075 = vmatprep.subr.mxu0 0.0
    %1076 = vmatpush1.xpose.msra.mxu0 0.0
    %1077 = vmatprep.subr.mxu0 0.0
    %1078 = vmatpush1.xpose.msra.mxu0 0.0
    %1079 = vmatprep.subr.mxu0 0.0
    %1080 = vmatpush1.xpose.msra.mxu0 0.0
    %1081 = vmatprep.subr.mxu0 0.0
    %1082 = vmatpush1.xpose.msra.mxu0 0.0
    %1083 = vmatprep.subr.mxu0 0.0
    %1084 = vmatpush1.xpose.msra.mxu0 0.0
    %1085 = vmatprep.subr.mxu0 0.0
    %1086 = vmatpush1.xpose.msra.mxu0 0.0
    %1087 = vmatprep.subr.mxu0 0.0
    %1088 = vmatpush1.xpose.msra.mxu0 0.0
    %1089 = vmatprep.subr.mxu0 0.0
    %1090 = vmatpush1.xpose.msra.mxu0 0.0
    %1091 = vmatprep.subr.mxu0 0.0
    %1092 = vmatpush1.xpose.msra.mxu0 0.0
    %1093 = vmatprep.subr.mxu0 0.0
    %1094 = vmatpush1.xpose.msra.mxu0 0.0
    %1095 = vmatprep.subr.mxu0 0.0
    %1096 = vmatpush1.xpose.msra.mxu0 0.0
    %1097 = vmatprep.subr.mxu0 0.0
    %1098 = vmatpush1.xpose.msra.mxu0 0.0
    %1099 = vmatprep.mubr.f32.mxu0 0.0
    %1100 = vmatmul.mubr.f32.gmra.mrb[0].mxu0 %v1031
    %v1101 = vpop.f32.mrb[0].mxu0
    %v1102 = vadd.f32 0.0, %v1101
    %v1103 = vpop.f32.mrb[0].mxu0
    %1104 = vdwg.mxu0
    %v1105 = vmul.f32 %v570, 0.35355338
    %v1106 = vmul.f32 %v646, 0.35355338
    %v1107 = vmul.f32 %v722, 0.35355338
    %v1108 = vmul.f32 %v798, 0.35355338
    %v1109 = vmul.f32 %v874, 0.35355338
    %v1110 = vmul.f32 %v950, 0.35355338
    %v1111 = vmul.f32 %v1026, 0.35355338
    %v1112 = vmul.f32 %v1102, 0.35355338
    %v1113 = vsel %vm498, %v1105, -inf
    %1114 = vmax.xlane.f32.xlu0 %v1113
    %v1115 = vpop.xlane.xlu0 %1114
    %v1116 = vsel %vm498, %v1106, -inf
    %1117 = vmax.xlane.f32.xlu0 %v1116
    %v1118 = vpop.xlane.xlu0 %1117
    %v1119 = vsel %vm498, %v1107, -inf
    %1120 = vmax.xlane.f32.xlu0 %v1119
    %v1121 = vpop.xlane.xlu0 %1120
    %v1122 = vsel %vm498, %v1108, -inf
    %1123 = vmax.xlane.f32.xlu0 %v1122
    %v1124 = vpop.xlane.xlu0 %1123
    %v1125 = vsel %vm498, %v1109, -inf
    %1126 = vmax.xlane.f32.xlu0 %v1125
    %v1127 = vpop.xlane.xlu0 %1126
    %v1128 = vsel %vm498, %v1110, -inf
    %1129 = vmax.xlane.f32.xlu0 %v1128
    %v1130 = vpop.xlane.xlu0 %1129
    %v1131 = vsel %vm498, %v1111, -inf
    %1132 = vmax.xlane.f32.xlu0 %v1131
    %v1133 = vpop.xlane.xlu0 %1132
    %v1134 = vsel %vm498, %v1112, -inf
    %1135 = vmax.xlane.f32.xlu0 %v1134
    %v1136 = vpop.xlane.xlu0 %1135
    %v1137 = vsub.f32 %v1105, %v1115
    %v1138 = vsub.f32 %v1106, %v1118
    %v1139 = vsub.f32 %v1107, %v1121
    %v1140 = vsub.f32 %v1108, %v1124
    %v1141 = vsub.f32 %v1109, %v1127
    %v1142 = vsub.f32 %v1110, %v1130
    %v1143 = vsub.f32 %v1111, %v1133
    %v1144 = vsub.f32 %v1112, %v1136
    %v1145 = vmul.f32 %v1137, 1.442695
    %v1146 = vpow.pop %v1145
    %v1147 = vmul.f32 %v1138, 1.442695
    %v1148 = vpow.pop %v1147
    %v1149 = vmul.f32 %v1139, 1.442695
    %v1150 = vpow.pop %v1149
    %v1151 = vmul.f32 %v1140, 1.442695
    %v1152 = vpow.pop %v1151
    %v1153 = vmul.f32 %v1141, 1.442695
    %v1154 = vpow.pop %v1153
    %v1155 = vmul.f32 %v1142, 1.442695
    %v1156 = vpow.pop %v1155
    %v1157 = vmul.f32 %v1143, 1.442695
    %v1158 = vpow.pop %v1157
    %v1159 = vmul.f32 %v1144, 1.442695
    %v1160 = vpow.pop %v1159
    %v1161 = vsel %vm498, %v1146, 0.0
    %1162 = vadd.xlane.f32.xlu0 %v1161
    %v1163 = vpop.xlane.xlu0 %1162
    %v1164 = vsel %vm498, %v1148, 0.0
    %1165 = vadd.xlane.f32.xlu0 %v1164
    %v1166 = vpop.xlane.xlu0 %1165
    %v1167 = vsel %vm498, %v1150, 0.0
    %1168 = vadd.xlane.f32.xlu0 %v1167
    %v1169 = vpop.xlane.xlu0 %1168
    %v1170 = vsel %vm498, %v1152, 0.0
    %1171 = vadd.xlane.f32.xlu0 %v1170
    %v1172 = vpop.xlane.xlu0 %1171
    %v1173 = vsel %vm498, %v1154, 0.0
    %1174 = vadd.xlane.f32.xlu0 %v1173
    %v1175 = vpop.xlane.xlu0 %1174
    %v1176 = vsel %vm498, %v1156, 0.0
    %1177 = vadd.xlane.f32.xlu0 %v1176
    %v1178 = vpop.xlane.xlu0 %1177
    %v1179 = vsel %vm498, %v1158, 0.0
    %1180 = vadd.xlane.f32.xlu0 %v1179
    %v1181 = vpop.xlane.xlu0 %1180
    %v1182 = vsel %vm498, %v1160, 0.0
    %1183 = vadd.xlane.f32.xlu0 %v1182
    %v1184 = vpop.xlane.xlu0 %1183
    %v1185 = vrcp.pop %v1163
    %v1186 = vrcp.pop %v1166
    %v1187 = vrcp.pop %v1169
    %v1188 = vrcp.pop %v1172
    %v1189 = vrcp.pop %v1175
    %v1190 = vrcp.pop %v1178
    %v1191 = vrcp.pop %v1181
    %v1192 = vrcp.pop %v1184
    %v1193 = vmul.f32 %v1146, %v1185
    %v1194 = vmul.f32 %v1148, %v1186
    %v1195 = vmul.f32 %v1150, %v1187
    %v1196 = vmul.f32 %v1152, %v1188
    %v1197 = vmul.f32 %v1154, %v1189
    %v1198 = vmul.f32 %v1156, %v1190
    %v1199 = vmul.f32 %v1158, %v1191
    %v1200 = vmul.f32 %v1160, %v1192
    %1201 = vrot.lane.b32.xlu0 %v474, 64
    %v1202 = vpop.permute.xlu0 %1201
    %v1205 = vsel %vm498, %v1193, 0
    %1207 = vmatprep.subr.mxu0 0.0
    %1208 = vmatpush1.msra.mxu0 %v1202
    %1209 = vmatprep.subr.mxu0 0.0
    %1210 = vmatpush1.msra.mxu0 0.0
    %1211 = vmatprep.subr.mxu0 0.0
    %1212 = vmatpush1.msra.mxu0 0.0
    %1213 = vmatprep.subr.mxu0 0.0
    %1214 = vmatpush1.msra.mxu0 0.0
    %1215 = vmatprep.subr.mxu0 0.0
    %1216 = vmatpush1.msra.mxu0 0.0
    %1217 = vmatprep.subr.mxu0 0.0
    %1218 = vmatpush1.msra.mxu0 0.0
    %1219 = vmatprep.subr.mxu0 0.0
    %1220 = vmatpush1.msra.mxu0 0.0
    %1221 = vmatprep.subr.mxu0 0.0
    %1222 = vmatpush1.msra.mxu0 0.0
    %1223 = vmatprep.subr.mxu0 0.0
    %1224 = vmatpush1.msra.mxu0 0.0
    %1225 = vmatprep.subr.mxu0 0.0
    %1226 = vmatpush1.msra.mxu0 0.0
    %1227 = vmatprep.subr.mxu0 0.0
    %1228 = vmatpush1.msra.mxu0 0.0
    %1229 = vmatprep.subr.mxu0 0.0
    %1230 = vmatpush1.msra.mxu0 0.0
    %1231 = vmatprep.subr.mxu0 0.0
    %1232 = vmatpush1.msra.mxu0 0.0
    %1233 = vmatprep.subr.mxu0 0.0
    %1234 = vmatpush1.msra.mxu0 0.0
    %1235 = vmatprep.subr.mxu0 0.0
    %1236 = vmatpush1.msra.mxu0 0.0
    %1237 = vmatprep.subr.mxu0 0.0
    %1238 = vmatpush1.msra.mxu0 0.0
    %1239 = vmatprep.subr.mxu0 0.0
    %1240 = vmatpush1.msra.mxu0 0.0
    %1241 = vmatprep.subr.mxu0 0.0
    %1242 = vmatpush1.msra.mxu0 0.0
    %1243 = vmatprep.subr.mxu0 0.0
    %1244 = vmatpush1.msra.mxu0 0.0
    %1245 = vmatprep.subr.mxu0 0.0
    %1246 = vmatpush1.msra.mxu0 0.0
    %1247 = vmatprep.subr.mxu0 0.0
    %1248 = vmatpush1.msra.mxu0 0.0
    %1249 = vmatprep.subr.mxu0 0.0
    %1250 = vmatpush1.msra.mxu0 0.0
    %1251 = vmatprep.subr.mxu0 0.0
    %1252 = vmatpush1.msra.mxu0 0.0
    %1253 = vmatprep.subr.mxu0 0.0
    %1254 = vmatpush1.msra.mxu0 0.0
    %1255 = vmatprep.subr.mxu0 0.0
    %1256 = vmatpush1.msra.mxu0 0.0
    %1257 = vmatprep.subr.mxu0 0.0
    %1258 = vmatpush1.msra.mxu0 0.0
    %1259 = vmatprep.subr.mxu0 0.0
    %1260 = vmatpush1.msra.mxu0 0.0
    %1261 = vmatprep.subr.mxu0 0.0
    %1262 = vmatpush1.msra.mxu0 0.0
    %1263 = vmatprep.subr.mxu0 0.0
    %1264 = vmatpush1.msra.mxu0 0.0
    %1265 = vmatprep.subr.mxu0 0.0
    %1266 = vmatpush1.msra.mxu0 0.0
    %1267 = vmatprep.subr.mxu0 0.0
    %1268 = vmatpush1.msra.mxu0 0.0
    %1269 = vmatprep.subr.mxu0 0.0
    %1270 = vmatpush1.msra.mxu0 0.0
    %1271 = vmatprep.mubr.f32.mxu0 0.0
    %1272 = vmatmul.mubr.f32.gmra.mrb[0].mxu0 %v1205
    %v1273 = vpop.f32.mrb[0].mxu0
    %v1274 = vadd.f32 0.0, %v1273
    %v1275 = vpop.f32.mrb[0].mxu0
    %1276 = vdwg.mxu0
    %1277 = vrot.lane.b32.xlu0 %v479, 64
    %v1278 = vpop.permute.xlu0 %1277
    %v1281 = vsel %vm498, %v1194, 0
    %1283 = vmatprep.subr.mxu0 0.0
    %1284 = vmatpush1.msra.mxu0 %v1278
    %1285 = vmatprep.subr.mxu0 0.0
    %1286 = vmatpush1.msra.mxu0 0.0
    %1287 = vmatprep.subr.mxu0 0.0
    %1288 = vmatpush1.msra.mxu0 0.0
    %1289 = vmatprep.subr.mxu0 0.0
    %1290 = vmatpush1.msra.mxu0 0.0
    %1291 = vmatprep.subr.mxu0 0.0
    %1292 = vmatpush1.msra.mxu0 0.0
    %1293 = vmatprep.subr.mxu0 0.0
    %1294 = vmatpush1.msra.mxu0 0.0
    %1295 = vmatprep.subr.mxu0 0.0
    %1296 = vmatpush1.msra.mxu0 0.0
    %1297 = vmatprep.subr.mxu0 0.0
    %1298 = vmatpush1.msra.mxu0 0.0
    %1299 = vmatprep.subr.mxu0 0.0
    %1300 = vmatpush1.msra.mxu0 0.0
    %1301 = vmatprep.subr.mxu0 0.0
    %1302 = vmatpush1.msra.mxu0 0.0
    %1303 = vmatprep.subr.mxu0 0.0
    %1304 = vmatpush1.msra.mxu0 0.0
    %1305 = vmatprep.subr.mxu0 0.0
    %1306 = vmatpush1.msra.mxu0 0.0
    %1307 = vmatprep.subr.mxu0 0.0
    %1308 = vmatpush1.msra.mxu0 0.0
    %1309 = vmatprep.subr.mxu0 0.0
    %1310 = vmatpush1.msra.mxu0 0.0
    %1311 = vmatprep.subr.mxu0 0.0
    %1312 = vmatpush1.msra.mxu0 0.0
    %1313 = vmatprep.subr.mxu0 0.0
    %1314 = vmatpush1.msra.mxu0 0.0
    %1315 = vmatprep.subr.mxu0 0.0
    %1316 = vmatpush1.msra.mxu0 0.0
    %1317 = vmatprep.subr.mxu0 0.0
    %1318 = vmatpush1.msra.mxu0 0.0
    %1319 = vmatprep.subr.mxu0 0.0
    %1320 = vmatpush1.msra.mxu0 0.0
    %1321 = vmatprep.subr.mxu0 0.0
    %1322 = vmatpush1.msra.mxu0 0.0
    %1323 = vmatprep.subr.mxu0 0.0
    %1324 = vmatpush1.msra.mxu0 0.0
    %1325 = vmatprep.subr.mxu0 0.0
    %1326 = vmatpush1.msra.mxu0 0.0
    %1327 = vmatprep.subr.mxu0 0.0
    %1328 = vmatpush1.msra.mxu0 0.0
    %1329 = vmatprep.subr.mxu0 0.0
    %1330 = vmatpush1.msra.mxu0 0.0
    %1331 = vmatprep.subr.mxu0 0.0
    %1332 = vmatpush1.msra.mxu0 0.0
    %1333 = vmatprep.subr.mxu0 0.0
    %1334 = vmatpush1.msra.mxu0 0.0
    %1335 = vmatprep.subr.mxu0 0.0
    %1336 = vmatpush1.msra.mxu0 0.0
    %1337 = vmatprep.subr.mxu0 0.0
    %1338 = vmatpush1.msra.mxu0 0.0
    %1339 = vmatprep.subr.mxu0 0.0
    %1340 = vmatpush1.msra.mxu0 0.0
    %1341 = vmatprep.subr.mxu0 0.0
    %1342 = vmatpush1.msra.mxu0 0.0
    %1343 = vmatprep.subr.mxu0 0.0
    %1344 = vmatpush1.msra.mxu0 0.0
    %1345 = vmatprep.subr.mxu0 0.0
    %1346 = vmatpush1.msra.mxu0 0.0
    %1347 = vmatprep.mubr.f32.mxu0 0.0
    %1348 = vmatmul.mubr.f32.gmra.mrb[0].mxu0 %v1281
    %v1349 = vpop.f32.mrb[0].mxu0
    %v1350 = vadd.f32 0.0, %v1349
    %v1351 = vpop.f32.mrb[0].mxu0
    %1352 = vdwg.mxu0
    %1353 = vrot.lane.b32.xlu0 %v485, 64
    %v1354 = vpop.permute.xlu0 %1353
    %v1357 = vsel %vm498, %v1195, 0
    %1359 = vmatprep.subr.mxu0 0.0
    %1360 = vmatpush1.msra.mxu0 %v1354
    %1361 = vmatprep.subr.mxu0 0.0
    %1362 = vmatpush1.msra.mxu0 0.0
    %1363 = vmatprep.subr.mxu0 0.0
    %1364 = vmatpush1.msra.mxu0 0.0
    %1365 = vmatprep.subr.mxu0 0.0
    %1366 = vmatpush1.msra.mxu0 0.0
    %1367 = vmatprep.subr.mxu0 0.0
    %1368 = vmatpush1.msra.mxu0 0.0
    %1369 = vmatprep.subr.mxu0 0.0
    %1370 = vmatpush1.msra.mxu0 0.0
    %1371 = vmatprep.subr.mxu0 0.0
    %1372 = vmatpush1.msra.mxu0 0.0
    %1373 = vmatprep.subr.mxu0 0.0
    %1374 = vmatpush1.msra.mxu0 0.0
    %1375 = vmatprep.subr.mxu0 0.0
    %1376 = vmatpush1.msra.mxu0 0.0
    %1377 = vmatprep.subr.mxu0 0.0
    %1378 = vmatpush1.msra.mxu0 0.0
    %1379 = vmatprep.subr.mxu0 0.0
    %1380 = vmatpush1.msra.mxu0 0.0
    %1381 = vmatprep.subr.mxu0 0.0
    %1382 = vmatpush1.msra.mxu0 0.0
    %1383 = vmatprep.subr.mxu0 0.0
    %1384 = vmatpush1.msra.mxu0 0.0
    %1385 = vmatprep.subr.mxu0 0.0
    %1386 = vmatpush1.msra.mxu0 0.0
    %1387 = vmatprep.subr.mxu0 0.0
    %1388 = vmatpush1.msra.mxu0 0.0
    %1389 = vmatprep.subr.mxu0 0.0
    %1390 = vmatpush1.msra.mxu0 0.0
    %1391 = vmatprep.subr.mxu0 0.0
    %1392 = vmatpush1.msra.mxu0 0.0
    %1393 = vmatprep.subr.mxu0 0.0
    %1394 = vmatpush1.msra.mxu0 0.0
    %1395 = vmatprep.subr.mxu0 0.0
    %1396 = vmatpush1.msra.mxu0 0.0
    %1397 = vmatprep.subr.mxu0 0.0
    %1398 = vmatpush1.msra.mxu0 0.0
    %1399 = vmatprep.subr.mxu0 0.0
    %1400 = vmatpush1.msra.mxu0 0.0
    %1401 = vmatprep.subr.mxu0 0.0
    %1402 = vmatpush1.msra.mxu0 0.0
    %1403 = vmatprep.subr.mxu0 0.0
    %1404 = vmatpush1.msra.mxu0 0.0
    %1405 = vmatprep.subr.mxu0 0.0
    %1406 = vmatpush1.msra.mxu0 0.0
    %1407 = vmatprep.subr.mxu0 0.0
    %1408 = vmatpush1.msra.mxu0 0.0
    %1409 = vmatprep.subr.mxu0 0.0
    %1410 = vmatpush1.msra.mxu0 0.0
    %1411 = vmatprep.subr.mxu0 0.0
    %1412 = vmatpush1.msra.mxu0 0.0
    %1413 = vmatprep.subr.mxu0 0.0
    %1414 = vmatpush1.msra.mxu0 0.0
    %1415 = vmatprep.subr.mxu0 0.0
    %1416 = vmatpush1.msra.mxu0 0.0
    %1417 = vmatprep.subr.mxu0 0.0
    %1418 = vmatpush1.msra.mxu0 0.0
    %1419 = vmatprep.subr.mxu0 0.0
    %1420 = vmatpush1.msra.mxu0 0.0
    %1421 = vmatprep.subr.mxu0 0.0
    %1422 = vmatpush1.msra.mxu0 0.0
    %1423 = vmatprep.mubr.f32.mxu0 0.0
    %1424 = vmatmul.mubr.f32.gmra.mrb[0].mxu0 %v1357
    %v1425 = vpop.f32.mrb[0].mxu0
    %v1426 = vadd.f32 0.0, %v1425
    %v1427 = vpop.f32.mrb[0].mxu0
    %1428 = vdwg.mxu0
    %1429 = vrot.lane.b32.xlu0 %v487, 64
    %v1430 = vpop.permute.xlu0 %1429
    %v1433 = vsel %vm498, %v1196, 0
    %1435 = vmatprep.subr.mxu0 0.0
    %1436 = vmatpush1.msra.mxu0 %v1430
    %1437 = vmatprep.subr.mxu0 0.0
    %1438 = vmatpush1.msra.mxu0 0.0
    %1439 = vmatprep.subr.mxu0 0.0
    %1440 = vmatpush1.msra.mxu0 0.0
    %1441 = vmatprep.subr.mxu0 0.0
    %1442 = vmatpush1.msra.mxu0 0.0
    %1443 = vmatprep.subr.mxu0 0.0
    %1444 = vmatpush1.msra.mxu0 0.0
    %1445 = vmatprep.subr.mxu0 0.0
    %1446 = vmatpush1.msra.mxu0 0.0
    %1447 = vmatprep.subr.mxu0 0.0
    %1448 = vmatpush1.msra.mxu0 0.0
    %1449 = vmatprep.subr.mxu0 0.0
    %1450 = vmatpush1.msra.mxu0 0.0
    %1451 = vmatprep.subr.mxu0 0.0
    %1452 = vmatpush1.msra.mxu0 0.0
    %1453 = vmatprep.subr.mxu0 0.0
    %1454 = vmatpush1.msra.mxu0 0.0
    %1455 = vmatprep.subr.mxu0 0.0
    %1456 = vmatpush1.msra.mxu0 0.0
    %1457 = vmatprep.subr.mxu0 0.0
    %1458 = vmatpush1.msra.mxu0 0.0
    %1459 = vmatprep.subr.mxu0 0.0
    %1460 = vmatpush1.msra.mxu0 0.0
    %1461 = vmatprep.subr.mxu0 0.0
    %1462 = vmatpush1.msra.mxu0 0.0
    %1463 = vmatprep.subr.mxu0 0.0
    %1464 = vmatpush1.msra.mxu0 0.0
    %1465 = vmatprep.subr.mxu0 0.0
    %1466 = vmatpush1.msra.mxu0 0.0
    %1467 = vmatprep.subr.mxu0 0.0
    %1468 = vmatpush1.msra.mxu0 0.0
    %1469 = vmatprep.subr.mxu0 0.0
    %1470 = vmatpush1.msra.mxu0 0.0
    %1471 = vmatprep.subr.mxu0 0.0
    %1472 = vmatpush1.msra.mxu0 0.0
    %1473 = vmatprep.subr.mxu0 0.0
    %1474 = vmatpush1.msra.mxu0 0.0
    %1475 = vmatprep.subr.mxu0 0.0
    %1476 = vmatpush1.msra.mxu0 0.0
    %1477 = vmatprep.subr.mxu0 0.0
    %1478 = vmatpush1.msra.mxu0 0.0
    %1479 = vmatprep.subr.mxu0 0.0
    %1480 = vmatpush1.msra.mxu0 0.0
    %1481 = vmatprep.subr.mxu0 0.0
    %1482 = vmatpush1.msra.mxu0 0.0
    %1483 = vmatprep.subr.mxu0 0.0
    %1484 = vmatpush1.msra.mxu0 0.0
    %1485 = vmatprep.subr.mxu0 0.0
    %1486 = vmatpush1.msra.mxu0 0.0
    %1487 = vmatprep.subr.mxu0 0.0
    %1488 = vmatpush1.msra.mxu0 0.0
    %1489 = vmatprep.subr.mxu0 0.0
    %1490 = vmatpush1.msra.mxu0 0.0
    %1491 = vmatprep.subr.mxu0 0.0
    %1492 = vmatpush1.msra.mxu0 0.0
    %1493 = vmatprep.subr.mxu0 0.0
    %1494 = vmatpush1.msra.mxu0 0.0
    %1495 = vmatprep.subr.mxu0 0.0
    %1496 = vmatpush1.msra.mxu0 0.0
    %1497 = vmatprep.subr.mxu0 0.0
    %1498 = vmatpush1.msra.mxu0 0.0
    %1499 = vmatprep.mubr.f32.mxu0 0.0
    %1500 = vmatmul.mubr.f32.gmra.mrb[0].mxu0 %v1433
    %v1501 = vpop.f32.mrb[0].mxu0
    %v1502 = vadd.f32 0.0, %v1501
    %v1503 = vpop.f32.mrb[0].mxu0
    %1504 = vdwg.mxu0
    %1505 = vrot.lane.b32.xlu0 %v489, 64
    %v1506 = vpop.permute.xlu0 %1505
    %v1509 = vsel %vm498, %v1197, 0
    %1511 = vmatprep.subr.mxu0 0.0
    %1512 = vmatpush1.msra.mxu0 %v1506
    %1513 = vmatprep.subr.mxu0 0.0
    %1514 = vmatpush1.msra.mxu0 0.0
    %1515 = vmatprep.subr.mxu0 0.0
    %1516 = vmatpush1.msra.mxu0 0.0
    %1517 = vmatprep.subr.mxu0 0.0
    %1518 = vmatpush1.msra.mxu0 0.0
    %1519 = vmatprep.subr.mxu0 0.0
    %1520 = vmatpush1.msra.mxu0 0.0
    %1521 = vmatprep.subr.mxu0 0.0
    %1522 = vmatpush1.msra.mxu0 0.0
    %1523 = vmatprep.subr.mxu0 0.0
    %1524 = vmatpush1.msra.mxu0 0.0
    %1525 = vmatprep.subr.mxu0 0.0
    %1526 = vmatpush1.msra.mxu0 0.0
    %1527 = vmatprep.subr.mxu0 0.0
    %1528 = vmatpush1.msra.mxu0 0.0
    %1529 = vmatprep.subr.mxu0 0.0
    %1530 = vmatpush1.msra.mxu0 0.0
    %1531 = vmatprep.subr.mxu0 0.0
    %1532 = vmatpush1.msra.mxu0 0.0
    %1533 = vmatprep.subr.mxu0 0.0
    %1534 = vmatpush1.msra.mxu0 0.0
    %1535 = vmatprep.subr.mxu0 0.0
    %1536 = vmatpush1.msra.mxu0 0.0
    %1537 = vmatprep.subr.mxu0 0.0
    %1538 = vmatpush1.msra.mxu0 0.0
    %1539 = vmatprep.subr.mxu0 0.0
    %1540 = vmatpush1.msra.mxu0 0.0
    %1541 = vmatprep.subr.mxu0 0.0
    %1542 = vmatpush1.msra.mxu0 0.0
    %1543 = vmatprep.subr.mxu0 0.0
    %1544 = vmatpush1.msra.mxu0 0.0
    %1545 = vmatprep.subr.mxu0 0.0
    %1546 = vmatpush1.msra.mxu0 0.0
    %1547 = vmatprep.subr.mxu0 0.0
    %1548 = vmatpush1.msra.mxu0 0.0
    %1549 = vmatprep.subr.mxu0 0.0
    %1550 = vmatpush1.msra.mxu0 0.0
    %1551 = vmatprep.subr.mxu0 0.0
    %1552 = vmatpush1.msra.mxu0 0.0
    %1553 = vmatprep.subr.mxu0 0.0
    %1554 = vmatpush1.msra.mxu0 0.0
    %1555 = vmatprep.subr.mxu0 0.0
    %1556 = vmatpush1.msra.mxu0 0.0
    %1557 = vmatprep.subr.mxu0 0.0
    %1558 = vmatpush1.msra.mxu0 0.0
    %1559 = vmatprep.subr.mxu0 0.0
    %1560 = vmatpush1.msra.mxu0 0.0
    %1561 = vmatprep.subr.mxu0 0.0
    %1562 = vmatpush1.msra.mxu0 0.0
    %1563 = vmatprep.subr.mxu0 0.0
    %1564 = vmatpush1.msra.mxu0 0.0
    %1565 = vmatprep.subr.mxu0 0.0
    %1566 = vmatpush1.msra.mxu0 0.0
    %1567 = vmatprep.subr.mxu0 0.0
    %1568 = vmatpush1.msra.mxu0 0.0
    %1569 = vmatprep.subr.mxu0 0.0
    %1570 = vmatpush1.msra.mxu0 0.0
    %1571 = vmatprep.subr.mxu0 0.0
    %1572 = vmatpush1.msra.mxu0 0.0
    %1573 = vmatprep.subr.mxu0 0.0
    %1574 = vmatpush1.msra.mxu0 0.0
    %1575 = vmatprep.mubr.f32.mxu0 0.0
    %1576 = vmatmul.mubr.f32.gmra.mrb[0].mxu0 %v1509
    %v1577 = vpop.f32.mrb[0].mxu0
    %v1578 = vadd.f32 0.0, %v1577
    %v1579 = vpop.f32.mrb[0].mxu0
    %1580 = vdwg.mxu0
    %1581 = vrot.lane.b32.xlu0 %v491, 64
    %v1582 = vpop.permute.xlu0 %1581
    %v1585 = vsel %vm498, %v1198, 0
    %1587 = vmatprep.subr.mxu0 0.0
    %1588 = vmatpush1.msra.mxu0 %v1582
    %1589 = vmatprep.subr.mxu0 0.0
    %1590 = vmatpush1.msra.mxu0 0.0
    %1591 = vmatprep.subr.mxu0 0.0
    %1592 = vmatpush1.msra.mxu0 0.0
    %1593 = vmatprep.subr.mxu0 0.0
    %1594 = vmatpush1.msra.mxu0 0.0
    %1595 = vmatprep.subr.mxu0 0.0
    %1596 = vmatpush1.msra.mxu0 0.0
    %1597 = vmatprep.subr.mxu0 0.0
    %1598 = vmatpush1.msra.mxu0 0.0
    %1599 = vmatprep.subr.mxu0 0.0
    %1600 = vmatpush1.msra.mxu0 0.0
    %1601 = vmatprep.subr.mxu0 0.0
    %1602 = vmatpush1.msra.mxu0 0.0
    %1603 = vmatprep.subr.mxu0 0.0
    %1604 = vmatpush1.msra.mxu0 0.0
    %1605 = vmatprep.subr.mxu0 0.0
    %1606 = vmatpush1.msra.mxu0 0.0
    %1607 = vmatprep.subr.mxu0 0.0
    %1608 = vmatpush1.msra.mxu0 0.0
    %1609 = vmatprep.subr.mxu0 0.0
    %1610 = vmatpush1.msra.mxu0 0.0
    %1611 = vmatprep.subr.mxu0 0.0
    %1612 = vmatpush1.msra.mxu0 0.0
    %1613 = vmatprep.subr.mxu0 0.0
    %1614 = vmatpush1.msra.mxu0 0.0
    %1615 = vmatprep.subr.mxu0 0.0
    %1616 = vmatpush1.msra.mxu0 0.0
    %1617 = vmatprep.subr.mxu0 0.0
    %1618 = vmatpush1.msra.mxu0 0.0
    %1619 = vmatprep.subr.mxu0 0.0
    %1620 = vmatpush1.msra.mxu0 0.0
    %1621 = vmatprep.subr.mxu0 0.0
    %1622 = vmatpush1.msra.mxu0 0.0
    %1623 = vmatprep.subr.mxu0 0.0
    %1624 = vmatpush1.msra.mxu0 0.0
    %1625 = vmatprep.subr.mxu0 0.0
    %1626 = vmatpush1.msra.mxu0 0.0
    %1627 = vmatprep.subr.mxu0 0.0
    %1628 = vmatpush1.msra.mxu0 0.0
    %1629 = vmatprep.subr.mxu0 0.0
    %1630 = vmatpush1.msra.mxu0 0.0
    %1631 = vmatprep.subr.mxu0 0.0
    %1632 = vmatpush1.msra.mxu0 0.0
    %1633 = vmatprep.subr.mxu0 0.0
    %1634 = vmatpush1.msra.mxu0 0.0
    %1635 = vmatprep.subr.mxu0 0.0
    %1636 = vmatpush1.msra.mxu0 0.0
    %1637 = vmatprep.subr.mxu0 0.0
    %1638 = vmatpush1.msra.mxu0 0.0
    %1639 = vmatprep.subr.mxu0 0.0
    %1640 = vmatpush1.msra.mxu0 0.0
    %1641 = vmatprep.subr.mxu0 0.0
    %1642 = vmatpush1.msra.mxu0 0.0
    %1643 = vmatprep.subr.mxu0 0.0
    %1644 = vmatpush1.msra.mxu0 0.0
    %1645 = vmatprep.subr.mxu0 0.0
    %1646 = vmatpush1.msra.mxu0 0.0
    %1647 = vmatprep.subr.mxu0 0.0
    %1648 = vmatpush1.msra.mxu0 0.0
    %1649 = vmatprep.subr.mxu0 0.0
    %1650 = vmatpush1.msra.mxu0 0.0
    %1651 = vmatprep.mubr.f32.mxu0 0.0
    %1652 = vmatmul.mubr.f32.gmra.mrb[0].mxu0 %v1585
    %v1653 = vpop.f32.mrb[0].mxu0
    %v1654 = vadd.f32 0.0, %v1653
    %v1655 = vpop.f32.mrb[0].mxu0
    %1656 = vdwg.mxu0
    %1657 = vrot.lane.b32.xlu0 %v493, 64
    %v1658 = vpop.permute.xlu0 %1657
    %v1661 = vsel %vm498, %v1199, 0
    %1663 = vmatprep.subr.mxu0 0.0
    %1664 = vmatpush1.msra.mxu0 %v1658
    %1665 = vmatprep.subr.mxu0 0.0
    %1666 = vmatpush1.msra.mxu0 0.0
    %1667 = vmatprep.subr.mxu0 0.0
    %1668 = vmatpush1.msra.mxu0 0.0
    %1669 = vmatprep.subr.mxu0 0.0
    %1670 = vmatpush1.msra.mxu0 0.0
    %1671 = vmatprep.subr.mxu0 0.0
    %1672 = vmatpush1.msra.mxu0 0.0
    %1673 = vmatprep.subr.mxu0 0.0
    %1674 = vmatpush1.msra.mxu0 0.0
    %1675 = vmatprep.subr.mxu0 0.0
    %1676 = vmatpush1.msra.mxu0 0.0
    %1677 = vmatprep.subr.mxu0 0.0
    %1678 = vmatpush1.msra.mxu0 0.0
    %1679 = vmatprep.subr.mxu0 0.0
    %1680 = vmatpush1.msra.mxu0 0.0
    %1681 = vmatprep.subr.mxu0 0.0
    %1682 = vmatpush1.msra.mxu0 0.0
    %1683 = vmatprep.subr.mxu0 0.0
    %1684 = vmatpush1.msra.mxu0 0.0
    %1685 = vmatprep.subr.mxu0 0.0
    %1686 = vmatpush1.msra.mxu0 0.0
    %1687 = vmatprep.subr.mxu0 0.0
    %1688 = vmatpush1.msra.mxu0 0.0
    %1689 = vmatprep.subr.mxu0 0.0
    %1690 = vmatpush1.msra.mxu0 0.0
    %1691 = vmatprep.subr.mxu0 0.0
    %1692 = vmatpush1.msra.mxu0 0.0
    %1693 = vmatprep.subr.mxu0 0.0
    %1694 = vmatpush1.msra.mxu0 0.0
    %1695 = vmatprep.subr.mxu0 0.0
    %1696 = vmatpush1.msra.mxu0 0.0
    %1697 = vmatprep.subr.mxu0 0.0
    %1698 = vmatpush1.msra.mxu0 0.0
    %1699 = vmatprep.subr.mxu0 0.0
    %1700 = vmatpush1.msra.mxu0 0.0
    %1701 = vmatprep.subr.mxu0 0.0
    %1702 = vmatpush1.msra.mxu0 0.0
    %1703 = vmatprep.subr.mxu0 0.0
    %1704 = vmatpush1.msra.mxu0 0.0
    %1705 = vmatprep.subr.mxu0 0.0
    %1706 = vmatpush1.msra.mxu0 0.0
    %1707 = vmatprep.subr.mxu0 0.0
    %1708 = vmatpush1.msra.mxu0 0.0
    %1709 = vmatprep.subr.mxu0 0.0
    %1710 = vmatpush1.msra.mxu0 0.0
    %1711 = vmatprep.subr.mxu0 0.0
    %1712 = vmatpush1.msra.mxu0 0.0
    %1713 = vmatprep.subr.mxu0 0.0
    %1714 = vmatpush1.msra.mxu0 0.0
    %1715 = vmatprep.subr.mxu0 0.0
    %1716 = vmatpush1.msra.mxu0 0.0
    %1717 = vmatprep.subr.mxu0 0.0
    %1718 = vmatpush1.msra.mxu0 0.0
    %1719 = vmatprep.subr.mxu0 0.0
    %1720 = vmatpush1.msra.mxu0 0.0
    %1721 = vmatprep.subr.mxu0 0.0
    %1722 = vmatpush1.msra.mxu0 0.0
    %1723 = vmatprep.subr.mxu0 0.0
    %1724 = vmatpush1.msra.mxu0 0.0
    %1725 = vmatprep.subr.mxu0 0.0
    %1726 = vmatpush1.msra.mxu0 0.0
    %1727 = vmatprep.mubr.f32.mxu0 0.0
    %1728 = vmatmul.mubr.f32.gmra.mrb[0].mxu0 %v1661
    %v1729 = vpop.f32.mrb[0].mxu0
    %v1730 = vadd.f32 0.0, %v1729
    %v1731 = vpop.f32.mrb[0].mxu0
    %1732 = vdwg.mxu0
    %1733 = vrot.lane.b32.xlu0 %v495, 64
    %v1734 = vpop.permute.xlu0 %1733
    %v1737 = vsel %vm498, %v1200, 0
    %1739 = vmatprep.subr.mxu0 0.0
    %1740 = vmatpush1.msra.mxu0 %v1734
    %1741 = vmatprep.subr.mxu0 0.0
    %1742 = vmatpush1.msra.mxu0 0.0
    %1743 = vmatprep.subr.mxu0 0.0
    %1744 = vmatpush1.msra.mxu0 0.0
    %1745 = vmatprep.subr.mxu0 0.0
    %1746 = vmatpush1.msra.mxu0 0.0
    %1747 = vmatprep.subr.mxu0 0.0
    %1748 = vmatpush1.msra.mxu0 0.0
    %1749 = vmatprep.subr.mxu0 0.0
    %1750 = vmatpush1.msra.mxu0 0.0
    %1751 = vmatprep.subr.mxu0 0.0
    %1752 = vmatpush1.msra.mxu0 0.0
    %1753 = vmatprep.subr.mxu0 0.0
    %1754 = vmatpush1.msra.mxu0 0.0
    %1755 = vmatprep.subr.mxu0 0.0
    %1756 = vmatpush1.msra.mxu0 0.0
    %1757 = vmatprep.subr.mxu0 0.0
    %1758 = vmatpush1.msra.mxu0 0.0
    %1759 = vmatprep.subr.mxu0 0.0
    %1760 = vmatpush1.msra.mxu0 0.0
    %1761 = vmatprep.subr.mxu0 0.0
    %1762 = vmatpush1.msra.mxu0 0.0
    %1763 = vmatprep.subr.mxu0 0.0
    %1764 = vmatpush1.msra.mxu0 0.0
    %1765 = vmatprep.subr.mxu0 0.0
    %1766 = vmatpush1.msra.mxu0 0.0
    %1767 = vmatprep.subr.mxu0 0.0
    %1768 = vmatpush1.msra.mxu0 0.0
    %1769 = vmatprep.subr.mxu0 0.0
    %1770 = vmatpush1.msra.mxu0 0.0
    %1771 = vmatprep.subr.mxu0 0.0
    %1772 = vmatpush1.msra.mxu0 0.0
    %1773 = vmatprep.subr.mxu0 0.0
    %1774 = vmatpush1.msra.mxu0 0.0
    %1775 = vmatprep.subr.mxu0 0.0
    %1776 = vmatpush1.msra.mxu0 0.0
    %1777 = vmatprep.subr.mxu0 0.0
    %1778 = vmatpush1.msra.mxu0 0.0
    %1779 = vmatprep.subr.mxu0 0.0
    %1780 = vmatpush1.msra.mxu0 0.0
    %1781 = vmatprep.subr.mxu0 0.0
    %1782 = vmatpush1.msra.mxu0 0.0
    %1783 = vmatprep.subr.mxu0 0.0
    %1784 = vmatpush1.msra.mxu0 0.0
    %1785 = vmatprep.subr.mxu0 0.0
    %1786 = vmatpush1.msra.mxu0 0.0
    %1787 = vmatprep.subr.mxu0 0.0
    %1788 = vmatpush1.msra.mxu0 0.0
    %1789 = vmatprep.subr.mxu0 0.0
    %1790 = vmatpush1.msra.mxu0 0.0
    %1791 = vmatprep.subr.mxu0 0.0
    %1792 = vmatpush1.msra.mxu0 0.0
    %1793 = vmatprep.subr.mxu0 0.0
    %1794 = vmatpush1.msra.mxu0 0.0
    %1795 = vmatprep.subr.mxu0 0.0
    %1796 = vmatpush1.msra.mxu0 0.0
    %1797 = vmatprep.subr.mxu0 0.0
    %1798 = vmatpush1.msra.mxu0 0.0
    %1799 = vmatprep.subr.mxu0 0.0
    %1800 = vmatpush1.msra.mxu0 0.0
    %1801 = vmatprep.subr.mxu0 0.0
    %1802 = vmatpush1.msra.mxu0 0.0
    %1803 = vmatprep.mubr.f32.mxu0 0.0
    %1804 = vmatmul.mubr.f32.gmra.mrb[0].mxu0 %v1737
    %v1805 = vpop.f32.mrb[0].mxu0
    %v1806 = vadd.f32 0.0, %v1805
    %v1807 = vpop.f32.mrb[0].mxu0
    %1808 = vdwg.mxu0
    %1811 = vrot.lane.b32.xlu0 %v1426, 8
    %v1812 = vpop.permute.xlu0 %1811
    %1813 = vrot.lane.b32.xlu0 %v1502, 8
    %v1814 = vpop.permute.xlu0 %1813
    %1819 = vrot.lane.b32.xlu0 %v1578, 16
    %v1820 = vpop.permute.xlu0 %1819
    %1821 = vrot.lane.b32.xlu0 %v1654, 16
    %v1822 = vpop.permute.xlu0 %1821
    %1827 = vrot.lane.b32.xlu0 %v1730, 24
    %v1828 = vpop.permute.xlu0 %1827
    %1829 = vrot.lane.b32.xlu0 %v1806, 24
    %v1830 = vpop.permute.xlu0 %1829
    %v1833 = vsel %vm498, %v1274, %v1812
    %v1834 = vsel %vm498, %v1350, %v1814
    %vm1835 = vcmask 130048
    %v1836 = vsel %vm1835, %v1833, %v1820
    %v1837 = vsel %vm1835, %v1834, %v1822
    %vm1838 = vcmask 195584
    %v1839 = vsel %vm1838, %v1836, %v1828
    %v1840 = vsel %vm1838, %v1837, %v1830
    %v1841 = vld [vmem:[%s17] sm:$0xff]
    %v1842 = vld [vmem:[%s17 + $0x8] sm:$0xff]
    %v1843 = vld [vmem:[%s17 + $0x10] sm:$0xff]
    %v1844 = vld [vmem:[%s17 + $0x18] sm:$0xff]
    %v1845 = vld [vmem:[#allocation8] sm:$0x1]
    %v1847 = vlaneseq
    %v1848 = vshrl.u32 %v1847, 7
    %v1849 = vsub.s32 0, %v1848
    %v1850 = vrot.slane %v1845, %v1849
    %v1853 = vsel %vm346, %v1839, 0
    %v1856 = vsel %vm346, %v1840, 0
    %1858 = vmatprep.subr.mxu0 0.0
    %1859 = vmatpush1.msra.mxu0 %v1841
    %1860 = vmatprep.subr.mxu0 0.0
    %1861 = vmatpush1.msra.mxu0 %v1842
    %1862 = vmatprep.subr.mxu0 0.0
    %1863 = vmatpush1.msra.mxu0 %v1843
    %1864 = vmatprep.subr.mxu0 0.0
    %1865 = vmatpush1.msra.mxu0 %v1844
    %1866 = vmatprep.subr.mxu0 0.0
    %1867 = vmatpush1.msra.mxu0 0.0
    %1868 = vmatprep.subr.mxu0 0.0
    %1869 = vmatpush1.msra.mxu0 0.0
    %1870 = vmatprep.subr.mxu0 0.0
    %1871 = vmatpush1.msra.mxu0 0.0
    %1872 = vmatprep.subr.mxu0 0.0
    %1873 = vmatpush1.msra.mxu0 0.0
    %1874 = vmatprep.subr.mxu0 0.0
    %1875 = vmatpush1.msra.mxu0 0.0
    %1876 = vmatprep.subr.mxu0 0.0
    %1877 = vmatpush1.msra.mxu0 0.0
    %1878 = vmatprep.subr.mxu0 0.0
    %1879 = vmatpush1.msra.mxu0 0.0
    %1880 = vmatprep.subr.mxu0 0.0
    %1881 = vmatpush1.msra.mxu0 0.0
    %1882 = vmatprep.subr.mxu0 0.0
    %1883 = vmatpush1.msra.mxu0 0.0
    %1884 = vmatprep.subr.mxu0 0.0
    %1885 = vmatpush1.msra.mxu0 0.0
    %1886 = vmatprep.subr.mxu0 0.0
    %1887 = vmatpush1.msra.mxu0 0.0
    %1888 = vmatprep.subr.mxu0 0.0
    %1889 = vmatpush1.msra.mxu0 0.0
    %1890 = vmatprep.subr.mxu0 0.0
    %1891 = vmatpush1.msra.mxu0 0.0
    %1892 = vmatprep.subr.mxu0 0.0
    %1893 = vmatpush1.msra.mxu0 0.0
    %1894 = vmatprep.subr.mxu0 0.0
    %1895 = vmatpush1.msra.mxu0 0.0
    %1896 = vmatprep.subr.mxu0 0.0
    %1897 = vmatpush1.msra.mxu0 0.0
    %1898 = vmatprep.subr.mxu0 0.0
    %1899 = vmatpush1.msra.mxu0 0.0
    %1900 = vmatprep.subr.mxu0 0.0
    %1901 = vmatpush1.msra.mxu0 0.0
    %1902 = vmatprep.subr.mxu0 0.0
    %1903 = vmatpush1.msra.mxu0 0.0
    %1904 = vmatprep.subr.mxu0 0.0
    %1905 = vmatpush1.msra.mxu0 0.0
    %1906 = vmatprep.subr.mxu0 0.0
    %1907 = vmatpush1.msra.mxu0 0.0
    %1908 = vmatprep.subr.mxu0 0.0
    %1909 = vmatpush1.msra.mxu0 0.0
    %1910 = vmatprep.subr.mxu0 0.0
    %1911 = vmatpush1.msra.mxu0 0.0
    %1912 = vmatprep.subr.mxu0 0.0
    %1913 = vmatpush1.msra.mxu0 0.0
    %1914 = vmatprep.subr.mxu0 0.0
    %1915 = vmatpush1.msra.mxu0 0.0
    %1916 = vmatprep.subr.mxu0 0.0
    %1917 = vmatpush1.msra.mxu0 0.0
    %1918 = vmatprep.subr.mxu0 0.0
    %1919 = vmatpush1.msra.mxu0 0.0
    %1920 = vmatprep.subr.mxu0 0.0
    %1921 = vmatpush1.msra.mxu0 0.0
    %1922 = vmatprep.mubr.f32.mxu0 0.0
    %1923 = vmatmul.mubr.f32.gmra.mrb[0].mxu0 %v1853
    %v1924 = vpop.f32.mrb[0].mxu0
    %v1925 = vadd.f32 %v1850, %v1924
    %v1926 = vpop.f32.mrb[0].mxu0
    %1927 = vmatprep.mubr.f32.mxu0 0.0
    %1928 = vmatmul.mubr.f32.gmra.mrb[0].mxu0 %v1856
    %v1929 = vpop.f32.mrb[0].mxu0
    %v1930 = vadd.f32 %v1850, %v1929
    %v1931 = vpop.f32.mrb[0].mxu0
    %1932 = vdwg.mxu0
    %v1933 = vadd.f32 %v1925, %v388
    %v1934 = vadd.f32 %v1930, %v389
    %v1935 = vld [vmem:[%s21] sm:$0x1]
    %v1936 = vld [vmem:[%s23] sm:$0x1]
    %v1937 = vsel %vm346, %v1933, 0.0
    %1938 = vadd.xlane.f32.xlu0 %v1937
    %v1939 = vpop.xlane.xlu0 %1938
    %v1940 = vsel %vm346, %v1934, 0.0
    %1941 = vadd.xlane.f32.xlu0 %v1940
    %v1942 = vpop.xlane.xlu0 %1941
    %v1943 = vmul.f32 %v1939, %v353
    %v1944 = vmul.f32 %v1942, %v353
    %v1945 = vsub.f32 %v1933, %v1943
    %v1946 = vsub.f32 %v1934, %v1944
    %v1947 = vmul.f32 %v1945, %v1945
    %v1948 = vmul.f32 %v1946, %v1946
    %v1949 = vsel %vm346, %v1947, 0.0
    %1950 = vadd.xlane.f32.xlu0 %v1949
    %v1951 = vpop.xlane.xlu0 %1950
    %v1952 = vsel %vm346, %v1948, 0.0
    %1953 = vadd.xlane.f32.xlu0 %v1952
    %v1954 = vpop.xlane.xlu0 %1953
    %v1955 = vmul.f32 %v1951, %v353
    %v1956 = vmul.f32 %v1954, %v353
    %v1957 = vadd.f32 %v1955, 1e-12
    %v1958 = vadd.f32 %v1956, 1e-12
    %v1959 = vrsqrt.pop %v1957
    %v1960 = vrsqrt.pop %v1958
    %v1961 = vmul.f32 %v1945, %v1959
    %v1962 = vmul.f32 %v1946, %v1960
    %v1964 = vlaneseq
    %v1965 = vshrl.u32 %v1964, 7
    %v1966 = vsub.s32 0, %v1965
    %v1967 = vrot.slane %v1935, %v1966
    %v1969 = vmul.f32 %v1961, %v1967
    %v1970 = vmul.f32 %v1962, %v1967
    %v1972 = vlaneseq
    %v1973 = vshrl.u32 %v1972, 7
    %v1974 = vsub.s32 0, %v1973
    %v1975 = vrot.slane %v1936, %v1974
    %v1977 = vadd.f32 %v1969, %v1975
    %v1978 = vadd.f32 %v1970, %v1975
    %v1979 = vld [vmem:[%s25] sm:$0xff]
    %v1980 = vld [vmem:[%s25 + $0x8] sm:$0xff]
    %v1981 = vld [vmem:[%s25 + $0x10] sm:$0xff]
    %v1982 = vld [vmem:[%s25 + $0x18] sm:$0xff]
    %v1983 = vld [vmem:[#allocation10] sm:$0x1]
    %v1985 = vlaneseq
    %v1986 = vshrl.u32 %v1985, 7
    %v1987 = vsub.s32 0, %v1986
    %v1988 = vrot.slane %v1983, %v1987
    %v1991 = vsel %vm346, %v1977, 0
    %v1994 = vsel %vm346, %v1978, 0
    %1996 = vmatprep.subr.mxu0 0.0
    %1997 = vmatpush1.msra.mxu0 %v1979
    %1998 = vmatprep.subr.mxu0 0.0
    %1999 = vmatpush1.msra.mxu0 %v1980
    %2000 = vmatprep.subr.mxu0 0.0
    %2001 = vmatpush1.msra.mxu0 %v1981
    %2002 = vmatprep.subr.mxu0 0.0
    %2003 = vmatpush1.msra.mxu0 %v1982
    %2004 = vmatprep.subr.mxu0 0.0
    %2005 = vmatpush1.msra.mxu0 0.0
    %2006 = vmatprep.subr.mxu0 0.0
    %2007 = vmatpush1.msra.mxu0 0.0
    %2008 = vmatprep.subr.mxu0 0.0
    %2009 = vmatpush1.msra.mxu0 0.0
    %2010 = vmatprep.subr.mxu0 0.0
    %2011 = vmatpush1.msra.mxu0 0.0
    %2012 = vmatprep.subr.mxu0 0.0
    %2013 = vmatpush1.msra.mxu0 0.0
    %2014 = vmatprep.subr.mxu0 0.0
    %2015 = vmatpush1.msra.mxu0 0.0
    %2016 = vmatprep.subr.mxu0 0.0
    %2017 = vmatpush1.msra.mxu0 0.0
    %2018 = vmatprep.subr.mxu0 0.0
    %2019 = vmatpush1.msra.mxu0 0.0
    %2020 = vmatprep.subr.mxu0 0.0
    %2021 = vmatpush1.msra.mxu0 0.0
    %2022 = vmatprep.subr.mxu0 0.0
    %2023 = vmatpush1.msra.mxu0 0.0
    %2024 = vmatprep.subr.mxu0 0.0
    %2025 = vmatpush1.msra.mxu0 0.0
    %2026 = vmatprep.subr.mxu0 0.0
    %2027 = vmatpush1.msra.mxu0 0.0
    %2028 = vmatprep.subr.mxu0 0.0
    %2029 = vmatpush1.msra.mxu0 0.0
    %2030 = vmatprep.subr.mxu0 0.0
    %2031 = vmatpush1.msra.mxu0 0.0
    %2032 = vmatprep.subr.mxu0 0.0
    %2033 = vmatpush1.msra.mxu0 0.0
    %2034 = vmatprep.subr.mxu0 0.0
    %2035 = vmatpush1.msra.mxu0 0.0
    %2036 = vmatprep.subr.mxu0 0.0
    %2037 = vmatpush1.msra.mxu0 0.0
    %2038 = vmatprep.subr.mxu0 0.0
    %2039 = vmatpush1.msra.mxu0 0.0
    %2040 = vmatprep.subr.mxu0 0.0
    %2041 = vmatpush1.msra.mxu0 0.0
    %2042 = vmatprep.subr.mxu0 0.0
    %2043 = vmatpush1.msra.mxu0 0.0
    %2044 = vmatprep.subr.mxu0 0.0
    %2045 = vmatpush1.msra.mxu0 0.0
    %2046 = vmatprep.subr.mxu0 0.0
    %2047 = vmatpush1.msra.mxu0 0.0
    %2048 = vmatprep.subr.mxu0 0.0
    %2049 = vmatpush1.msra.mxu0 0.0
    %2050 = vmatprep.subr.mxu0 0.0
    %2051 = vmatpush1.msra.mxu0 0.0
    %2052 = vmatprep.subr.mxu0 0.0
    %2053 = vmatpush1.msra.mxu0 0.0
    %2054 = vmatprep.subr.mxu0 0.0
    %2055 = vmatpush1.msra.mxu0 0.0
    %2056 = vmatprep.subr.mxu0 0.0
    %2057 = vmatpush1.msra.mxu0 0.0
    %2058 = vmatprep.subr.mxu0 0.0
    %2059 = vmatpush1.msra.mxu0 0.0
    %2060 = vmatprep.mubr.f32.mxu0 0.0
    %2061 = vmatmul.mubr.f32.gmra.mrb[0].mxu0 %v1991
    %v2062 = vpop.f32.mrb[0].mxu0
    %v2063 = vadd.f32 %v1988, %v2062
    %v2064 = vpop.f32.mrb[0].mxu0
    %2065 = vmatprep.mubr.f32.mxu0 0.0
    %2066 = vmatmul.mubr.f32.gmra.mrb[0].mxu0 %v1994
    %v2067 = vpop.f32.mrb[0].mxu0
    %v2068 = vadd.f32 %v1988, %v2067
    %v2069 = vpop.f32.mrb[0].mxu0
    %2070 = vdwg.mxu0
    %v2071 = vmul.f32 %v2063, %v2063
    %v2072 = vmul.f32 %v2068, %v2068
    %v2073 = vmul.f32 %v2063, %v2071
    %v2074 = vmul.f32 %v2068, %v2072
    %v2075 = vmul.f32 %v2073, 0.044715
    %v2076 = vmul.f32 %v2074, 0.044715
    %v2077 = vadd.f32 %v2063, %v2075
    %v2078 = vadd.f32 %v2068, %v2076
    %v2079 = vmul.f32 %v2077, 0.7978846
    %v2080 = vmul.f32 %v2078, 0.7978846
    %v2081 = vtanh.pop %v2079
    %v2082 = vtanh.pop %v2080
    %v2083 = vadd.f32 %v2081, 1.0
    %v2084 = vadd.f32 %v2082, 1.0
    %v2085 = vmul.f32 %v2083, 0.5
    %v2086 = vmul.f32 %v2084, 0.5
    %v2087 = vmul.f32 %v2063, %v2085
    %v2088 = vmul.f32 %v2068, %v2086
    %v2089 = vld [vmem:[%s29] sm:$0xff]
    %v2090 = vld [vmem:[%s29 + $0x8] sm:$0xff]
    %v2091 = vld [vmem:[%s29 + $0x10] sm:$0xff]
    %v2092 = vld [vmem:[%s29 + $0x18] sm:$0xff]
    %v2093 = vld [vmem:[%s29 + $0x20] sm:$0xff]
    %v2094 = vld [vmem:[%s29 + $0x28] sm:$0xff]
    %v2095 = vld [vmem:[%s29 + $0x30] sm:$0xff]
    %v2096 = vld [vmem:[%s29 + $0x38] sm:$0xff]
    %v2097 = vld [vmem:[#allocation11] sm:$0x1]
    %v2099 = vlaneseq
    %v2100 = vshrl.u32 %v2099, 7
    %v2101 = vsub.s32 0, %v2100
    %v2102 = vrot.slane %v2097, %v2101
    %vm2104 = vcmask 523264
    %v2106 = vsel %vm2104, %v2087, 0
    %v2109 = vsel %vm2104, %v2088, 0
    %2111 = vmatprep.subr.mxu0 0.0
    %2112 = vmatpush1.msra.mxu0 %v2089
    %2113 = vmatprep.subr.mxu0 0.0
    %2114 = vmatpush1.msra.mxu0 %v2090
    %2115 = vmatprep.subr.mxu0 0.0
    %2116 = vmatpush1.msra.mxu0 %v2091
    %2117 = vmatprep.subr.mxu0 0.0
    %2118 = vmatpush1.msra.mxu0 %v2092
    %2119 = vmatprep.subr.mxu0 0.0
    %2120 = vmatpush1.msra.mxu0 %v2093
    %2121 = vmatprep.subr.mxu0 0.0
    %2122 = vmatpush1.msra.mxu0 %v2094
    %2123 = vmatprep.subr.mxu0 0.0
    %2124 = vmatpush1.msra.mxu0 %v2095
    %2125 = vmatprep.subr.mxu0 0.0
    %2126 = vmatpush1.msra.mxu0 %v2096
    %2127 = vmatprep.subr.mxu0 0.0
    %2128 = vmatpush1.msra.mxu0 0.0
    %2129 = vmatprep.subr.mxu0 0.0
    %2130 = vmatpush1.msra.mxu0 0.0
    %2131 = vmatprep.subr.mxu0 0.0
    %2132 = vmatpush1.msra.mxu0 0.0
    %2133 = vmatprep.subr.mxu0 0.0
    %2134 = vmatpush1.msra.mxu0 0.0
    %2135 = vmatprep.subr.mxu0 0.0
    %2136 = vmatpush1.msra.mxu0 0.0
    %2137 = vmatprep.subr.mxu0 0.0
    %2138 = vmatpush1.msra.mxu0 0.0
    %2139 = vmatprep.subr.mxu0 0.0
    %2140 = vmatpush1.msra.mxu0 0.0
    %2141 = vmatprep.subr.mxu0 0.0
    %2142 = vmatpush1.msra.mxu0 0.0
    %2143 = vmatprep.subr.mxu0 0.0
    %2144 = vmatpush1.msra.mxu0 0.0
    %2145 = vmatprep.subr.mxu0 0.0
    %2146 = vmatpush1.msra.mxu0 0.0
    %2147 = vmatprep.subr.mxu0 0.0
    %2148 = vmatpush1.msra.mxu0 0.0
    %2149 = vmatprep.subr.mxu0 0.0
    %2150 = vmatpush1.msra.mxu0 0.0
    %2151 = vmatprep.subr.mxu0 0.0
    %2152 = vmatpush1.msra.mxu0 0.0
    %2153 = vmatprep.subr.mxu0 0.0
    %2154 = vmatpush1.msra.mxu0 0.0
    %2155 = vmatprep.subr.mxu0 0.0
    %2156 = vmatpush1.msra.mxu0 0.0
    %2157 = vmatprep.subr.mxu0 0.0
    %2158 = vmatpush1.msra.mxu0 0.0
    %2159 = vmatprep.subr.mxu0 0.0
    %2160 = vmatpush1.msra.mxu0 0.0
    %2161 = vmatprep.subr.mxu0 0.0
    %2162 = vmatpush1.msra.mxu0 0.0
    %2163 = vmatprep.subr.mxu0 0.0
    %2164 = vmatpush1.msra.mxu0 0.0
    %2165 = vmatprep.subr.mxu0 0.0
    %2166 = vmatpush1.msra.mxu0 0.0
    %2167 = vmatprep.subr.mxu0 0.0
    %2168 = vmatpush1.msra.mxu0 0.0
    %2169 = vmatprep.subr.mxu0 0.0
    %2170 = vmatpush1.msra.mxu0 0.0
    %2171 = vmatprep.subr.mxu0 0.0
    %2172 = vmatpush1.msra.mxu0 0.0
    %2173 = vmatprep.subr.mxu0 0.0
    %2174 = vmatpush1.msra.mxu0 0.0
    %2175 = vmatprep.mubr.f32.mxu0 0.0
    %2176 = vmatmul.mubr.f32.gmra.mrb[0].mxu0 %v2106
    %v2177 = vpop.f32.mrb[0].mxu0
    %v2178 = vadd.f32 %v2102, %v2177
    %v2179 = vpop.f32.mrb[0].mxu0
    %2180 = vmatprep.mubr.f32.mxu0 0.0
    %2181 = vmatmul.mubr.f32.gmra.mrb[0].mxu0 %v2109
    %v2182 = vpop.f32.mrb[0].mxu0
    %v2183 = vadd.f32 %v2102, %v2182
    %v2184 = vpop.f32.mrb[0].mxu0
    %2185 = vdwg.mxu0
    %v2186 = vadd.f32 %v2178, %v1977
    %v2187 = vadd.f32 %v2183, %v1978
    %v2188 = vld [vmem:[%s33] sm:$0x1]
    %v2189 = vld [vmem:[%s35] sm:$0x1]
    %v2190 = vsel %vm346, %v2186, 0.0
    %2191 = vadd.xlane.f32.xlu0 %v2190
    %v2192 = vpop.xlane.xlu0 %2191
    %v2193 = vsel %vm346, %v2187, 0.0
    %2194 = vadd.xlane.f32.xlu0 %v2193
    %v2195 = vpop.xlane.xlu0 %2194
    %v2196 = vmul.f32 %v2192, %v353
    %v2197 = vmul.f32 %v2195, %v353
    %v2198 = vsub.f32 %v2186, %v2196
    %v2199 = vsub.f32 %v2187, %v2197
    %v2200 = vmul.f32 %v2198, %v2198
    %v2201 = vmul.f32 %v2199, %v2199
    %v2202 = vsel %vm346, %v2200, 0.0
    %2203 = vadd.xlane.f32.xlu0 %v2202
    %v2204 = vpop.xlane.xlu0 %2203
    %v2205 = vsel %vm346, %v2201, 0.0
    %2206 = vadd.xlane.f32.xlu0 %v2205
    %v2207 = vpop.xlane.xlu0 %2206
    %v2208 = vmul.f32 %v2204, %v353
    %v2209 = vmul.f32 %v2207, %v353
    %v2210 = vadd.f32 %v2208, 1e-12
    %v2211 = vadd.f32 %v2209, 1e-12
    %v2212 = vrsqrt.pop %v2210
    %v2213 = vrsqrt.pop %v2211
    %v2214 = vmul.f32 %v2198, %v2212
    %v2215 = vmul.f32 %v2199, %v2213
    %v2217 = vlaneseq
    %v2218 = vshrl.u32 %v2217, 7
    %v2219 = vsub.s32 0, %v2218
    %v2220 = vrot.slane %v2188, %v2219
    %v2222 = vmul.f32 %v2214, %v2220
    %v2223 = vmul.f32 %v2215, %v2220
    %v2225 = vlaneseq
    %v2226 = vshrl.u32 %v2225, 7
    %v2227 = vsub.s32 0, %v2226
    %v2228 = vrot.slane %v2189, %v2227
    %v2230 = vadd.f32 %v2222, %v2228
    %v2231 = vadd.f32 %v2223, %v2228
    %v2232 = vld [vmem:[%s37] sm:$0xff]
    %v2233 = vld [vmem:[%s37 + $0x8] sm:$0xff]
    %v2234 = vld [vmem:[%s37 + $0x10] sm:$0xff]
    %v2235 = vld [vmem:[%s37 + $0x18] sm:$0xff]
    %v2236 = vld [vmem:[%s39] sm:$0x1]
    %v2238 = vlaneseq
    %v2239 = vshrl.u32 %v2238, 7
    %v2240 = vsub.s32 0, %v2239
    %v2241 = vrot.slane %v2236, %v2240
    %v2244 = vsel %vm346, %v2230, 0
    %v2247 = vsel %vm346, %v2231, 0
    %2249 = vmatprep.subr.mxu0 0.0
    %2250 = vmatpush1.msra.mxu0 %v2232
    %2251 = vmatprep.subr.mxu0 0.0
    %2252 = vmatpush1.msra.mxu0 %v2233
    %2253 = vmatprep.subr.mxu0 0.0
    %2254 = vmatpush1.msra.mxu0 %v2234
    %2255 = vmatprep.subr.mxu0 0.0
    %2256 = vmatpush1.msra.mxu0 %v2235
    %2257 = vmatprep.subr.mxu0 0.0
    %2258 = vmatpush1.msra.mxu0 0.0
    %2259 = vmatprep.subr.mxu0 0.0
    %2260 = vmatpush1.msra.mxu0 0.0
    %2261 = vmatprep.subr.mxu0 0.0
    %2262 = vmatpush1.msra.mxu0 0.0
    %2263 = vmatprep.subr.mxu0 0.0
    %2264 = vmatpush1.msra.mxu0 0.0
    %2265 = vmatprep.subr.mxu0 0.0
    %2266 = vmatpush1.msra.mxu0 0.0
    %2267 = vmatprep.subr.mxu0 0.0
    %2268 = vmatpush1.msra.mxu0 0.0
    %2269 = vmatprep.subr.mxu0 0.0
    %2270 = vmatpush1.msra.mxu0 0.0
    %2271 = vmatprep.subr.mxu0 0.0
    %2272 = vmatpush1.msra.mxu0 0.0
    %2273 = vmatprep.subr.mxu0 0.0
    %2274 = vmatpush1.msra.mxu0 0.0
    %2275 = vmatprep.subr.mxu0 0.0
    %2276 = vmatpush1.msra.mxu0 0.0
    %2277 = vmatprep.subr.mxu0 0.0
    %2278 = vmatpush1.msra.mxu0 0.0
    %2279 = vmatprep.subr.mxu0 0.0
    %2280 = vmatpush1.msra.mxu0 0.0
    %2281 = vmatprep.subr.mxu0 0.0
    %2282 = vmatpush1.msra.mxu0 0.0
    %2283 = vmatprep.subr.mxu0 0.0
    %2284 = vmatpush1.msra.mxu0 0.0
    %2285 = vmatprep.subr.mxu0 0.0
    %2286 = vmatpush1.msra.mxu0 0.0
    %2287 = vmatprep.subr.mxu0 0.0
    %2288 = vmatpush1.msra.mxu0 0.0
    %2289 = vmatprep.subr.mxu0 0.0
    %2290 = vmatpush1.msra.mxu0 0.0
    %2291 = vmatprep.subr.mxu0 0.0
    %2292 = vmatpush1.msra.mxu0 0.0
    %2293 = vmatprep.subr.mxu0 0.0
    %2294 = vmatpush1.msra.mxu0 0.0
    %2295 = vmatprep.subr.mxu0 0.0
    %2296 = vmatpush1.msra.mxu0 0.0
    %2297 = vmatprep.subr.mxu0 0.0
    %2298 = vmatpush1.msra.mxu0 0.0
    %2299 = vmatprep.subr.mxu0 0.0
    %2300 = vmatpush1.msra.mxu0 0.0
    %2301 = vmatprep.subr.mxu0 0.0
    %2302 = vmatpush1.msra.mxu0 0.0
    %2303 = vmatprep.subr.mxu0 0.0
    %2304 = vmatpush1.msra.mxu0 0.0
    %2305 = vmatprep.subr.mxu0 0.0
    %2306 = vmatpush1.msra.mxu0 0.0
    %2307 = vmatprep.subr.mxu0 0.0
    %2308 = vmatpush1.msra.mxu0 0.0
    %2309 = vmatprep.subr.mxu0 0.0
    %2310 = vmatpush1.msra.mxu0 0.0
    %2311 = vmatprep.subr.mxu0 0.0
    %2312 = vmatpush1.msra.mxu0 0.0
    %2313 = vmatprep.mubr.f32.mxu0 0.0
    %2314 = vmatmul.mubr.f32.gmra.mrb[0].mxu0 %v2244
    %v2315 = vpop.f32.mrb[0].mxu0
    %v2316 = vadd.f32 %v2241, %v2315
    %v2317 = vpop.f32.mrb[0].mxu0
    %2318 = vmatprep.mubr.f32.mxu0 0.0
    %2319 = vmatmul.mubr.f32.gmra.mrb[0].mxu0 %v2247
    %v2320 = vpop.f32.mrb[0].mxu0
    %v2321 = vadd.f32 %v2241, %v2320
    %v2322 = vpop.f32.mrb[0].mxu0
    %2323 = vdwg.mxu0
    %2326 = vrot.lane.b32.xlu0 %v2316, 120
    %v2327 = vpop.permute.xlu0 %2326
    %2328 = vrot.lane.b32.xlu0 %v2321, 120
    %v2329 = vpop.permute.xlu0 %2328
    %2330 = vrot.lane.b32.xlu0 %v2316, 112
    %v2331 = vpop.permute.xlu0 %2330
    %2332 = vrot.lane.b32.xlu0 %v2321, 112
    %v2333 = vpop.permute.xlu0 %2332
    %2334 = vrot.lane.b32.xlu0 %v2316, 104
    %v2335 = vpop.permute.xlu0 %2334
    %2336 = vrot.lane.b32.xlu0 %v2321, 104
    %v2337 = vpop.permute.xlu0 %2336
    %2338 = vrot.lane.b32.xlu0 %v2316, 96
    %v2339 = vpop.permute.xlu0 %2338
    %v2340 = vsel %vm498, %v2316, 0
    %v2342 = vsel %vm498, %v2339, 0
    %2344 = vmatprep.subr.mxu0 0.0
    %2345 = vmatpush1.xpose.msra.mxu0 %v2342
    %2346 = vmatprep.subr.mxu0 0.0
    %2347 = vmatpush1.xpose.msra.mxu0 0.0
    %2348 = vmatprep.subr.mxu0 0.0
    %2349 = vmatpush1.xpose.msra.mxu0 0.0
    %2350 = vmatprep.subr.mxu0 0.0
    %2351 = vmatpush1.xpose.msra.mxu0 0.0
    %2352 = vmatprep.subr.mxu0 0.0
    %2353 = vmatpush1.xpose.msra.mxu0 0.0
    %2354 = vmatprep.subr.mxu0 0.0
    %2355 = vmatpush1.xpose.msra.mxu0 0.0
    %2356 = vmatprep.subr.mxu0 0.0
    %2357 = vmatpush1.xpose.msra.mxu0 0.0
    %2358 = vmatprep.subr.mxu0 0.0
    %2359 = vmatpush1.xpose.msra.mxu0 0.0
    %2360 = vmatprep.subr.mxu0 0.0
    %2361 = vmatpush1.xpose.msra.mxu0 0.0
    %2362 = vmatprep.subr.mxu0 0.0
    %2363 = vmatpush1.xpose.msra.mxu0 0.0
    %2364 = vmatprep.subr.mxu0 0.0
    %2365 = vmatpush1.xpose.msra.mxu0 0.0
    %2366 = vmatprep.subr.mxu0 0.0
    %2367 = vmatpush1.xpose.msra.mxu0 0.0
    %2368 = vmatprep.subr.mxu0 0.0
    %2369 = vmatpush1.xpose.msra.mxu0 0.0
    %2370 = vmatprep.subr.mxu0 0.0
    %2371 = vmatpush1.xpose.msra.mxu0 0.0
    %2372 = vmatprep.subr.mxu0 0.0
    %2373 = vmatpush1.xpose.msra.mxu0 0.0
    %2374 = vmatprep.subr.mxu0 0.0
    %2375 = vmatpush1.xpose.msra.mxu0 0.0
    %2376 = vmatprep.subr.mxu0 0.0
    %2377 = vmatpush1.xpose.msra.mxu0 0.0
    %2378 = vmatprep.subr.mxu0 0.0
    %2379 = vmatpush1.xpose.msra.mxu0 0.0
    %2380 = vmatprep.subr.mxu0 0.0
    %2381 = vmatpush1.xpose.msra.mxu0 0.0
    %2382 = vmatprep.subr.mxu0 0.0
    %2383 = vmatpush1.xpose.msra.mxu0 0.0
    %2384 = vmatprep.subr.mxu0 0.0
    %2385 = vmatpush1.xpose.msra.mxu0 0.0
    %2386 = vmatprep.subr.mxu0 0.0
    %2387 = vmatpush1.xpose.msra.mxu0 0.0
    %2388 = vmatprep.subr.mxu0 0.0
    %2389 = vmatpush1.xpose.msra.mxu0 0.0
    %2390 = vmatprep.subr.mxu0 0.0
    %2391 = vmatpush1.xpose.msra.mxu0 0.0
    %2392 = vmatprep.subr.mxu0 0.0
    %2393 = vmatpush1.xpose.msra.mxu0 0.0
    %2394 = vmatprep.subr.mxu0 0.0
    %2395 = vmatpush1.xpose.msra.mxu0 0.0
    %2396 = vmatprep.subr.mxu0 0.0
    %2397 = vmatpush1.xpose.msra.mxu0 0.0
    %2398 = vmatprep.subr.mxu0 0.0
    %2399 = vmatpush1.xpose.msra.mxu0 0.0
    %2400 = vmatprep.subr.mxu0 0.0
    %2401 = vmatpush1.xpose.msra.mxu0 0.0
    %2402 = vmatprep.subr.mxu0 0.0
    %2403 = vmatpush1.xpose.msra.mxu0 0.0
    %2404 = vmatprep.subr.mxu0 0.0
    %2405 = vmatpush1.xpose.msra.mxu0 0.0
    %2406 = vmatprep.subr.mxu0 0.0
    %2407 = vmatpush1.xpose.msra.mxu0 0.0
    %2408 = vmatprep.mubr.f32.mxu0 0.0
    %2409 = vmatmul.mubr.f32.gmra.mrb[0].mxu0 %v2340
    %v2410 = vpop.f32.mrb[0].mxu0
    %v2411 = vadd.f32 0.0, %v2410
    %v2412 = vpop.f32.mrb[0].mxu0
    %2413 = vdwg.mxu0
    %2414 = vrot.lane.b32.xlu0 %v2321, 96
    %v2415 = vpop.permute.xlu0 %2414
    %v2416 = vsel %vm498, %v2321, 0
    %v2418 = vsel %vm498, %v2415, 0
    %2420 = vmatprep.subr.mxu0 0.0
    %2421 = vmatpush1.xpose.msra.mxu0 %v2418
    %2422 = vmatprep.subr.mxu0 0.0
    %2423 = vmatpush1.xpose.msra.mxu0 0.0
    %2424 = vmatprep.subr.mxu0 0.0
    %2425 = vmatpush1.xpose.msra.mxu0 0.0
    %2426 = vmatprep.subr.mxu0 0.0
    %2427 = vmatpush1.xpose.msra.mxu0 0.0
    %2428 = vmatprep.subr.mxu0 0.0
    %2429 = vmatpush1.xpose.msra.mxu0 0.0
    %2430 = vmatprep.subr.mxu0 0.0
    %2431 = vmatpush1.xpose.msra.mxu0 0.0
    %2432 = vmatprep.subr.mxu0 0.0
    %2433 = vmatpush1.xpose.msra.mxu0 0.0
    %2434 = vmatprep.subr.mxu0 0.0
    %2435 = vmatpush1.xpose.msra.mxu0 0.0
    %2436 = vmatprep.subr.mxu0 0.0
    %2437 = vmatpush1.xpose.msra.mxu0 0.0
    %2438 = vmatprep.subr.mxu0 0.0
    %2439 = vmatpush1.xpose.msra.mxu0 0.0
    %2440 = vmatprep.subr.mxu0 0.0
    %2441 = vmatpush1.xpose.msra.mxu0 0.0
    %2442 = vmatprep.subr.mxu0 0.0
    %2443 = vmatpush1.xpose.msra.mxu0 0.0
    %2444 = vmatprep.subr.mxu0 0.0
    %2445 = vmatpush1.xpose.msra.mxu0 0.0
    %2446 = vmatprep.subr.mxu0 0.0
    %2447 = vmatpush1.xpose.msra.mxu0 0.0
    %2448 = vmatprep.subr.mxu0 0.0
    %2449 = vmatpush1.xpose.msra.mxu0 0.0
    %2450 = vmatprep.subr.mxu0 0.0
    %2451 = vmatpush1.xpose.msra.mxu0 0.0
    %2452 = vmatprep.subr.mxu0 0.0
    %2453 = vmatpush1.xpose.msra.mxu0 0.0
    %2454 = vmatprep.subr.mxu0 0.0
    %2455 = vmatpush1.xpose.msra.mxu0 0.0
    %2456 = vmatprep.subr.mxu0 0.0
    %2457 = vmatpush1.xpose.msra.mxu0 0.0
    %2458 = vmatprep.subr.mxu0 0.0
    %2459 = vmatpush1.xpose.msra.mxu0 0.0
    %2460 = vmatprep.subr.mxu0 0.0
    %2461 = vmatpush1.xpose.msra.mxu0 0.0
    %2462 = vmatprep.subr.mxu0 0.0
    %2463 = vmatpush1.xpose.msra.mxu0 0.0
    %2464 = vmatprep.subr.mxu0 0.0
    %2465 = vmatpush1.xpose.msra.mxu0 0.0
    %2466 = vmatprep.subr.mxu0 0.0
    %2467 = vmatpush1.xpose.msra.mxu0 0.0
    %2468 = vmatprep.subr.mxu0 0.0
    %2469 = vmatpush1.xpose.msra.mxu0 0.0
    %2470 = vmatprep.subr.mxu0 0.0
    %2471 = vmatpush1.xpose.msra.mxu0 0.0
    %2472 = vmatprep.subr.mxu0 0.0
    %2473 = vmatpush1.xpose.msra.mxu0 0.0
    %2474 = vmatprep.subr.mxu0 0.0
    %2475 = vmatpush1.xpose.msra.mxu0 0.0
    %2476 = vmatprep.subr.mxu0 0.0
    %2477 = vmatpush1.xpose.msra.mxu0 0.0
    %2478 = vmatprep.subr.mxu0 0.0
    %2479 = vmatpush1.xpose.msra.mxu0 0.0
    %2480 = vmatprep.subr.mxu0 0.0
    %2481 = vmatpush1.xpose.msra.mxu0 0.0
    %2482 = vmatprep.subr.mxu0 0.0
    %2483 = vmatpush1.xpose.msra.mxu0 0.0
    %2484 = vmatprep.mubr.f32.mxu0 0.0
    %2485 = vmatmul.mubr.f32.gmra.mrb[0].mxu0 %v2416
    %v2486 = vpop.f32.mrb[0].mxu0
    %v2487 = vadd.f32 0.0, %v2486
    %v2488 = vpop.f32.mrb[0].mxu0
    %2489 = vdwg.mxu0
    %2490 = vrot.lane.b32.xlu0 %v2327, 96
    %v2491 = vpop.permute.xlu0 %2490
    %v2492 = vsel %vm498, %v2327, 0
    %v2494 = vsel %vm498, %v2491, 0
    %2496 = vmatprep.subr.mxu0 0.0
    %2497 = vmatpush1.xpose.msra.mxu0 %v2494
    %2498 = vmatprep.subr.mxu0 0.0
    %2499 = vmatpush1.xpose.msra.mxu0 0.0
    %2500 = vmatprep.subr.mxu0 0.0
    %2501 = vmatpush1.xpose.msra.mxu0 0.0
    %2502 = vmatprep.subr.mxu0 0.0
    %2503 = vmatpush1.xpose.msra.mxu0 0.0
    %2504 = vmatprep.subr.mxu0 0.0
    %2505 = vmatpush1.xpose.msra.mxu0 0.0
    %2506 = vmatprep.subr.mxu0 0.0
    %2507 = vmatpush1.xpose.msra.mxu0 0.0
    %2508 = vmatprep.subr.mxu0 0.0
    %2509 = vmatpush1.xpose.msra.mxu0 0.0
    %2510 = vmatprep.subr.mxu0 0.0
    %2511 = vmatpush1.xpose.msra.mxu0 0.0
    %2512 = vmatprep.subr.mxu0 0.0
    %2513 = vmatpush1.xpose.msra.mxu0 0.0
    %2514 = vmatprep.subr.mxu0 0.0
    %2515 = vmatpush1.xpose.msra.mxu0 0.0
    %2516 = vmatprep.subr.mxu0 0.0
    %2517 = vmatpush1.xpose.msra.mxu0 0.0
    %2518 = vmatprep.subr.mxu0 0.0
    %2519 = vmatpush1.xpose.msra.mxu0 0.0
    %2520 = vmatprep.subr.mxu0 0.0
    %2521 = vmatpush1.xpose.msra.mxu0 0.0
    %2522 = vmatprep.subr.mxu0 0.0
    %2523 = vmatpush1.xpose.msra.mxu0 0.0
    %2524 = vmatprep.subr.mxu0 0.0
    %2525 = vmatpush1.xpose.msra.mxu0 0.0
    %2526 = vmatprep.subr.mxu0 0.0
    %2527 = vmatpush1.xpose.msra.mxu0 0.0
    %2528 = vmatprep.subr.mxu0 0.0
    %2529 = vmatpush1.xpose.msra.mxu0 0.0
    %2530 = vmatprep.subr.mxu0 0.0
    %2531 = vmatpush1.xpose.msra.mxu0 0.0
    %2532 = vmatprep.subr.mxu0 0.0
    %2533 = vmatpush1.xpose.msra.mxu0 0.0
    %2534 = vmatprep.subr.mxu0 0.0
    %2535 = vmatpush1.xpose.msra.mxu0 0.0
    %2536 = vmatprep.subr.mxu0 0.0
    %2537 = vmatpush1.xpose.msra.mxu0 0.0
    %2538 = vmatprep.subr.mxu0 0.0
    %2539 = vmatpush1.xpose.msra.mxu0 0.0
    %2540 = vmatprep.subr.mxu0 0.0
    %2541 = vmatpush1.xpose.msra.mxu0 0.0
    %2542 = vmatprep.subr.mxu0 0.0
    %2543 = vmatpush1.xpose.msra.mxu0 0.0
    %2544 = vmatprep.subr.mxu0 0.0
    %2545 = vmatpush1.xpose.msra.mxu0 0.0
    %2546 = vmatprep.subr.mxu0 0.0
    %2547 = vmatpush1.xpose.msra.mxu0 0.0
    %2548 = vmatprep.subr.mxu0 0.0
    %2549 = vmatpush1.xpose.msra.mxu0 0.0
    %2550 = vmatprep.subr.mxu0 0.0
    %2551 = vmatpush1.xpose.msra.mxu0 0.0
    %2552 = vmatprep.subr.mxu0 0.0
    %2553 = vmatpush1.xpose.msra.mxu0 0.0
    %2554 = vmatprep.subr.mxu0 0.0
    %2555 = vmatpush1.xpose.msra.mxu0 0.0
    %2556 = vmatprep.subr.mxu0 0.0
    %2557 = vmatpush1.xpose.msra.mxu0 0.0
    %2558 = vmatprep.subr.mxu0 0.0
    %2559 = vmatpush1.xpose.msra.mxu0 0.0
    %2560 = vmatprep.mubr.f32.mxu0 0.0
    %2561 = vmatmul.mubr.f32.gmra.mrb[0].mxu0 %v2492
    %v2562 = vpop.f32.mrb[0].mxu0
    %v2563 = vadd.f32 0.0, %v2562
    %v2564 = vpop.f32.mrb[0].mxu0
    %2565 = vdwg.mxu0
    %2566 = vrot.lane.b32.xlu0 %v2329, 96
    %v2567 = vpop.permute.xlu0 %2566
    %v2568 = vsel %vm498, %v2329, 0
    %v2570 = vsel %vm498, %v2567, 0
    %2572 = vmatprep.subr.mxu0 0.0
    %2573 = vmatpush1.xpose.msra.mxu0 %v2570
    %2574 = vmatprep.subr.mxu0 0.0
    %2575 = vmatpush1.xpose.msra.mxu0 0.0
    %2576 = vmatprep.subr.mxu0 0.0
    %2577 = vmatpush1.xpose.msra.mxu0 0.0
    %2578 = vmatprep.subr.mxu0 0.0
    %2579 = vmatpush1.xpose.msra.mxu0 0.0
    %2580 = vmatprep.subr.mxu0 0.0
    %2581 = vmatpush1.xpose.msra.mxu0 0.0
    %2582 = vmatprep.subr.mxu0 0.0
    %2583 = vmatpush1.xpose.msra.mxu0 0.0
    %2584 = vmatprep.subr.mxu0 0.0
    %2585 = vmatpush1.xpose.msra.mxu0 0.0
    %2586 = vmatprep.subr.mxu0 0.0
    %2587 = vmatpush1.xpose.msra.mxu0 0.0
    %2588 = vmatprep.subr.mxu0 0.0
    %2589 = vmatpush1.xpose.msra.mxu0 0.0
    %2590 = vmatprep.subr.mxu0 0.0
    %2591 = vmatpush1.xpose.msra.mxu0 0.0
    %2592 = vmatprep.subr.mxu0 0.0
    %2593 = vmatpush1.xpose.msra.mxu0 0.0
    %2594 = vmatprep.subr.mxu0 0.0
    %2595 = vmatpush1.xpose.msra.mxu0 0.0
    %2596 = vmatprep.subr.mxu0 0.0
    %2597 = vmatpush1.xpose.msra.mxu0 0.0
    %2598 = vmatprep.subr.mxu0 0.0
    %2599 = vmatpush1.xpose.msra.mxu0 0.0
    %2600 = vmatprep.subr.mxu0 0.0
    %2601 = vmatpush1.xpose.msra.mxu0 0.0
    %2602 = vmatprep.subr.mxu0 0.0
    %2603 = vmatpush1.xpose.msra.mxu0 0.0
    %2604 = vmatprep.subr.mxu0 0.0
    %2605 = vmatpush1.xpose.msra.mxu0 0.0
    %2606 = vmatprep.subr.mxu0 0.0
    %2607 = vmatpush1.xpose.msra.mxu0 0.0
    %2608 = vmatprep.subr.mxu0 0.0
    %2609 = vmatpush1.xpose.msra.mxu0 0.0
    %2610 = vmatprep.subr.mxu0 0.0
    %2611 = vmatpush1.xpose.msra.mxu0 0.0
    %2612 = vmatprep.subr.mxu0 0.0
    %2613 = vmatpush1.xpose.msra.mxu0 0.0
    %2614 = vmatprep.subr.mxu0 0.0
    %2615 = vmatpush1.xpose.msra.mxu0 0.0
    %2616 = vmatprep.subr.mxu0 0.0
    %2617 = vmatpush1.xpose.msra.mxu0 0.0
    %2618 = vmatprep.subr.mxu0 0.0
    %2619 = vmatpush1.xpose.msra.mxu0 0.0
    %2620 = vmatprep.subr.mxu0 0.0
    %2621 = vmatpush1.xpose.msra.mxu0 0.0
    %2622 = vmatprep.subr.mxu0 0.0
    %2623 = vmatpush1.xpose.msra.mxu0 0.0
    %2624 = vmatprep.subr.mxu0 0.0
    %2625 = vmatpush1.xpose.msra.mxu0 0.0
    %2626 = vmatprep.subr.mxu0 0.0
    %2627 = vmatpush1.xpose.msra.mxu0 0.0
    %2628 = vmatprep.subr.mxu0 0.0
    %2629 = vmatpush1.xpose.msra.mxu0 0.0
    %2630 = vmatprep.subr.mxu0 0.0
    %2631 = vmatpush1.xpose.msra.mxu0 0.0
    %2632 = vmatprep.subr.mxu0 0.0
    %2633 = vmatpush1.xpose.msra.mxu0 0.0
    %2634 = vmatprep.subr.mxu0 0.0
    %2635 = vmatpush1.xpose.msra.mxu0 0.0
    %2636 = vmatprep.mubr.f32.mxu0 0.0
    %2637 = vmatmul.mubr.f32.gmra.mrb[0].mxu0 %v2568
    %v2638 = vpop.f32.mrb[0].mxu0
    %v2639 = vadd.f32 0.0, %v2638
    %v2640 = vpop.f32.mrb[0].mxu0
    %2641 = vdwg.mxu0
    %2642 = vrot.lane.b32.xlu0 %v2331, 96
    %v2643 = vpop.permute.xlu0 %2642
    %v2644 = vsel %vm498, %v2331, 0
    %v2646 = vsel %vm498, %v2643, 0
    %2648 = vmatprep.subr.mxu0 0.0
    %2649 = vmatpush1.xpose.msra.mxu0 %v2646
    %2650 = vmatprep.subr.mxu0 0.0
    %2651 = vmatpush1.xpose.msra.mxu0 0.0
    %2652 = vmatprep.subr.mxu0 0.0
    %2653 = vmatpush1.xpose.msra.mxu0 0.0
    %2654 = vmatprep.subr.mxu0 0.0
    %2655 = vmatpush1.xpose.msra.mxu0 0.0
    %2656 = vmatprep.subr.mxu0 0.0
    %2657 = vmatpush1.xpose.msra.mxu0 0.0
    %2658 = vmatprep.subr.mxu0 0.0
    %2659 = vmatpush1.xpose.msra.mxu0 0.0
    %2660 = vmatprep.subr.mxu0 0.0
    %2661 = vmatpush1.xpose.msra.mxu0 0.0
    %2662 = vmatprep.subr.mxu0 0.0
    %2663 = vmatpush1.xpose.msra.mxu0 0.0
    %2664 = vmatprep.subr.mxu0 0.0
    %2665 = vmatpush1.xpose.msra.mxu0 0.0
    %2666 = vmatprep.subr.mxu0 0.0
    %2667 = vmatpush1.xpose.msra.mxu0 0.0
    %2668 = vmatprep.subr.mxu0 0.0
    %2669 = vmatpush1.xpose.msra.mxu0 0.0
    %2670 = vmatprep.subr.mxu0 0.0
    %2671 = vmatpush1.xpose.msra.mxu0 0.0
    %2672 = vmatprep.subr.mxu0 0.0
    %2673 = vmatpush1.xpose.msra.mxu0 0.0
    %2674 = vmatprep.subr.mxu0 0.0
    %2675 = vmatpush1.xpose.msra.mxu0 0.0
    %2676 = vmatprep.subr.mxu0 0.0
    %2677 = vmatpush1.xpose.msra.mxu0 0.0
    %2678 = vmatprep.subr.mxu0 0.0
    %2679 = vmatpush1.xpose.msra.mxu0 0.0
    %2680 = vmatprep.subr.mxu0 0.0
    %2681 = vmatpush1.xpose.msra.mxu0 0.0
    %2682 = vmatprep.subr.mxu0 0.0
    %2683 = vmatpush1.xpose.msra.mxu0 0.0
    %2684 = vmatprep.subr.mxu0 0.0
    %2685 = vmatpush1.xpose.msra.mxu0 0.0
    %2686 = vmatprep.subr.mxu0 0.0
    %2687 = vmatpush1.xpose.msra.mxu0 0.0
    %2688 = vmatprep.subr.mxu0 0.0
    %2689 = vmatpush1.xpose.msra.mxu0 0.0
    %2690 = vmatprep.subr.mxu0 0.0
    %2691 = vmatpush1.xpose.msra.mxu0 0.0
    %2692 = vmatprep.subr.mxu0 0.0
    %2693 = vmatpush1.xpose.msra.mxu0 0.0
    %2694 = vmatprep.subr.mxu0 0.0
    %2695 = vmatpush1.xpose.msra.mxu0 0.0
    %2696 = vmatprep.subr.mxu0 0.0
    %2697 = vmatpush1.xpose.msra.mxu0 0.0
    %2698 = vmatprep.subr.mxu0 0.0
    %2699 = vmatpush1.xpose.msra.mxu0 0.0
    %2700 = vmatprep.subr.mxu0 0.0
    %2701 = vmatpush1.xpose.msra.mxu0 0.0
    %2702 = vmatprep.subr.mxu0 0.0
    %2703 = vmatpush1.xpose.msra.mxu0 0.0
    %2704 = vmatprep.subr.mxu0 0.0
    %2705 = vmatpush1.xpose.msra.mxu0 0.0
    %2706 = vmatprep.subr.mxu0 0.0
    %2707 = vmatpush1.xpose.msra.mxu0 0.0
    %2708 = vmatprep.subr.mxu0 0.0
    %2709 = vmatpush1.xpose.msra.mxu0 0.0
    %2710 = vmatprep.subr.mxu0 0.0
    %2711 = vmatpush1.xpose.msra.mxu0 0.0
    %2712 = vmatprep.mubr.f32.mxu0 0.0
    %2713 = vmatmul.mubr.f32.gmra.mrb[0].mxu0 %v2644
    %v2714 = vpop.f32.mrb[0].mxu0
    %v2715 = vadd.f32 0.0, %v2714
    %v2716 = vpop.f32.mrb[0].mxu0
    %2717 = vdwg.mxu0
    %2718 = vrot.lane.b32.xlu0 %v2333, 96
    %v2719 = vpop.permute.xlu0 %2718
    %v2720 = vsel %vm498, %v2333, 0
    %v2722 = vsel %vm498, %v2719, 0
    %2724 = vmatprep.subr.mxu0 0.0
    %2725 = vmatpush1.xpose.msra.mxu0 %v2722
    %2726 = vmatprep.subr.mxu0 0.0
    %2727 = vmatpush1.xpose.msra.mxu0 0.0
    %2728 = vmatprep.subr.mxu0 0.0
    %2729 = vmatpush1.xpose.msra.mxu0 0.0
    %2730 = vmatprep.subr.mxu0 0.0
    %2731 = vmatpush1.xpose.msra.mxu0 0.0
    %2732 = vmatprep.subr.mxu0 0.0
    %2733 = vmatpush1.xpose.msra.mxu0 0.0
    %2734 = vmatprep.subr.mxu0 0.0
    %2735 = vmatpush1.xpose.msra.mxu0 0.0
    %2736 = vmatprep.subr.mxu0 0.0
    %2737 = vmatpush1.xpose.msra.mxu0 0.0
    %2738 = vmatprep.subr.mxu0 0.0
    %2739 = vmatpush1.xpose.msra.mxu0 0.0
    %2740 = vmatprep.subr.mxu0 0.0
    %2741 = vmatpush1.xpose.msra.mxu0 0.0
    %2742 = vmatprep.subr.mxu0 0.0
    %2743 = vmatpush1.xpose.msra.mxu0 0.0
    %2744 = vmatprep.subr.mxu0 0.0
    %2745 = vmatpush1.xpose.msra.mxu0 0.0
    %2746 = vmatprep.subr.mxu0 0.0
    %2747 = vmatpush1.xpose.msra.mxu0 0.0
    %2748 = vmatprep.subr.mxu0 0.0
    %2749 = vmatpush1.xpose.msra.mxu0 0.0
    %2750 = vmatprep.subr.mxu0 0.0
    %2751 = vmatpush1.xpose.msra.mxu0 0.0
    %2752 = vmatprep.subr.mxu0 0.0
    %2753 = vmatpush1.xpose.msra.mxu0 0.0
    %2754 = vmatprep.subr.mxu0 0.0
    %2755 = vmatpush1.xpose.msra.mxu0 0.0
    %2756 = vmatprep.subr.mxu0 0.0
    %2757 = vmatpush1.xpose.msra.mxu0 0.0
    %2758 = vmatprep.subr.mxu0 0.0
    %2759 = vmatpush1.xpose.msra.mxu0 0.0
    %2760 = vmatprep.subr.mxu0 0.0
    %2761 = vmatpush1.xpose.msra.mxu0 0.0
    %2762 = vmatprep.subr.mxu0 0.0
    %2763 = vmatpush1.xpose.msra.mxu0 0.0
    %2764 = vmatprep.subr.mxu0 0.0
    %2765 = vmatpush1.xpose.msra.mxu0 0.0
    %2766 = vmatprep.subr.mxu0 0.0
    %2767 = vmatpush1.xpose.msra.mxu0 0.0
    %2768 = vmatprep.subr.mxu0 0.0
    %2769 = vmatpush1.xpose.msra.mxu0 0.0
    %2770 = vmatprep.subr.mxu0 0.0
    %2771 = vmatpush1.xpose.msra.mxu0 0.0
    %2772 = vmatprep.subr.mxu0 0.0
    %2773 = vmatpush1.xpose.msra.mxu0 0.0
    %2774 = vmatprep.subr.mxu0 0.0
    %2775 = vmatpush1.xpose.msra.mxu0 0.0
    %2776 = vmatprep.subr.mxu0 0.0
    %2777 = vmatpush1.xpose.msra.mxu0 0.0
    %2778 = vmatprep.subr.mxu0 0.0
    %2779 = vmatpush1.xpose.msra.mxu0 0.0
    %2780 = vmatprep.subr.mxu0 0.0
    %2781 = vmatpush1.xpose.msra.mxu0 0.0
    %2782 = vmatprep.subr.mxu0 0.0
    %2783 = vmatpush1.xpose.msra.mxu0 0.0
    %2784 = vmatprep.subr.mxu0 0.0
    %2785 = vmatpush1.xpose.msra.mxu0 0.0
    %2786 = vmatprep.subr.mxu0 0.0
    %2787 = vmatpush1.xpose.msra.mxu0 0.0
    %2788 = vmatprep.mubr.f32.mxu0 0.0
    %2789 = vmatmul.mubr.f32.gmra.mrb[0].mxu0 %v2720
    %v2790 = vpop.f32.mrb[0].mxu0
    %v2791 = vadd.f32 0.0, %v2790
    %v2792 = vpop.f32.mrb[0].mxu0
    %2793 = vdwg.mxu0
    %2794 = vrot.lane.b32.xlu0 %v2335, 96
    %v2795 = vpop.permute.xlu0 %2794
    %v2796 = vsel %vm498, %v2335, 0
    %v2798 = vsel %vm498, %v2795, 0
    %2800 = vmatprep.subr.mxu0 0.0
    %2801 = vmatpush1.xpose.msra.mxu0 %v2798
    %2802 = vmatprep.subr.mxu0 0.0
    %2803 = vmatpush1.xpose.msra.mxu0 0.0
    %2804 = vmatprep.subr.mxu0 0.0
    %2805 = vmatpush1.xpose.msra.mxu0 0.0
    %2806 = vmatprep.subr.mxu0 0.0
    %2807 = vmatpush1.xpose.msra.mxu0 0.0
    %2808 = vmatprep.subr.mxu0 0.0
    %2809 = vmatpush1.xpose.msra.mxu0 0.0
    %2810 = vmatprep.subr.mxu0 0.0
    %2811 = vmatpush1.xpose.msra.mxu0 0.0
    %2812 = vmatprep.subr.mxu0 0.0
    %2813 = vmatpush1.xpose.msra.mxu0 0.0
    %2814 = vmatprep.subr.mxu0 0.0
    %2815 = vmatpush1.xpose.msra.mxu0 0.0
    %2816 = vmatprep.subr.mxu0 0.0
    %2817 = vmatpush1.xpose.msra.mxu0 0.0
    %2818 = vmatprep.subr.mxu0 0.0
    %2819 = vmatpush1.xpose.msra.mxu0 0.0
    %2820 = vmatprep.subr.mxu0 0.0
    %2821 = vmatpush1.xpose.msra.mxu0 0.0
    %2822 = vmatprep.subr.mxu0 0.0
    %2823 = vmatpush1.xpose.msra.mxu0 0.0
    %2824 = vmatprep.subr.mxu0 0.0
    %2825 = vmatpush1.xpose.msra.mxu0 0.0
    %2826 = vmatprep.subr.mxu0 0.0
    %2827 = vmatpush1.xpose.msra.mxu0 0.0
    %2828 = vmatprep.subr.mxu0 0.0
    %2829 = vmatpush1.xpose.msra.mxu0 0.0
    %2830 = vmatprep.subr.mxu0 0.0
    %2831 = vmatpush1.xpose.msra.mxu0 0.0
    %2832 = vmatprep.subr.mxu0 0.0
    %2833 = vmatpush1.xpose.msra.mxu0 0.0
    %2834 = vmatprep.subr.mxu0 0.0
    %2835 = vmatpush1.xpose.msra.mxu0 0.0
    %2836 = vmatprep.subr.mxu0 0.0
    %2837 = vmatpush1.xpose.msra.mxu0 0.0
    %2838 = vmatprep.subr.mxu0 0.0
    %2839 = vmatpush1.xpose.msra.mxu0 0.0
    %2840 = vmatprep.subr.mxu0 0.0
    %2841 = vmatpush1.xpose.msra.mxu0 0.0
    %2842 = vmatprep.subr.mxu0 0.0
    %2843 = vmatpush1.xpose.msra.mxu0 0.0
    %2844 = vmatprep.subr.mxu0 0.0
    %2845 = vmatpush1.xpose.msra.mxu0 0.0
    %2846 = vmatprep.subr.mxu0 0.0
    %2847 = vmatpush1.xpose.msra.mxu0 0.0
    %2848 = vmatprep.subr.mxu0 0.0
    %2849 = vmatpush1.xpose.msra.mxu0 0.0
    %2850 = vmatprep.subr.mxu0 0.0
    %2851 = vmatpush1.xpose.msra.mxu0 0.0
    %2852 = vmatprep.subr.mxu0 0.0
    %2853 = vmatpush1.xpose.msra.mxu0 0.0
    %2854 = vmatprep.subr.mxu0 0.0
    %2855 = vmatpush1.xpose.msra.mxu0 0.0
    %2856 = vmatprep.subr.mxu0 0.0
    %2857 = vmatpush1.xpose.msra.mxu0 0.0
    %2858 = vmatprep.subr.mxu0 0.0
    %2859 = vmatpush1.xpose.msra.mxu0 0.0
    %2860 = vmatprep.subr.mxu0 0.0
    %2861 = vmatpush1.xpose.msra.mxu0 0.0
    %2862 = vmatprep.subr.mxu0 0.0
    %2863 = vmatpush1.xpose.msra.mxu0 0.0
    %2864 = vmatprep.mubr.f32.mxu0 0.0
    %2865 = vmatmul.mubr.f32.gmra.mrb[0].mxu0 %v2796
    %v2866 = vpop.f32.mrb[0].mxu0
    %v2867 = vadd.f32 0.0, %v2866
    %v2868 = vpop.f32.mrb[0].mxu0
    %2869 = vdwg.mxu0
    %2870 = vrot.lane.b32.xlu0 %v2337, 96
    %v2871 = vpop.permute.xlu0 %2870
    %v2872 = vsel %vm498, %v2337, 0
    %v2874 = vsel %vm498, %v2871, 0
    %2876 = vmatprep.subr.mxu0 0.0
    %2877 = vmatpush1.xpose.msra.mxu0 %v2874
    %2878 = vmatprep.subr.mxu0 0.0
    %2879 = vmatpush1.xpose.msra.mxu0 0.0
    %2880 = vmatprep.subr.mxu0 0.0
    %2881 = vmatpush1.xpose.msra.mxu0 0.0
    %2882 = vmatprep.subr.mxu0 0.0
    %2883 = vmatpush1.xpose.msra.mxu0 0.0
    %2884 = vmatprep.subr.mxu0 0.0
    %2885 = vmatpush1.xpose.msra.mxu0 0.0
    %2886 = vmatprep.subr.mxu0 0.0
    %2887 = vmatpush1.xpose.msra.mxu0 0.0
    %2888 = vmatprep.subr.mxu0 0.0
    %2889 = vmatpush1.xpose.msra.mxu0 0.0
    %2890 = vmatprep.subr.mxu0 0.0
    %2891 = vmatpush1.xpose.msra.mxu0 0.0
    %2892 = vmatprep.subr.mxu0 0.0
    %2893 = vmatpush1.xpose.msra.mxu0 0.0
    %2894 = vmatprep.subr.mxu0 0.0
    %2895 = vmatpush1.xpose.msra.mxu0 0.0
    %2896 = vmatprep.subr.mxu0 0.0
    %2897 = vmatpush1.xpose.msra.mxu0 0.0
    %2898 = vmatprep.subr.mxu0 0.0
    %2899 = vmatpush1.xpose.msra.mxu0 0.0
    %2900 = vmatprep.subr.mxu0 0.0
    %2901 = vmatpush1.xpose.msra.mxu0 0.0
    %2902 = vmatprep.subr.mxu0 0.0
    %2903 = vmatpush1.xpose.msra.mxu0 0.0
    %2904 = vmatprep.subr.mxu0 0.0
    %2905 = vmatpush1.xpose.msra.mxu0 0.0
    %2906 = vmatprep.subr.mxu0 0.0
    %2907 = vmatpush1.xpose.msra.mxu0 0.0
    %2908 = vmatprep.subr.mxu0 0.0
    %2909 = vmatpush1.xpose.msra.mxu0 0.0
    %2910 = vmatprep.subr.mxu0 0.0
    %2911 = vmatpush1.xpose.msra.mxu0 0.0
    %2912 = vmatprep.subr.mxu0 0.0
    %2913 = vmatpush1.xpose.msra.mxu0 0.0
    %2914 = vmatprep.subr.mxu0 0.0
    %2915 = vmatpush1.xpose.msra.mxu0 0.0
    %2916 = vmatprep.subr.mxu0 0.0
    %2917 = vmatpush1.xpose.msra.mxu0 0.0
    %2918 = vmatprep.subr.mxu0 0.0
    %2919 = vmatpush1.xpose.msra.mxu0 0.0
    %2920 = vmatprep.subr.mxu0 0.0
    %2921 = vmatpush1.xpose.msra.mxu0 0.0
    %2922 = vmatprep.subr.mxu0 0.0
    %2923 = vmatpush1.xpose.msra.mxu0 0.0
    %2924 = vmatprep.subr.mxu0 0.0
    %2925 = vmatpush1.xpose.msra.mxu0 0.0
    %2926 = vmatprep.subr.mxu0 0.0
    %2927 = vmatpush1.xpose.msra.mxu0 0.0
    %2928 = vmatprep.subr.mxu0 0.0
    %2929 = vmatpush1.xpose.msra.mxu0 0.0
    %2930 = vmatprep.subr.mxu0 0.0
    %2931 = vmatpush1.xpose.msra.mxu0 0.0
    %2932 = vmatprep.subr.mxu0 0.0
    %2933 = vmatpush1.xpose.msra.mxu0 0.0
    %2934 = vmatprep.subr.mxu0 0.0
    %2935 = vmatpush1.xpose.msra.mxu0 0.0
    %2936 = vmatprep.subr.mxu0 0.0
    %2937 = vmatpush1.xpose.msra.mxu0 0.0
    %2938 = vmatprep.subr.mxu0 0.0
    %2939 = vmatpush1.xpose.msra.mxu0 0.0
    %2940 = vmatprep.mubr.f32.mxu0 0.0
    %2941 = vmatmul.mubr.f32.gmra.mrb[0].mxu0 %v2872
    %v2942 = vpop.f32.mrb[0].mxu0
    %v2943 = vadd.f32 0.0, %v2942
    %v2944 = vpop.f32.mrb[0].mxu0
    %2945 = vdwg.mxu0
    %v2946 = vmul.f32 %v2411, 0.35355338
    %v2947 = vmul.f32 %v2487, 0.35355338
    %v2948 = vmul.f32 %v2563, 0.35355338
    %v2949 = vmul.f32 %v2639, 0.35355338
    %v2950 = vmul.f32 %v2715, 0.35355338
    %v2951 = vmul.f32 %v2791, 0.35355338
    %v2952 = vmul.f32 %v2867, 0.35355338
    %v2953 = vmul.f32 %v2943, 0.35355338
    %v2954 = vsel %vm498, %v2946, -inf
    %2955 = vmax.xlane.f32.xlu0 %v2954
    %v2956 = vpop.xlane.xlu0 %2955
    %v2957 = vsel %vm498, %v2947, -inf
    %2958 = vmax.xlane.f32.xlu0 %v2957
    %v2959 = vpop.xlane.xlu0 %2958
    %v2960 = vsel %vm498, %v2948, -inf
    %2961 = vmax.xlane.f32.xlu0 %v2960
    %v2962 = vpop.xlane.xlu0 %2961
    %v2963 = vsel %vm498, %v2949, -inf
    %2964 = vmax.xlane.f32.xlu0 %v2963
    %v2965 = vpop.xlane.xlu0 %2964
    %v2966 = vsel %vm498, %v2950, -inf
    %2967 = vmax.xlane.f32.xlu0 %v2966
    %v2968 = vpop.xlane.xlu0 %2967
    %v2969 = vsel %vm498, %v2951, -inf
    %2970 = vmax.xlane.f32.xlu0 %v2969
    %v2971 = vpop.xlane.xlu0 %2970
    %v2972 = vsel %vm498, %v2952, -inf
    %2973 = vmax.xlane.f32.xlu0 %v2972
    %v2974 = vpop.xlane.xlu0 %2973
    %v2975 = vsel %vm498, %v2953, -inf
    %2976 = vmax.xlane.f32.xlu0 %v2975
    %v2977 = vpop.xlane.xlu0 %2976
    %v2978 = vsub.f32 %v2946, %v2956
    %v2979 = vsub.f32 %v2947, %v2959
    %v2980 = vsub.f32 %v2948, %v2962
    %v2981 = vsub.f32 %v2949, %v2965
    %v2982 = vsub.f32 %v2950, %v2968
    %v2983 = vsub.f32 %v2951, %v2971
    %v2984 = vsub.f32 %v2952, %v2974
    %v2985 = vsub.f32 %v2953, %v2977
    %v2986 = vmul.f32 %v2978, 1.442695
    %v2987 = vpow.pop %v2986
    %v2988 = vmul.f32 %v2979, 1.442695
    %v2989 = vpow.pop %v2988
    %v2990 = vmul.f32 %v2980, 1.442695
    %v2991 = vpow.pop %v2990
    %v2992 = vmul.f32 %v2981, 1.442695
    %v2993 = vpow.pop %v2992
    %v2994 = vmul.f32 %v2982, 1.442695
    %v2995 = vpow.pop %v2994
    %v2996 = vmul.f32 %v2983, 1.442695
    %v2997 = vpow.pop %v2996
    %v2998 = vmul.f32 %v2984, 1.442695
    %v2999 = vpow.pop %v2998
    %v3000 = vmul.f32 %v2985, 1.442695
    %v3001 = vpow.pop %v3000
    %v3002 = vsel %vm498, %v2987, 0.0
    %3003 = vadd.xlane.f32.xlu0 %v3002
    %v3004 = vpop.xlane.xlu0 %3003
    %v3005 = vsel %vm498, %v2989, 0.0
    %3006 = vadd.xlane.f32.xlu0 %v3005
    %v3007 = vpop.xlane.xlu0 %3006
    %v3008 = vsel %vm498, %v2991, 0.0
    %3009 = vadd.xlane.f32.xlu0 %v3008
    %v3010 = vpop.xlane.xlu0 %3009
    %v3011 = vsel %vm498, %v2993, 0.0
    %3012 = vadd.xlane.f32.xlu0 %v3011
    %v3013 = vpop.xlane.xlu0 %3012
    %v3014 = vsel %vm498, %v2995, 0.0
    %3015 = vadd.xlane.f32.xlu0 %v3014
    %v3016 = vpop.xlane.xlu0 %3015
    %v3017 = vsel %vm498, %v2997, 0.0
    %3018 = vadd.xlane.f32.xlu0 %v3017
    %v3019 = vpop.xlane.xlu0 %3018
    %v3020 = vsel %vm498, %v2999, 0.0
    %3021 = vadd.xlane.f32.xlu0 %v3020
    %v3022 = vpop.xlane.xlu0 %3021
    %v3023 = vsel %vm498, %v3001, 0.0
    %3024 = vadd.xlane.f32.xlu0 %v3023
    %v3025 = vpop.xlane.xlu0 %3024
    %v3026 = vrcp.pop %v3004
    %v3027 = vrcp.pop %v3007
    %v3028 = vrcp.pop %v3010
    %v3029 = vrcp.pop %v3013
    %v3030 = vrcp.pop %v3016
    %v3031 = vrcp.pop %v3019
    %v3032 = vrcp.pop %v3022
    %v3033 = vrcp.pop %v3025
    %v3034 = vmul.f32 %v2987, %v3026
    %v3035 = vmul.f32 %v2989, %v3027
    %v3036 = vmul.f32 %v2991, %v3028
    %v3037 = vmul.f32 %v2993, %v3029
    %v3038 = vmul.f32 %v2995, %v3030
    %v3039 = vmul.f32 %v2997, %v3031
    %v3040 = vmul.f32 %v2999, %v3032
    %v3041 = vmul.f32 %v3001, %v3033
    %3042 = vrot.lane.b32.xlu0 %v2316, 64
    %v3043 = vpop.permute.xlu0 %3042
    %v3046 = vsel %vm498, %v3034, 0
    %3048 = vmatprep.subr.mxu0 0.0
    %3049 = vmatpush1.msra.mxu0 %v3043
    %3050 = vmatprep.subr.mxu0 0.0
    %3051 = vmatpush1.msra.mxu0 0.0
    %3052 = vmatprep.subr.mxu0 0.0
    %3053 = vmatpush1.msra.mxu0 0.0
    %3054 = vmatprep.subr.mxu0 0.0
    %3055 = vmatpush1.msra.mxu0 0.0
    %3056 = vmatprep.subr.mxu0 0.0
    %3057 = vmatpush1.msra.mxu0 0.0
    %3058 = vmatprep.subr.mxu0 0.0
    %3059 = vmatpush1.msra.mxu0 0.0
    %3060 = vmatprep.subr.mxu0 0.0
    %3061 = vmatpush1.msra.mxu0 0.0
    %3062 = vmatprep.subr.mxu0 0.0
    %3063 = vmatpush1.msra.mxu0 0.0
    %3064 = vmatprep.subr.mxu0 0.0
    %3065 = vmatpush1.msra.mxu0 0.0
    %3066 = vmatprep.subr.mxu0 0.0
    %3067 = vmatpush1.msra.mxu0 0.0
    %3068 = vmatprep.subr.mxu0 0.0
    %3069 = vmatpush1.msra.mxu0 0.0
    %3070 = vmatprep.subr.mxu0 0.0
    %3071 = vmatpush1.msra.mxu0 0.0
    %3072 = vmatprep.subr.mxu0 0.0
    %3073 = vmatpush1.msra.mxu0 0.0
    %3074 = vmatprep.subr.mxu0 0.0
    %3075 = vmatpush1.msra.mxu0 0.0
    %3076 = vmatprep.subr.mxu0 0.0
    %3077 = vmatpush1.msra.mxu0 0.0
    %3078 = vmatprep.subr.mxu0 0.0
    %3079 = vmatpush1.msra.mxu0 0.0
    %3080 = vmatprep.subr.mxu0 0.0
    %3081 = vmatpush1.msra.mxu0 0.0
    %3082 = vmatprep.subr.mxu0 0.0
    %3083 = vmatpush1.msra.mxu0 0.0
    %3084 = vmatprep.subr.mxu0 0.0
    %3085 = vmatpush1.msra.mxu0 0.0
    %3086 = vmatprep.subr.mxu0 0.0
    %3087 = vmatpush1.msra.mxu0 0.0
    %3088 = vmatprep.subr.mxu0 0.0
    %3089 = vmatpush1.msra.mxu0 0.0
    %3090 = vmatprep.subr.mxu0 0.0
    %3091 = vmatpush1.msra.mxu0 0.0
    %3092 = vmatprep.subr.mxu0 0.0
    %3093 = vmatpush1.msra.mxu0 0.0
    %3094 = vmatprep.subr.mxu0 0.0
    %3095 = vmatpush1.msra.mxu0 0.0
    %3096 = vmatprep.subr.mxu0 0.0
    %3097 = vmatpush1.msra.mxu0 0.0
    %3098 = vmatprep.subr.mxu0 0.0
    %3099 = vmatpush1.msra.mxu0 0.0
    %3100 = vmatprep.subr.mxu0 0.0
    %3101 = vmatpush1.msra.mxu0 0.0
    %3102 = vmatprep.subr.mxu0 0.0
    %3103 = vmatpush1.msra.mxu0 0.0
    %3104 = vmatprep.subr.mxu0 0.0
    %3105 = vmatpush1.msra.mxu0 0.0
    %3106 = vmatprep.subr.mxu0 0.0
    %3107 = vmatpush1.msra.mxu0 0.0
    %3108 = vmatprep.subr.mxu0 0.0
    %3109 = vmatpush1.msra.mxu0 0.0
    %3110 = vmatprep.subr.mxu0 0.0
    %3111 = vmatpush1.msra.mxu0 0.0
    %3112 = vmatprep.mubr.f32.mxu0 0.0
    %3113 = vmatmul.mubr.f32.gmra.mrb[0].mxu0 %v3046
    %v3114 = vpop.f32.mrb[0].mxu0
    %v3115 = vadd.f32 0.0, %v3114
    %v3116 = vpop.f32.mrb[0].mxu0
    %3117 = vdwg.mxu0
    %3118 = vrot.lane.b32.xlu0 %v2321, 64
    %v3119 = vpop.permute.xlu0 %3118
    %v3122 = vsel %vm498, %v3035, 0
    %3124 = vmatprep.subr.mxu0 0.0
    %3125 = vmatpush1.msra.mxu0 %v3119
    %3126 = vmatprep.subr.mxu0 0.0
    %3127 = vmatpush1.msra.mxu0 0.0
    %3128 = vmatprep.subr.mxu0 0.0
    %3129 = vmatpush1.msra.mxu0 0.0
    %3130 = vmatprep.subr.mxu0 0.0
    %3131 = vmatpush1.msra.mxu0 0.0
    %3132 = vmatprep.subr.mxu0 0.0
    %3133 = vmatpush1.msra.mxu0 0.0
    %3134 = vmatprep.subr.mxu0 0.0
    %3135 = vmatpush1.msra.mxu0 0.0
    %3136 = vmatprep.subr.mxu0 0.0
    %3137 = vmatpush1.msra.mxu0 0.0
    %3138 = vmatprep.subr.mxu0 0.0
    %3139 = vmatpush1.msra.mxu0 0.0
    %3140 = vmatprep.subr.mxu0 0.0
    %3141 = vmatpush1.msra.mxu0 0.0
    %3142 = vmatprep.subr.mxu0 0.0
    %3143 = vmatpush1.msra.mxu0 0.0
    %3144 = vmatprep.subr.mxu0 0.0
    %3145 = vmatpush1.msra.mxu0 0.0
    %3146 = vmatprep.subr.mxu0 0.0
    %3147 = vmatpush1.msra.mxu0 0.0
    %3148 = vmatprep.subr.mxu0 0.0
    %3149 = vmatpush1.msra.mxu0 0.0
    %3150 = vmatprep.subr.mxu0 0.0
    %3151 = vmatpush1.msra.mxu0 0.0
    %3152 = vmatprep.subr.mxu0 0.0
    %3153 = vmatpush1.msra.mxu0 0.0
    %3154 = vmatprep.subr.mxu0 0.0
    %3155 = vmatpush1.msra.mxu0 0.0
    %3156 = vmatprep.subr.mxu0 0.0
    %3157 = vmatpush1.msra.mxu0 0.0
    %3158 = vmatprep.subr.mxu0 0.0
    %3159 = vmatpush1.msra.mxu0 0.0
    %3160 = vmatprep.subr.mxu0 0.0
    %3161 = vmatpush1.msra.mxu0 0.0
    %3162 = vmatprep.subr.mxu0 0.0
    %3163 = vmatpush1.msra.mxu0 0.0
    %3164 = vmatprep.subr.mxu0 0.0
    %3165 = vmatpush1.msra.mxu0 0.0
    %3166 = vmatprep.subr.mxu0 0.0
    %3167 = vmatpush1.msra.mxu0 0.0
    %3168 = vmatprep.subr.mxu0 0.0
    %3169 = vmatpush1.msra.mxu0 0.0
    %3170 = vmatprep.subr.mxu0 0.0
    %3171 = vmatpush1.msra.mxu0 0.0
    %3172 = vmatprep.subr.mxu0 0.0
    %3173 = vmatpush1.msra.mxu0 0.0
    %3174 = vmatprep.subr.mxu0 0.0
    %3175 = vmatpush1.msra.mxu0 0.0
    %3176 = vmatprep.subr.mxu0 0.0
    %3177 = vmatpush1.msra.mxu0 0.0
    %3178 = vmatprep.subr.mxu0 0.0
    %3179 = vmatpush1.msra.mxu0 0.0
    %3180 = vmatprep.subr.mxu0 0.0
    %3181 = vmatpush1.msra.mxu0 0.0
    %3182 = vmatprep.subr.mxu0 0.0
    %3183 = vmatpush1.msra.mxu0 0.0
    %3184 = vmatprep.subr.mxu0 0.0
    %3185 = vmatpush1.msra.mxu0 0.0
    %3186 = vmatprep.subr.mxu0 0.0
    %3187 = vmatpush1.msra.mxu0 0.0
    %3188 = vmatprep.mubr.f32.mxu0 0.0
    %3189 = vmatmul.mubr.f32.gmra.mrb[0].mxu0 %v3122
    %v3190 = vpop.f32.mrb[0].mxu0
    %v3191 = vadd.f32 0.0, %v3190
    %v3192 = vpop.f32.mrb[0].mxu0
    %3193 = vdwg.mxu0
    %3194 = vrot.lane.b32.xlu0 %v2327, 64
    %v3195 = vpop.permute.xlu0 %3194
    %v3198 = vsel %vm498, %v3036, 0
    %3200 = vmatprep.subr.mxu0 0.0
    %3201 = vmatpush1.msra.mxu0 %v3195
    %3202 = vmatprep.subr.mxu0 0.0
    %3203 = vmatpush1.msra.mxu0 0.0
    %3204 = vmatprep.subr.mxu0 0.0
    %3205 = vmatpush1.msra.mxu0 0.0
    %3206 = vmatprep.subr.mxu0 0.0
    %3207 = vmatpush1.msra.mxu0 0.0
    %3208 = vmatprep.subr.mxu0 0.0
    %3209 = vmatpush1.msra.mxu0 0.0
    %3210 = vmatprep.subr.mxu0 0.0
    %3211 = vmatpush1.msra.mxu0 0.0
    %3212 = vmatprep.subr.mxu0 0.0
    %3213 = vmatpush1.msra.mxu0 0.0
    %3214 = vmatprep.subr.mxu0 0.0
    %3215 = vmatpush1.msra.mxu0 0.0
    %3216 = vmatprep.subr.mxu0 0.0
    %3217 = vmatpush1.msra.mxu0 0.0
    %3218 = vmatprep.subr.mxu0 0.0
    %3219 = vmatpush1.msra.mxu0 0.0
    %3220 = vmatprep.subr.mxu0 0.0
    %3221 = vmatpush1.msra.mxu0 0.0
    %3222 = vmatprep.subr.mxu0 0.0
    %3223 = vmatpush1.msra.mxu0 0.0
    %3224 = vmatprep.subr.mxu0 0.0
    %3225 = vmatpush1.msra.mxu0 0.0
    %3226 = vmatprep.subr.mxu0 0.0
    %3227 = vmatpush1.msra.mxu0 0.0
    %3228 = vmatprep.subr.mxu0 0.0
    %3229 = vmatpush1.msra.mxu0 0.0
    %3230 = vmatprep.subr.mxu0 0.0
    %3231 = vmatpush1.msra.mxu0 0.0
    %3232 = vmatprep.subr.mxu0 0.0
    %3233 = vmatpush1.msra.mxu0 0.0
    %3234 = vmatprep.subr.mxu0 0.0
    %3235 = vmatpush1.msra.mxu0 0.0
    %3236 = vmatprep.subr.mxu0 0.0
    %3237 = vmatpush1.msra.mxu0 0.0
    %3238 = vmatprep.subr.mxu0 0.0
    %3239 = vmatpush1.msra.mxu0 0.0
    %3240 = vmatprep.subr.mxu0 0.0
    %3241 = vmatpush1.msra.mxu0 0.0
    %3242 = vmatprep.subr.mxu0 0.0
    %3243 = vmatpush1.msra.mxu0 0.0
    %3244 = vmatprep.subr.mxu0 0.0
    %3245 = vmatpush1.msra.mxu0 0.0
    %3246 = vmatprep.subr.mxu0 0.0
    %3247 = vmatpush1.msra.mxu0 0.0
    %3248 = vmatprep.subr.mxu0 0.0
    %3249 = vmatpush1.msra.mxu0 0.0
    %3250 = vmatprep.subr.mxu0 0.0
    %3251 = vmatpush1.msra.mxu0 0.0
    %3252 = vmatprep.subr.mxu0 0.0
    %3253 = vmatpush1.msra.mxu0 0.0
    %3254 = vmatprep.subr.mxu0 0.0
    %3255 = vmatpush1.msra.mxu0 0.0
    %3256 = vmatprep.subr.mxu0 0.0
    %3257 = vmatpush1.msra.mxu0 0.0
    %3258 = vmatprep.subr.mxu0 0.0
    %3259 = vmatpush1.msra.mxu0 0.0
    %3260 = vmatprep.subr.mxu0 0.0
    %3261 = vmatpush1.msra.mxu0 0.0
    %3262 = vmatprep.subr.mxu0 0.0
    %3263 = vmatpush1.msra.mxu0 0.0
    %3264 = vmatprep.mubr.f32.mxu0 0.0
    %3265 = vmatmul.mubr.f32.gmra.mrb[0].mxu0 %v3198
    %v3266 = vpop.f32.mrb[0].mxu0
    %v3267 = vadd.f32 0.0, %v3266
    %v3268 = vpop.f32.mrb[0].mxu0
    %3269 = vdwg.mxu0
    %3270 = vrot.lane.b32.xlu0 %v2329, 64
    %v3271 = vpop.permute.xlu0 %3270
    %v3274 = vsel %vm498, %v3037, 0
    %3276 = vmatprep.subr.mxu0 0.0
    %3277 = vmatpush1.msra.mxu0 %v3271
    %3278 = vmatprep.subr.mxu0 0.0
    %3279 = vmatpush1.msra.mxu0 0.0
    %3280 = vmatprep.subr.mxu0 0.0
    %3281 = vmatpush1.msra.mxu0 0.0
    %3282 = vmatprep.subr.mxu0 0.0
    %3283 = vmatpush1.msra.mxu0 0.0
    %3284 = vmatprep.subr.mxu0 0.0
    %3285 = vmatpush1.msra.mxu0 0.0
    %3286 = vmatprep.subr.mxu0 0.0
    %3287 = vmatpush1.msra.mxu0 0.0
    %3288 = vmatprep.subr.mxu0 0.0
    %3289 = vmatpush1.msra.mxu0 0.0
    %3290 = vmatprep.subr.mxu0 0.0
    %3291 = vmatpush1.msra.mxu0 0.0
    %3292 = vmatprep.subr.mxu0 0.0
    %3293 = vmatpush1.msra.mxu0 0.0
    %3294 = vmatprep.subr.mxu0 0.0
    %3295 = vmatpush1.msra.mxu0 0.0
    %3296 = vmatprep.subr.mxu0 0.0
    %3297 = vmatpush1.msra.mxu0 0.0
    %3298 = vmatprep.subr.mxu0 0.0
    %3299 = vmatpush1.msra.mxu0 0.0
    %3300 = vmatprep.subr.mxu0 0.0
    %3301 = vmatpush1.msra.mxu0 0.0
    %3302 = vmatprep.subr.mxu0 0.0
    %3303 = vmatpush1.msra.mxu0 0.0
    %3304 = vmatprep.subr.mxu0 0.0
    %3305 = vmatpush1.msra.mxu0 0.0
    %3306 = vmatprep.subr.mxu0 0.0
    %3307 = vmatpush1.msra.mxu0 0.0
    %3308 = vmatprep.subr.mxu0 0.0
    %3309 = vmatpush1.msra.mxu0 0.0
    %3310 = vmatprep.subr.mxu0 0.0
    %3311 = vmatpush1.msra.mxu0 0.0
    %3312 = vmatprep.subr.mxu0 0.0
    %3313 = vmatpush1.msra.mxu0 0.0
    %3314 = vmatprep.subr.mxu0 0.0
    %3315 = vmatpush1.msra.mxu0 0.0
    %3316 = vmatprep.subr.mxu0 0.0
    %3317 = vmatpush1.msra.mxu0 0.0
    %3318 = vmatprep.subr.mxu0 0.0
    %3319 = vmatpush1.msra.mxu0 0.0
    %3320 = vmatprep.subr.mxu0 0.0
    %3321 = vmatpush1.msra.mxu0 0.0
    %3322 = vmatprep.subr.mxu0 0.0
    %3323 = vmatpush1.msra.mxu0 0.0
    %3324 = vmatprep.subr.mxu0 0.0
    %3325 = vmatpush1.msra.mxu0 0.0
    %3326 = vmatprep.subr.mxu0 0.0
    %3327 = vmatpush1.msra.mxu0 0.0
    %3328 = vmatprep.subr.mxu0 0.0
    %3329 = vmatpush1.msra.mxu0 0.0
    %3330 = vmatprep.subr.mxu0 0.0
    %3331 = vmatpush1.msra.mxu0 0.0
    %3332 = vmatprep.subr.mxu0 0.0
    %3333 = vmatpush1.msra.mxu0 0.0
    %3334 = vmatprep.subr.mxu0 0.0
    %3335 = vmatpush1.msra.mxu0 0.0
    %3336 = vmatprep.subr.mxu0 0.0
    %3337 = vmatpush1.msra.mxu0 0.0
    %3338 = vmatprep.subr.mxu0 0.0
    %3339 = vmatpush1.msra.mxu0 0.0
    %3340 = vmatprep.mubr.f32.mxu0 0.0
    %3341 = vmatmul.mubr.f32.gmra.mrb[0].mxu0 %v3274
    %v3342 = vpop.f32.mrb[0].mxu0
    %v3343 = vadd.f32 0.0, %v3342
    %v3344 = vpop.f32.mrb[0].mxu0
    %3345 = vdwg.mxu0
    %3346 = vrot.lane.b32.xlu0 %v2331, 64
    %v3347 = vpop.permute.xlu0 %3346
    %v3350 = vsel %vm498, %v3038, 0
    %3352 = vmatprep.subr.mxu0 0.0
    %3353 = vmatpush1.msra.mxu0 %v3347
    %3354 = vmatprep.subr.mxu0 0.0
    %3355 = vmatpush1.msra.mxu0 0.0
    %3356 = vmatprep.subr.mxu0 0.0
    %3357 = vmatpush1.msra.mxu0 0.0
    %3358 = vmatprep.subr.mxu0 0.0
    %3359 = vmatpush1.msra.mxu0 0.0
    %3360 = vmatprep.subr.mxu0 0.0
    %3361 = vmatpush1.msra.mxu0 0.0
    %3362 = vmatprep.subr.mxu0 0.0
    %3363 = vmatpush1.msra.mxu0 0.0
    %3364 = vmatprep.subr.mxu0 0.0
    %3365 = vmatpush1.msra.mxu0 0.0
    %3366 = vmatprep.subr.mxu0 0.0
    %3367 = vmatpush1.msra.mxu0 0.0
    %3368 = vmatprep.subr.mxu0 0.0
    %3369 = vmatpush1.msra.mxu0 0.0
    %3370 = vmatprep.subr.mxu0 0.0
    %3371 = vmatpush1.msra.mxu0 0.0
    %3372 = vmatprep.subr.mxu0 0.0
    %3373 = vmatpush1.msra.mxu0 0.0
    %3374 = vmatprep.subr.mxu0 0.0
    %3375 = vmatpush1.msra.mxu0 0.0
    %3376 = vmatprep.subr.mxu0 0.0
    %3377 = vmatpush1.msra.mxu0 0.0
    %3378 = vmatprep.subr.mxu0 0.0
    %3379 = vmatpush1.msra.mxu0 0.0
    %3380 = vmatprep.subr.mxu0 0.0
    %3381 = vmatpush1.msra.mxu0 0.0
    %3382 = vmatprep.subr.mxu0 0.0
    %3383 = vmatpush1.msra.mxu0 0.0
    %3384 = vmatprep.subr.mxu0 0.0
    %3385 = vmatpush1.msra.mxu0 0.0
    %3386 = vmatprep.subr.mxu0 0.0
    %3387 = vmatpush1.msra.mxu0 0.0
    %3388 = vmatprep.subr.mxu0 0.0
    %3389 = vmatpush1.msra.mxu0 0.0
    %3390 = vmatprep.subr.mxu0 0.0
    %3391 = vmatpush1.msra.mxu0 0.0
    %3392 = vmatprep.subr.mxu0 0.0
    %3393 = vmatpush1.msra.mxu0 0.0
    %3394 = vmatprep.subr.mxu0 0.0
    %3395 = vmatpush1.msra.mxu0 0.0
    %3396 = vmatprep.subr.mxu0 0.0
    %3397 = vmatpush1.msra.mxu0 0.0
    %3398 = vmatprep.subr.mxu0 0.0
    %3399 = vmatpush1.msra.mxu0 0.0
    %3400 = vmatprep.subr.mxu0 0.0
    %3401 = vmatpush1.msra.mxu0 0.0
    %3402 = vmatprep.subr.mxu0 0.0
    %3403 = vmatpush1.msra.mxu0 0.0
    %3404 = vmatprep.subr.mxu0 0.0
    %3405 = vmatpush1.msra.mxu0 0.0
    %3406 = vmatprep.subr.mxu0 0.0
    %3407 = vmatpush1.msra.mxu0 0.0
    %3408 = vmatprep.subr.mxu0 0.0
    %3409 = vmatpush1.msra.mxu0 0.0
    %3410 = vmatprep.subr.mxu0 0.0
    %3411 = vmatpush1.msra.mxu0 0.0
    %3412 = vmatprep.subr.mxu0 0.0
    %3413 = vmatpush1.msra.mxu0 0.0
    %3414 = vmatprep.subr.mxu0 0.0
    %3415 = vmatpush1.msra.mxu0 0.0
    %3416 = vmatprep.mubr.f32.mxu0 0.0
    %3417 = vmatmul.mubr.f32.gmra.mrb[0].mxu0 %v3350
    %v3418 = vpop.f32.mrb[0].mxu0
    %v3419 = vadd.f32 0.0, %v3418
    %v3420 = vpop.f32.mrb[0].mxu0
    %3421 = vdwg.mxu0
    %3422 = vrot.lane.b32.xlu0 %v2333, 64
    %v3423 = vpop.permute.xlu0 %3422
    %v3426 = vsel %vm498, %v3039, 0
    %3428 = vmatprep.subr.mxu0 0.0
    %3429 = vmatpush1.msra.mxu0 %v3423
    %3430 = vmatprep.subr.mxu0 0.0
    %3431 = vmatpush1.msra.mxu0 0.0
    %3432 = vmatprep.subr.mxu0 0.0
    %3433 = vmatpush1.msra.mxu0 0.0
    %3434 = vmatprep.subr.mxu0 0.0
    %3435 = vmatpush1.msra.mxu0 0.0
    %3436 = vmatprep.subr.mxu0 0.0
    %3437 = vmatpush1.msra.mxu0 0.0
    %3438 = vmatprep.subr.mxu0 0.0
    %3439 = vmatpush1.msra.mxu0 0.0
    %3440 = vmatprep.subr.mxu0 0.0
    %3441 = vmatpush1.msra.mxu0 0.0
    %3442 = vmatprep.subr.mxu0 0.0
    %3443 = vmatpush1.msra.mxu0 0.0
    %3444 = vmatprep.subr.mxu0 0.0
    %3445 = vmatpush1.msra.mxu0 0.0
    %3446 = vmatprep.subr.mxu0 0.0
    %3447 = vmatpush1.msra.mxu0 0.0
    %3448 = vmatprep.subr.mxu0 0.0
    %3449 = vmatpush1.msra.mxu0 0.0
    %3450 = vmatprep.subr.mxu0 0.0
    %3451 = vmatpush1.msra.mxu0 0.0
    %3452 = vmatprep.subr.mxu0 0.0
    %3453 = vmatpush1.msra.mxu0 0.0
    %3454 = vmatprep.subr.mxu0 0.0
    %3455 = vmatpush1.msra.mxu0 0.0
    %3456 = vmatprep.subr.mxu0 0.0
    %3457 = vmatpush1.msra.mxu0 0.0
    %3458 = vmatprep.subr.mxu0 0.0
    %3459 = vmatpush1.msra.mxu0 0.0
    %3460 = vmatprep.subr.mxu0 0.0
    %3461 = vmatpush1.msra.mxu0 0.0
    %3462 = vmatprep.subr.mxu0 0.0
    %3463 = vmatpush1.msra.mxu0 0.0
    %3464 = vmatprep.subr.mxu0 0.0
    %3465 = vmatpush1.msra.mxu0 0.0
    %3466 = vmatprep.subr.mxu0 0.0
    %3467 = vmatpush1.msra.mxu0 0.0
    %3468 = vmatprep.subr.mxu0 0.0
    %3469 = vmatpush1.msra.mxu0 0.0
    %3470 = vmatprep.subr.mxu0 0.0
    %3471 = vmatpush1.msra.mxu0 0.0
    %3472 = vmatprep.subr.mxu0 0.0
    %3473 = vmatpush1.msra.mxu0 0.0
    %3474 = vmatprep.subr.mxu0 0.0
    %3475 = vmatpush1.msra.mxu0 0.0
    %3476 = vmatprep.subr.mxu0 0.0
    %3477 = vmatpush1.msra.mxu0 0.0
    %3478 = vmatprep.subr.mxu0 0.0
    %3479 = vmatpush1.msra.mxu0 0.0
    %3480 = vmatprep.subr.mxu0 0.0
    %3481 = vmatpush1.msra.mxu0 0.0
    %3482 = vmatprep.subr.mxu0 0.0
    %3483 = vmatpush1.msra.mxu0 0.0
    %3484 = vmatprep.subr.mxu0 0.0
    %3485 = vmatpush1.msra.mxu0 0.0
    %3486 = vmatprep.subr.mxu0 0.0
    %3487 = vmatpush1.msra.mxu0 0.0
    %3488 = vmatprep.subr.mxu0 0.0
    %3489 = vmatpush1.msra.mxu0 0.0
    %3490 = vmatprep.subr.mxu0 0.0
    %3491 = vmatpush1.msra.mxu0 0.0
    %3492 = vmatprep.mubr.f32.mxu0 0.0
    %3493 = vmatmul.mubr.f32.gmra.mrb[0].mxu0 %v3426
    %v3494 = vpop.f32.mrb[0].mxu0
    %v3495 = vadd.f32 0.0, %v3494
    %v3496 = vpop.f32.mrb[0].mxu0
    %3497 = vdwg.mxu0
    %3498 = vrot.lane.b32.xlu0 %v2335, 64
    %v3499 = vpop.permute.xlu0 %3498
    %v3502 = vsel %vm498, %v3040, 0
    %3504 = vmatprep.subr.mxu0 0.0
    %3505 = vmatpush1.msra.mxu0 %v3499
    %3506 = vmatprep.subr.mxu0 0.0
    %3507 = vmatpush1.msra.mxu0 0.0
    %3508 = vmatprep.subr.mxu0 0.0
    %3509 = vmatpush1.msra.mxu0 0.0
    %3510 = vmatprep.subr.mxu0 0.0
    %3511 = vmatpush1.msra.mxu0 0.0
    %3512 = vmatprep.subr.mxu0 0.0
    %3513 = vmatpush1.msra.mxu0 0.0
    %3514 = vmatprep.subr.mxu0 0.0
    %3515 = vmatpush1.msra.mxu0 0.0
    %3516 = vmatprep.subr.mxu0 0.0
    %3517 = vmatpush1.msra.mxu0 0.0
    %3518 = vmatprep.subr.mxu0 0.0
    %3519 = vmatpush1.msra.mxu0 0.0
    %3520 = vmatprep.subr.mxu0 0.0
    %3521 = vmatpush1.msra.mxu0 0.0
    %3522 = vmatprep.subr.mxu0 0.0
    %3523 = vmatpush1.msra.mxu0 0.0
    %3524 = vmatprep.subr.mxu0 0.0
    %3525 = vmatpush1.msra.mxu0 0.0
    %3526 = vmatprep.subr.mxu0 0.0
    %3527 = vmatpush1.msra.mxu0 0.0
    %3528 = vmatprep.subr.mxu0 0.0
    %3529 = vmatpush1.msra.mxu0 0.0
    %3530 = vmatprep.subr.mxu0 0.0
    %3531 = vmatpush1.msra.mxu0 0.0
    %3532 = vmatprep.subr.mxu0 0.0
    %3533 = vmatpush1.msra.mxu0 0.0
    %3534 = vmatprep.subr.mxu0 0.0
    %3535 = vmatpush1.msra.mxu0 0.0
    %3536 = vmatprep.subr.mxu0 0.0
    %3537 = vmatpush1.msra.mxu0 0.0
    %3538 = vmatprep.subr.mxu0 0.0
    %3539 = vmatpush1.msra.mxu0 0.0
    %3540 = vmatprep.subr.mxu0 0.0
    %3541 = vmatpush1.msra.mxu0 0.0
    %3542 = vmatprep.subr.mxu0 0.0
    %3543 = vmatpush1.msra.mxu0 0.0
    %3544 = vmatprep.subr.mxu0 0.0
    %3545 = vmatpush1.msra.mxu0 0.0
    %3546 = vmatprep.subr.mxu0 0.0
    %3547 = vmatpush1.msra.mxu0 0.0
    %3548 = vmatprep.subr.mxu0 0.0
    %3549 = vmatpush1.msra.mxu0 0.0
    %3550 = vmatprep.subr.mxu0 0.0
    %3551 = vmatpush1.msra.mxu0 0.0
    %3552 = vmatprep.subr.mxu0 0.0
    %3553 = vmatpush1.msra.mxu0 0.0
    %3554 = vmatprep.subr.mxu0 0.0
    %3555 = vmatpush1.msra.mxu0 0.0
    %3556 = vmatprep.subr.mxu0 0.0
    %3557 = vmatpush1.msra.mxu0 0.0
    %3558 = vmatprep.subr.mxu0 0.0
    %3559 = vmatpush1.msra.mxu0 0.0
    %3560 = vmatprep.subr.mxu0 0.0
    %3561 = vmatpush1.msra.mxu0 0.0
    %3562 = vmatprep.subr.mxu0 0.0
    %3563 = vmatpush1.msra.mxu0 0.0
    %3564 = vmatprep.subr.mxu0 0.0
    %3565 = vmatpush1.msra.mxu0 0.0
    %3566 = vmatprep.subr.mxu0 0.0
    %3567 = vmatpush1.msra.mxu0 0.0
    %3568 = vmatprep.mubr.f32.mxu0 0.0
    %3569 = vmatmul.mubr.f32.gmra.mrb[0].mxu0 %v3502
    %v3570 = vpop.f32.mrb[0].mxu0
    %v3571 = vadd.f32 0.0, %v3570
    %v3572 = vpop.f32.mrb[0].mxu0
    %3573 = vdwg.mxu0
    %3574 = vrot.lane.b32.xlu0 %v2337, 64
    %v3575 = vpop.permute.xlu0 %3574
    %v3578 = vsel %vm498, %v3041, 0
    %3580 = vmatprep.subr.mxu0 0.0
    %3581 = vmatpush1.msra.mxu0 %v3575
    %3582 = vmatprep.subr.mxu0 0.0
    %3583 = vmatpush1.msra.mxu0 0.0
    %3584 = vmatprep.subr.mxu0 0.0
    %3585 = vmatpush1.msra.mxu0 0.0
    %3586 = vmatprep.subr.mxu0 0.0
    %3587 = vmatpush1.msra.mxu0 0.0
    %3588 = vmatprep.subr.mxu0 0.0
    %3589 = vmatpush1.msra.mxu0 0.0
    %3590 = vmatprep.subr.mxu0 0.0
    %3591 = vmatpush1.msra.mxu0 0.0
    %3592 = vmatprep.subr.mxu0 0.0
    %3593 = vmatpush1.msra.mxu0 0.0
    %3594 = vmatprep.subr.mxu0 0.0
    %3595 = vmatpush1.msra.mxu0 0.0
    %3596 = vmatprep.subr.mxu0 0.0
    %3597 = vmatpush1.msra.mxu0 0.0
    %3598 = vmatprep.subr.mxu0 0.0
    %3599 = vmatpush1.msra.mxu0 0.0
    %3600 = vmatprep.subr.mxu0 0.0
    %3601 = vmatpush1.msra.mxu0 0.0
    %3602 = vmatprep.subr.mxu0 0.0
    %3603 = vmatpush1.msra.mxu0 0.0
    %3604 = vmatprep.subr.mxu0 0.0
    %3605 = vmatpush1.msra.mxu0 0.0
    %3606 = vmatprep.subr.mxu0 0.0
    %3607 = vmatpush1.msra.mxu0 0.0
    %3608 = vmatprep.subr.mxu0 0.0
    %3609 = vmatpush1.msra.mxu0 0.0
    %3610 = vmatprep.subr.mxu0 0.0
    %3611 = vmatpush1.msra.mxu0 0.0
    %3612 = vmatprep.subr.mxu0 0.0
    %3613 = vmatpush1.msra.mxu0 0.0
    %3614 = vmatprep.subr.mxu0 0.0
    %3615 = vmatpush1.msra.mxu0 0.0
    %3616 = vmatprep.subr.mxu0 0.0
    %3617 = vmatpush1.msra.mxu0 0.0
    %3618 = vmatprep.subr.mxu0 0.0
    %3619 = vmatpush1.msra.mxu0 0.0
    %3620 = vmatprep.subr.mxu0 0.0
    %3621 = vmatpush1.msra.mxu0 0.0
    %3622 = vmatprep.subr.mxu0 0.0
    %3623 = vmatpush1.msra.mxu0 0.0
    %3624 = vmatprep.subr.mxu0 0.0
    %3625 = vmatpush1.msra.mxu0 0.0
    %3626 = vmatprep.subr.mxu0 0.0
    %3627 = vmatpush1.msra.mxu0 0.0
    %3628 = vmatprep.subr.mxu0 0.0
    %3629 = vmatpush1.msra.mxu0 0.0
    %3630 = vmatprep.subr.mxu0 0.0
    %3631 = vmatpush1.msra.mxu0 0.0
    %3632 = vmatprep.subr.mxu0 0.0
    %3633 = vmatpush1.msra.mxu0 0.0
    %3634 = vmatprep.subr.mxu0 0.0
    %3635 = vmatpush1.msra.mxu0 0.0
    %3636 = vmatprep.subr.mxu0 0.0
    %3637 = vmatpush1.msra.mxu0 0.0
    %3638 = vmatprep.subr.mxu0 0.0
    %3639 = vmatpush1.msra.mxu0 0.0
    %3640 = vmatprep.subr.mxu0 0.0
    %3641 = vmatpush1.msra.mxu0 0.0
    %3642 = vmatprep.subr.mxu0 0.0
    %3643 = vmatpush1.msra.mxu0 0.0
    %3644 = vmatprep.mubr.f32.mxu0 0.0
    %3645 = vmatmul.mubr.f32.gmra.mrb[0].mxu0 %v3578
    %v3646 = vpop.f32.mrb[0].mxu0
    %v3647 = vadd.f32 0.0, %v3646
    %v3648 = vpop.f32.mrb[0].mxu0
    %3649 = vdwg.mxu0
    %3652 = vrot.lane.b32.xlu0 %v3267, 8
    %v3653 = vpop.permute.xlu0 %3652
    %3654 = vrot.lane.b32.xlu0 %v3343, 8
    %v3655 = vpop.permute.xlu0 %3654
    %3660 = vrot.lane.b32.xlu0 %v3419, 16
    %v3661 = vpop.permute.xlu0 %3660
    %3662 = vrot.lane.b32.xlu0 %v3495, 16
    %v3663 = vpop.permute.xlu0 %3662
    %3668 = vrot.lane.b32.xlu0 %v3571, 24
    %v3669 = vpop.permute.xlu0 %3668
    %3670 = vrot.lane.b32.xlu0 %v3647, 24
    %v3671 = vpop.permute.xlu0 %3670
    %v3674 = vsel %vm498, %v3115, %v3653
    %v3675 = vsel %vm498, %v3191, %v3655
    %v3676 = vsel %vm1835, %v3674, %v3661
    %v3677 = vsel %vm1835, %v3675, %v3663
    %v3678 = vsel %vm1838, %v3676, %v3669
    %v3679 = vsel %vm1838, %v3677, %v3671
    %v3680 = vld [vmem:[%s41] sm:$0xff]
    %v3681 = vld [vmem:[%s41 + $0x8] sm:$0xff]
    %v3682 = vld [vmem:[%s41 + $0x10] sm:$0xff]
    %v3683 = vld [vmem:[%s41 + $0x18] sm:$0xff]
    %v3684 = vld [vmem:[%s43] sm:$0x1]
    %v3686 = vlaneseq
    %v3687 = vshrl.u32 %v3686, 7
    %v3688 = vsub.s32 0, %v3687
    %v3689 = vrot.slane %v3684, %v3688
    %v3692 = vsel %vm346, %v3678, 0
    %v3695 = vsel %vm346, %v3679, 0
    %3697 = vmatprep.subr.mxu0 0.0
    %3698 = vmatpush1.msra.mxu0 %v3680
    %3699 = vmatprep.subr.mxu0 0.0
    %3700 = vmatpush1.msra.mxu0 %v3681
    %3701 = vmatprep.subr.mxu0 0.0
    %3702 = vmatpush1.msra.mxu0 %v3682
    %3703 = vmatprep.subr.mxu0 0.0
    %3704 = vmatpush1.msra.mxu0 %v3683
    %3705 = vmatprep.subr.mxu0 0.0
    %3706 = vmatpush1.msra.mxu0 0.0
    %3707 = vmatprep.subr.mxu0 0.0
    %3708 = vmatpush1.msra.mxu0 0.0
    %3709 = vmatprep.subr.mxu0 0.0
    %3710 = vmatpush1.msra.mxu0 0.0
    %3711 = vmatprep.subr.mxu0 0.0
    %3712 = vmatpush1.msra.mxu0 0.0
    %3713 = vmatprep.subr.mxu0 0.0
    %3714 = vmatpush1.msra.mxu0 0.0
    %3715 = vmatprep.subr.mxu0 0.0
    %3716 = vmatpush1.msra.mxu0 0.0
    %3717 = vmatprep.subr.mxu0 0.0
    %3718 = vmatpush1.msra.mxu0 0.0
    %3719 = vmatprep.subr.mxu0 0.0
    %3720 = vmatpush1.msra.mxu0 0.0
    %3721 = vmatprep.subr.mxu0 0.0
    %3722 = vmatpush1.msra.mxu0 0.0
    %3723 = vmatprep.subr.mxu0 0.0
    %3724 = vmatpush1.msra.mxu0 0.0
    %3725 = vmatprep.subr.mxu0 0.0
    %3726 = vmatpush1.msra.mxu0 0.0
    %3727 = vmatprep.subr.mxu0 0.0
    %3728 = vmatpush1.msra.mxu0 0.0
    %3729 = vmatprep.subr.mxu0 0.0
    %3730 = vmatpush1.msra.mxu0 0.0
    %3731 = vmatprep.subr.mxu0 0.0
    %3732 = vmatpush1.msra.mxu0 0.0
    %3733 = vmatprep.subr.mxu0 0.0
    %3734 = vmatpush1.msra.mxu0 0.0
    %3735 = vmatprep.subr.mxu0 0.0
    %3736 = vmatpush1.msra.mxu0 0.0
    %3737 = vmatprep.subr.mxu0 0.0
    %3738 = vmatpush1.msra.mxu0 0.0
    %3739 = vmatprep.subr.mxu0 0.0
    %3740 = vmatpush1.msra.mxu0 0.0
    %3741 = vmatprep.subr.mxu0 0.0
    %3742 = vmatpush1.msra.mxu0 0.0
    %3743 = vmatprep.subr.mxu0 0.0
    %3744 = vmatpush1.msra.mxu0 0.0
    %3745 = vmatprep.subr.mxu0 0.0
    %3746 = vmatpush1.msra.mxu0 0.0
    %3747 = vmatprep.subr.mxu0 0.0
    %3748 = vmatpush1.msra.mxu0 0.0
    %3749 = vmatprep.subr.mxu0 0.0
    %3750 = vmatpush1.msra.mxu0 0.0
    %3751 = vmatprep.subr.mxu0 0.0
    %3752 = vmatpush1.msra.mxu0 0.0
    %3753 = vmatprep.subr.mxu0 0.0
    %3754 = vmatpush1.msra.mxu0 0.0
    %3755 = vmatprep.subr.mxu0 0.0
    %3756 = vmatpush1.msra.mxu0 0.0
    %3757 = vmatprep.subr.mxu0 0.0
    %3758 = vmatpush1.msra.mxu0 0.0
    %3759 = vmatprep.subr.mxu0 0.0
    %3760 = vmatpush1.msra.mxu0 0.0
    %3761 = vmatprep.mubr.f32.mxu0 0.0
    %3762 = vmatmul.mubr.f32.gmra.mrb[0].mxu0 %v3692
    %v3763 = vpop.f32.mrb[0].mxu0
    %v3764 = vadd.f32 %v3689, %v3763
    %v3765 = vpop.f32.mrb[0].mxu0
    %3766 = vmatprep.mubr.f32.mxu0 0.0
    %3767 = vmatmul.mubr.f32.gmra.mrb[0].mxu0 %v3695
    %v3768 = vpop.f32.mrb[0].mxu0
    %v3769 = vadd.f32 %v3689, %v3768
    %v3770 = vpop.f32.mrb[0].mxu0
    %3771 = vdwg.mxu0
    %v3772 = vadd.f32 %v3764, %v2230
    %v3773 = vadd.f32 %v3769, %v2231
    %v3774 = vld [vmem:[%s45] sm:$0x1]
    %v3775 = vld [vmem:[%s47] sm:$0x1]
    %v3776 = vsel %vm346, %v3772, 0.0
    %3777 = vadd.xlane.f32.xlu0 %v3776
    %v3778 = vpop.xlane.xlu0 %3777
    %v3779 = vsel %vm346, %v3773, 0.0
    %3780 = vadd.xlane.f32.xlu0 %v3779
    %v3781 = vpop.xlane.xlu0 %3780
    %v3782 = vmul.f32 %v3778, %v353
    %v3783 = vmul.f32 %v3781, %v353
    %v3784 = vsub.f32 %v3772, %v3782
    %v3785 = vsub.f32 %v3773, %v3783
    %v3786 = vmul.f32 %v3784, %v3784
    %v3787 = vmul.f32 %v3785, %v3785
    %v3788 = vsel %vm346, %v3786, 0.0
    %3789 = vadd.xlane.f32.xlu0 %v3788
    %v3790 = vpop.xlane.xlu0 %3789
    %v3791 = vsel %vm346, %v3787, 0.0
    %3792 = vadd.xlane.f32.xlu0 %v3791
    %v3793 = vpop.xlane.xlu0 %3792
    %v3794 = vmul.f32 %v3790, %v353
    %v3795 = vmul.f32 %v3793, %v353
    %v3796 = vadd.f32 %v3794, 1e-12
    %v3797 = vadd.f32 %v3795, 1e-12
    %v3798 = vrsqrt.pop %v3796
    %v3799 = vrsqrt.pop %v3797
    %v3800 = vmul.f32 %v3784, %v3798
    %v3801 = vmul.f32 %v3785, %v3799
    %v3803 = vlaneseq
    %v3804 = vshrl.u32 %v3803, 7
    %v3805 = vsub.s32 0, %v3804
    %v3806 = vrot.slane %v3774, %v3805
    %v3808 = vmul.f32 %v3800, %v3806
    %v3809 = vmul.f32 %v3801, %v3806
    %v3811 = vlaneseq
    %v3812 = vshrl.u32 %v3811, 7
    %v3813 = vsub.s32 0, %v3812
    %v3814 = vrot.slane %v3775, %v3813
    %v3816 = vadd.f32 %v3808, %v3814
    %v3817 = vadd.f32 %v3809, %v3814
    %v3818 = vld [vmem:[%s49] sm:$0xff]
    %v3819 = vld [vmem:[%s49 + $0x8] sm:$0xff]
    %v3820 = vld [vmem:[%s49 + $0x10] sm:$0xff]
    %v3821 = vld [vmem:[%s49 + $0x18] sm:$0xff]
    %v3822 = vld [vmem:[%s51] sm:$0x1]
    %v3824 = vlaneseq
    %v3825 = vshrl.u32 %v3824, 7
    %v3826 = vsub.s32 0, %v3825
    %v3827 = vrot.slane %v3822, %v3826
    %v3830 = vsel %vm346, %v3816, 0
    %v3833 = vsel %vm346, %v3817, 0
    %3835 = vmatprep.subr.mxu0 0.0
    %3836 = vmatpush1.msra.mxu0 %v3818
    %3837 = vmatprep.subr.mxu0 0.0
    %3838 = vmatpush1.msra.mxu0 %v3819
    %3839 = vmatprep.subr.mxu0 0.0
    %3840 = vmatpush1.msra.mxu0 %v3820
    %3841 = vmatprep.subr.mxu0 0.0
    %3842 = vmatpush1.msra.mxu0 %v3821
    %3843 = vmatprep.subr.mxu0 0.0
    %3844 = vmatpush1.msra.mxu0 0.0
    %3845 = vmatprep.subr.mxu0 0.0
    %3846 = vmatpush1.msra.mxu0 0.0
    %3847 = vmatprep.subr.mxu0 0.0
    %3848 = vmatpush1.msra.mxu0 0.0
    %3849 = vmatprep.subr.mxu0 0.0
    %3850 = vmatpush1.msra.mxu0 0.0
    %3851 = vmatprep.subr.mxu0 0.0
    %3852 = vmatpush1.msra.mxu0 0.0
    %3853 = vmatprep.subr.mxu0 0.0
    %3854 = vmatpush1.msra.mxu0 0.0
    %3855 = vmatprep.subr.mxu0 0.0
    %3856 = vmatpush1.msra.mxu0 0.0
    %3857 = vmatprep.subr.mxu0 0.0
    %3858 = vmatpush1.msra.mxu0 0.0
    %3859 = vmatprep.subr.mxu0 0.0
    %3860 = vmatpush1.msra.mxu0 0.0
    %3861 = vmatprep.subr.mxu0 0.0
    %3862 = vmatpush1.msra.mxu0 0.0
    %3863 = vmatprep.subr.mxu0 0.0
    %3864 = vmatpush1.msra.mxu0 0.0
    %3865 = vmatprep.subr.mxu0 0.0
    %3866 = vmatpush1.msra.mxu0 0.0
    %3867 = vmatprep.subr.mxu0 0.0
    %3868 = vmatpush1.msra.mxu0 0.0
    %3869 = vmatprep.subr.mxu0 0.0
    %3870 = vmatpush1.msra.mxu0 0.0
    %3871 = vmatprep.subr.mxu0 0.0
    %3872 = vmatpush1.msra.mxu0 0.0
    %3873 = vmatprep.subr.mxu0 0.0
    %3874 = vmatpush1.msra.mxu0 0.0
    %3875 = vmatprep.subr.mxu0 0.0
    %3876 = vmatpush1.msra.mxu0 0.0
    %3877 = vmatprep.subr.mxu0 0.0
    %3878 = vmatpush1.msra.mxu0 0.0
    %3879 = vmatprep.subr.mxu0 0.0
    %3880 = vmatpush1.msra.mxu0 0.0
    %3881 = vmatprep.subr.mxu0 0.0
    %3882 = vmatpush1.msra.mxu0 0.0
    %3883 = vmatprep.subr.mxu0 0.0
    %3884 = vmatpush1.msra.mxu0 0.0
    %3885 = vmatprep.subr.mxu0 0.0
    %3886 = vmatpush1.msra.mxu0 0.0
    %3887 = vmatprep.subr.mxu0 0.0
    %3888 = vmatpush1.msra.mxu0 0.0
    %3889 = vmatprep.subr.mxu0 0.0
    %3890 = vmatpush1.msra.mxu0 0.0
    %3891 = vmatprep.subr.mxu0 0.0
    %3892 = vmatpush1.msra.mxu0 0.0
    %3893 = vmatprep.subr.mxu0 0.0
    %3894 = vmatpush1.msra.mxu0 0.0
    %3895 = vmatprep.subr.mxu0 0.0
    %3896 = vmatpush1.msra.mxu0 0.0
    %3897 = vmatprep.subr.mxu0 0.0
    %3898 = vmatpush1.msra.mxu0 0.0
    %3899 = vmatprep.mubr.f32.mxu0 0.0
    %3900 = vmatmul.mubr.f32.gmra.mrb[0].mxu0 %v3830
    %v3901 = vpop.f32.mrb[0].mxu0
    %v3902 = vadd.f32 %v3827, %v3901
    %v3903 = vpop.f32.mrb[0].mxu0
    %3904 = vmatprep.mubr.f32.mxu0 0.0
    %3905 = vmatmul.mubr.f32.gmra.mrb[0].mxu0 %v3833
    %v3906 = vpop.f32.mrb[0].mxu0
    %v3907 = vadd.f32 %v3827, %v3906
    %v3908 = vpop.f32.mrb[0].mxu0
    %3909 = vdwg.mxu0
    %v3910 = vmul.f32 %v3902, %v3902
    %v3911 = vmul.f32 %v3907, %v3907
    %v3912 = vmul.f32 %v3902, %v3910
    %v3913 = vmul.f32 %v3907, %v3911
    %v3914 = vmul.f32 %v3912, 0.044715
    %v3915 = vmul.f32 %v3913, 0.044715
    %v3916 = vadd.f32 %v3902, %v3914
    %v3917 = vadd.f32 %v3907, %v3915
    %v3918 = vmul.f32 %v3916, 0.7978846
    %v3919 = vmul.f32 %v3917, 0.7978846
    %v3920 = vtanh.pop %v3918
    %v3921 = vtanh.pop %v3919
    %v3922 = vadd.f32 %v3920, 1.0
    %v3923 = vadd.f32 %v3921, 1.0
    %v3924 = vmul.f32 %v3922, 0.5
    %v3925 = vmul.f32 %v3923, 0.5
    %v3926 = vmul.f32 %v3902, %v3924
    %v3927 = vmul.f32 %v3907, %v3925
    %v3928 = vld [vmem:[%s53] sm:$0xff]
    %v3929 = vld [vmem:[%s53 + $0x8] sm:$0xff]
    %v3930 = vld [vmem:[%s53 + $0x10] sm:$0xff]
    %v3931 = vld [vmem:[%s53 + $0x18] sm:$0xff]
    %v3932 = vld [vmem:[%s53 + $0x20] sm:$0xff]
    %v3933 = vld [vmem:[%s53 + $0x28] sm:$0xff]
    %v3934 = vld [vmem:[%s53 + $0x30] sm:$0xff]
    %v3935 = vld [vmem:[%s53 + $0x38] sm:$0xff]
    %v3936 = vld [vmem:[%s55] sm:$0x1]
    %v3938 = vlaneseq
    %v3939 = vshrl.u32 %v3938, 7
    %v3940 = vsub.s32 0, %v3939
    %v3941 = vrot.slane %v3936, %v3940
    %v3944 = vsel %vm2104, %v3926, 0
    %v3947 = vsel %vm2104, %v3927, 0
    %3949 = vmatprep.subr.mxu0 0.0
    %3950 = vmatpush1.msra.mxu0 %v3928
    %3951 = vmatprep.subr.mxu0 0.0
    %3952 = vmatpush1.msra.mxu0 %v3929
    %3953 = vmatprep.subr.mxu0 0.0
    %3954 = vmatpush1.msra.mxu0 %v3930
    %3955 = vmatprep.subr.mxu0 0.0
    %3956 = vmatpush1.msra.mxu0 %v3931
    %3957 = vmatprep.subr.mxu0 0.0
    %3958 = vmatpush1.msra.mxu0 %v3932
    %3959 = vmatprep.subr.mxu0 0.0
    %3960 = vmatpush1.msra.mxu0 %v3933
    %3961 = vmatprep.subr.mxu0 0.0
    %3962 = vmatpush1.msra.mxu0 %v3934
    %3963 = vmatprep.subr.mxu0 0.0
    %3964 = vmatpush1.msra.mxu0 %v3935
    %3965 = vmatprep.subr.mxu0 0.0
    %3966 = vmatpush1.msra.mxu0 0.0
    %3967 = vmatprep.subr.mxu0 0.0
    %3968 = vmatpush1.msra.mxu0 0.0
    %3969 = vmatprep.subr.mxu0 0.0
    %3970 = vmatpush1.msra.mxu0 0.0
    %3971 = vmatprep.subr.mxu0 0.0
    %3972 = vmatpush1.msra.mxu0 0.0
    %3973 = vmatprep.subr.mxu0 0.0
    %3974 = vmatpush1.msra.mxu0 0.0
    %3975 = vmatprep.subr.mxu0 0.0
    %3976 = vmatpush1.msra.mxu0 0.0
    %3977 = vmatprep.subr.mxu0 0.0
    %3978 = vmatpush1.msra.mxu0 0.0
    %3979 = vmatprep.subr.mxu0 0.0
    %3980 = vmatpush1.msra.mxu0 0.0
    %3981 = vmatprep.subr.mxu0 0.0
    %3982 = vmatpush1.msra.mxu0 0.0
    %3983 = vmatprep.subr.mxu0 0.0
    %3984 = vmatpush1.msra.mxu0 0.0
    %3985 = vmatprep.subr.mxu0 0.0
    %3986 = vmatpush1.msra.mxu0 0.0
    %3987 = vmatprep.subr.mxu0 0.0
    %3988 = vmatpush1.msra.mxu0 0.0
    %3989 = vmatprep.subr.mxu0 0.0
    %3990 = vmatpush1.msra.mxu0 0.0
    %3991 = vmatprep.subr.mxu0 0.0
    %3992 = vmatpush1.msra.mxu0 0.0
    %3993 = vmatprep.subr.mxu0 0.0
    %3994 = vmatpush1.msra.mxu0 0.0
    %3995 = vmatprep.subr.mxu0 0.0
    %3996 = vmatpush1.msra.mxu0 0.0
    %3997 = vmatprep.subr.mxu0 0.0
    %3998 = vmatpush1.msra.mxu0 0.0
    %3999 = vmatprep.subr.mxu0 0.0
    %4000 = vmatpush1.msra.mxu0 0.0
    %4001 = vmatprep.subr.mxu0 0.0
    %4002 = vmatpush1.msra.mxu0 0.0
    %4003 = vmatprep.subr.mxu0 0.0
    %4004 = vmatpush1.msra.mxu0 0.0
    %4005 = vmatprep.subr.mxu0 0.0
    %4006 = vmatpush1.msra.mxu0 0.0
    %4007 = vmatprep.subr.mxu0 0.0
    %4008 = vmatpush1.msra.mxu0 0.0
    %4009 = vmatprep.subr.mxu0 0.0
    %4010 = vmatpush1.msra.mxu0 0.0
    %4011 = vmatprep.subr.mxu0 0.0
    %4012 = vmatpush1.msra.mxu0 0.0
    %4013 = vmatprep.mubr.f32.mxu0 0.0
    %4014 = vmatmul.mubr.f32.gmra.mrb[0].mxu0 %v3944
    %v4015 = vpop.f32.mrb[0].mxu0
    %v4016 = vadd.f32 %v3941, %v4015
    %v4017 = vpop.f32.mrb[0].mxu0
    %4018 = vmatprep.mubr.f32.mxu0 0.0
    %4019 = vmatmul.mubr.f32.gmra.mrb[0].mxu0 %v3947
    %v4020 = vpop.f32.mrb[0].mxu0
    %v4021 = vadd.f32 %v3941, %v4020
    %v4022 = vpop.f32.mrb[0].mxu0
    %4023 = vdwg.mxu0
    %v4024 = vadd.f32 %v4016, %v3816
    %v4025 = vadd.f32 %v4021, %v3817
    %v4026 = vld [vmem:[%s57] sm:$0x1]
    %v4027 = vld [vmem:[%s59] sm:$0x1]
    %v4028 = vsel %vm346, %v4024, 0.0
    %4029 = vadd.xlane.f32.xlu0 %v4028
    %v4030 = vpop.xlane.xlu0 %4029
    %v4031 = vsel %vm346, %v4025, 0.0
    %4032 = vadd.xlane.f32.xlu0 %v4031
    %v4033 = vpop.xlane.xlu0 %4032
    %v4034 = vmul.f32 %v4030, %v353
    %v4035 = vmul.f32 %v4033, %v353
    %v4036 = vsub.f32 %v4024, %v4034
    %v4037 = vsub.f32 %v4025, %v4035
    %v4038 = vmul.f32 %v4036, %v4036
    %v4039 = vmul.f32 %v4037, %v4037
    %v4040 = vsel %vm346, %v4038, 0.0
    %4041 = vadd.xlane.f32.xlu0 %v4040
    %v4042 = vpop.xlane.xlu0 %4041
    %v4043 = vsel %vm346, %v4039, 0.0
    %4044 = vadd.xlane.f32.xlu0 %v4043
    %v4045 = vpop.xlane.xlu0 %4044
    %v4046 = vmul.f32 %v4042, %v353
    %v4047 = vmul.f32 %v4045, %v353
    %v4048 = vadd.f32 %v4046, 1e-12
    %v4049 = vadd.f32 %v4047, 1e-12
    %v4050 = vrsqrt.pop %v4048
    %v4051 = vrsqrt.pop %v4049
    %v4052 = vmul.f32 %v4036, %v4050
    %v4053 = vmul.f32 %v4037, %v4051
    %v4055 = vlaneseq
    %v4056 = vshrl.u32 %v4055, 7
    %v4057 = vsub.s32 0, %v4056
    %v4058 = vrot.slane %v4026, %v4057
    %v4060 = vmul.f32 %v4052, %v4058
    %v4061 = vmul.f32 %v4053, %v4058
    %v4063 = vlaneseq
    %v4064 = vshrl.u32 %v4063, 7
    %v4065 = vsub.s32 0, %v4064
    %v4066 = vrot.slane %v4027, %v4065
    %v4068 = vadd.f32 %v4060, %v4066
    %v4069 = vadd.f32 %v4061, %v4066
    %v4070 = vld [vmem:[%s61] sm:$0xff]
    %v4071 = vld [vmem:[%s61 + $0x8] sm:$0xff]
    %v4072 = vld [vmem:[%s61 + $0x10] sm:$0xff]
    %v4073 = vld [vmem:[%s61 + $0x18] sm:$0xff]
    %v4074 = vld [vmem:[%s65] sm:$0x1]
    %v4076 = vlaneseq
    %v4077 = vshrl.u32 %v4076, 7
    %v4078 = vsub.s32 0, %v4077
    %v4079 = vrot.slane %v4074, %v4078
    %v4082 = vsel %vm346, %v4068, 0
    %v4085 = vsel %vm346, %v4069, 0
    %4087 = vmatprep.subr.mxu0 0.0
    %4088 = vmatpush1.msra.mxu0 %v4070
    %4089 = vmatprep.subr.mxu0 0.0
    %4090 = vmatpush1.msra.mxu0 %v4071
    %4091 = vmatprep.subr.mxu0 0.0
    %4092 = vmatpush1.msra.mxu0 %v4072
    %4093 = vmatprep.subr.mxu0 0.0
    %4094 = vmatpush1.msra.mxu0 %v4073
    %4095 = vmatprep.subr.mxu0 0.0
    %4096 = vmatpush1.msra.mxu0 0.0
    %4097 = vmatprep.subr.mxu0 0.0
    %4098 = vmatpush1.msra.mxu0 0.0
    %4099 = vmatprep.subr.mxu0 0.0
    %4100 = vmatpush1.msra.mxu0 0.0
    %4101 = vmatprep.subr.mxu0 0.0
    %4102 = vmatpush1.msra.mxu0 0.0
    %4103 = vmatprep.subr.mxu0 0.0
    %4104 = vmatpush1.msra.mxu0 0.0
    %4105 = vmatprep.subr.mxu0 0.0
    %4106 = vmatpush1.msra.mxu0 0.0
    %4107 = vmatprep.subr.mxu0 0.0
    %4108 = vmatpush1.msra.mxu0 0.0
    %4109 = vmatprep.subr.mxu0 0.0
    %4110 = vmatpush1.msra.mxu0 0.0
    %4111 = vmatprep.subr.mxu0 0.0
    %4112 = vmatpush1.msra.mxu0 0.0
    %4113 = vmatprep.subr.mxu0 0.0
    %4114 = vmatpush1.msra.mxu0 0.0
    %4115 = vmatprep.subr.mxu0 0.0
    %4116 = vmatpush1.msra.mxu0 0.0
    %4117 = vmatprep.subr.mxu0 0.0
    %4118 = vmatpush1.msra.mxu0 0.0
    %4119 = vmatprep.subr.mxu0 0.0
    %4120 = vmatpush1.msra.mxu0 0.0
    %4121 = vmatprep.subr.mxu0 0.0
    %4122 = vmatpush1.msra.mxu0 0.0
    %4123 = vmatprep.subr.mxu0 0.0
    %4124 = vmatpush1.msra.mxu0 0.0
    %4125 = vmatprep.subr.mxu0 0.0
    %4126 = vmatpush1.msra.mxu0 0.0
    %4127 = vmatprep.subr.mxu0 0.0
    %4128 = vmatpush1.msra.mxu0 0.0
    %4129 = vmatprep.subr.mxu0 0.0
    %4130 = vmatpush1.msra.mxu0 0.0
    %4131 = vmatprep.subr.mxu0 0.0
    %4132 = vmatpush1.msra.mxu0 0.0
    %4133 = vmatprep.subr.mxu0 0.0
    %4134 = vmatpush1.msra.mxu0 0.0
    %4135 = vmatprep.subr.mxu0 0.0
    %4136 = vmatpush1.msra.mxu0 0.0
    %4137 = vmatprep.subr.mxu0 0.0
    %4138 = vmatpush1.msra.mxu0 0.0
    %4139 = vmatprep.subr.mxu0 0.0
    %4140 = vmatpush1.msra.mxu0 0.0
    %4141 = vmatprep.subr.mxu0 0.0
    %4142 = vmatpush1.msra.mxu0 0.0
    %4143 = vmatprep.subr.mxu0 0.0
    %4144 = vmatpush1.msra.mxu0 0.0
    %4145 = vmatprep.subr.mxu0 0.0
    %4146 = vmatpush1.msra.mxu0 0.0
    %4147 = vmatprep.subr.mxu0 0.0
    %4148 = vmatpush1.msra.mxu0 0.0
    %4149 = vmatprep.subr.mxu0 0.0
    %4150 = vmatpush1.msra.mxu0 0.0
    %4151 = vmatprep.mubr.f32.mxu0 0.0
    %4152 = vmatmul.mubr.f32.gmra.mrb[0].mxu0 %v4082
    %v4153 = vpop.f32.mrb[0].mxu0
    %v4154 = vadd.f32 %v4079, %v4153
    %v4155 = vpop.f32.mrb[0].mxu0
    %4156 = vmatprep.mubr.f32.mxu0 0.0
    %4157 = vmatmul.mubr.f32.gmra.mrb[0].mxu0 %v4085
    %v4158 = vpop.f32.mrb[0].mxu0
    %v4159 = vadd.f32 %v4079, %v4158
    %v4160 = vpop.f32.mrb[0].mxu0
    %4161 = vdwg.mxu0
    %v4162 = vld [vmem:[%s63] sm:$0xff]
    %v4163 = vld [vmem:[%s63 + $0x8] sm:$0xff]
    %v4164 = vld [vmem:[%s63 + $0x10] sm:$0xff]
    %v4165 = vld [vmem:[%s63 + $0x18] sm:$0xff]
    %v4167 = vsel %vm346, 0.0, 0
    %4169 = vmatprep.subr.mxu0 0.0
    %4170 = vmatpush1.msra.mxu0 %v4162
    %4171 = vmatprep.subr.mxu0 0.0
    %4172 = vmatpush1.msra.mxu0 %v4163
    %4173 = vmatprep.subr.mxu0 0.0
    %4174 = vmatpush1.msra.mxu0 %v4164
    %4175 = vmatprep.subr.mxu0 0.0
    %4176 = vmatpush1.msra.mxu0 %v4165
    %4177 = vmatprep.subr.mxu0 0.0
    %4178 = vmatpush1.msra.mxu0 0.0
    %4179 = vmatprep.subr.mxu0 0.0
    %4180 = vmatpush1.msra.mxu0 0.0
    %4181 = vmatprep.subr.mxu0 0.0
    %4182 = vmatpush1.msra.mxu0 0.0
    %4183 = vmatprep.subr.mxu0 0.0
    %4184 = vmatpush1.msra.mxu0 0.0
    %4185 = vmatprep.subr.mxu0 0.0
    %4186 = vmatpush1.msra.mxu0 0.0
    %4187 = vmatprep.subr.mxu0 0.0
    %4188 = vmatpush1.msra.mxu0 0.0
    %4189 = vmatprep.subr.mxu0 0.0
    %4190 = vmatpush1.msra.mxu0 0.0
    %4191 = vmatprep.subr.mxu0 0.0
    %4192 = vmatpush1.msra.mxu0 0.0
    %4193 = vmatprep.subr.mxu0 0.0
    %4194 = vmatpush1.msra.mxu0 0.0
    %4195 = vmatprep.subr.mxu0 0.0
    %4196 = vmatpush1.msra.mxu0 0.0
    %4197 = vmatprep.subr.mxu0 0.0
    %4198 = vmatpush1.msra.mxu0 0.0
    %4199 = vmatprep.subr.mxu0 0.0
    %4200 = vmatpush1.msra.mxu0 0.0
    %4201 = vmatprep.subr.mxu0 0.0
    %4202 = vmatpush1.msra.mxu0 0.0
    %4203 = vmatprep.subr.mxu0 0.0
    %4204 = vmatpush1.msra.mxu0 0.0
    %4205 = vmatprep.subr.mxu0 0.0
    %4206 = vmatpush1.msra.mxu0 0.0
    %4207 = vmatprep.subr.mxu0 0.0
    %4208 = vmatpush1.msra.mxu0 0.0
    %4209 = vmatprep.subr.mxu0 0.0
    %4210 = vmatpush1.msra.mxu0 0.0
    %4211 = vmatprep.subr.mxu0 0.0
    %4212 = vmatpush1.msra.mxu0 0.0
    %4213 = vmatprep.subr.mxu0 0.0
    %4214 = vmatpush1.msra.mxu0 0.0
    %4215 = vmatprep.subr.mxu0 0.0
    %4216 = vmatpush1.msra.mxu0 0.0
    %4217 = vmatprep.subr.mxu0 0.0
    %4218 = vmatpush1.msra.mxu0 0.0
    %4219 = vmatprep.subr.mxu0 0.0
    %4220 = vmatpush1.msra.mxu0 0.0
    %4221 = vmatprep.subr.mxu0 0.0
    %4222 = vmatpush1.msra.mxu0 0.0
    %4223 = vmatprep.subr.mxu0 0.0
    %4224 = vmatpush1.msra.mxu0 0.0
    %4225 = vmatprep.subr.mxu0 0.0
    %4226 = vmatpush1.msra.mxu0 0.0
    %4227 = vmatprep.subr.mxu0 0.0
    %4228 = vmatpush1.msra.mxu0 0.0
    %4229 = vmatprep.subr.mxu0 0.0
    %4230 = vmatpush1.msra.mxu0 0.0
    %4231 = vmatprep.subr.mxu0 0.0
    %4232 = vmatpush1.msra.mxu0 0.0
    %4233 = vmatprep.mubr.f32.mxu0 0.0
    %4234 = vmatmul.mubr.f32.gmra.mrb[0].mxu0 %v4167
    %v4235 = vpop.f32.mrb[0].mxu0
    %v4236 = vadd.f32 0.0, %v4235
    %v4237 = vpop.f32.mrb[0].mxu0
    %4238 = vdwg.mxu0
    %v4239 = vadd.f32 %v4154, %v4236
    %v4240 = vxor.u32 %v4239, 2147483648
    %v4241 = vmul.f32 %v4240, 1.442695
    %v4242 = vpow.pop %v4241
    %v4243 = vadd.f32 %v4242, 1.0
    %v4244 = vrcp.pop %v4243
    %v4245 = vmul.f32 1.0, %v4244
    %v4246 = vtanh.pop %v4239
    %v4247 = vmul.f32 %v4245, 0.0
    %4249 = vrot.lane.b32.xlu0 %v4246, 64
    %v4250 = vpop.permute.xlu0 %4249
    %v4252 = vmul.f32 %v4245, %v4250
    %4254 = vrot.lane.b32.xlu0 %v4252, 32
    %v4255 = vpop.permute.xlu0 %4254
    %v4257 = vadd.f32 %v4247, %v4255
    %v4258 = vtanh.pop %v4257
    %4260 = vrot.lane.b32.xlu0 %v4258, 64
    %v4261 = vpop.permute.xlu0 %4260
    %v4263 = vmul.f32 %v4245, %v4261
    %v4264 = vld [vmem:[%s67] sm:$0xff]
    %v4265 = vld [vmem:[%s67 + $0x8] sm:$0xff]
    %v4266 = vld [vmem:[%s67 + $0x10] sm:$0xff]
    %v4267 = vld [vmem:[%s67 + $0x18] sm:$0xff]
    %v4268 = vld [vmem:[%s71] sm:$0x1]
    %v4270 = vlaneseq
    %v4271 = vshrl.u32 %v4270, 7
    %v4272 = vsub.s32 0, %v4271
    %v4273 = vrot.slane %v4268, %v4272
    %4276 = vrot.lane.b32.xlu0 %v4263, 32
    %v4277 = vpop.permute.xlu0 %4276
    %v4278 = vsel %vm346, %v4277, 0
    %4280 = vmatprep.subr.mxu0 0.0
    %4281 = vmatpush1.msra.mxu0 %v4264
    %4282 = vmatprep.subr.mxu0 0.0
    %4283 = vmatpush1.msra.mxu0 %v4265
    %4284 = vmatprep.subr.mxu0 0.0
    %4285 = vmatpush1.msra.mxu0 %v4266
    %4286 = vmatprep.subr.mxu0 0.0
    %4287 = vmatpush1.msra.mxu0 %v4267
    %4288 = vmatprep.subr.mxu0 0.0
    %4289 = vmatpush1.msra.mxu0 0.0
    %4290 = vmatprep.subr.mxu0 0.0
    %4291 = vmatpush1.msra.mxu0 0.0
    %4292 = vmatprep.subr.mxu0 0.0
    %4293 = vmatpush1.msra.mxu0 0.0
    %4294 = vmatprep.subr.mxu0 0.0
    %4295 = vmatpush1.msra.mxu0 0.0
    %4296 = vmatprep.subr.mxu0 0.0
    %4297 = vmatpush1.msra.mxu0 0.0
    %4298 = vmatprep.subr.mxu0 0.0
    %4299 = vmatpush1.msra.mxu0 0.0
    %4300 = vmatprep.subr.mxu0 0.0
    %4301 = vmatpush1.msra.mxu0 0.0
    %4302 = vmatprep.subr.mxu0 0.0
    %4303 = vmatpush1.msra.mxu0 0.0
    %4304 = vmatprep.subr.mxu0 0.0
    %4305 = vmatpush1.msra.mxu0 0.0
    %4306 = vmatprep.subr.mxu0 0.0
    %4307 = vmatpush1.msra.mxu0 0.0
    %4308 = vmatprep.subr.mxu0 0.0
    %4309 = vmatpush1.msra.mxu0 0.0
    %4310 = vmatprep.subr.mxu0 0.0
    %4311 = vmatpush1.msra.mxu0 0.0
    %4312 = vmatprep.subr.mxu0 0.0
    %4313 = vmatpush1.msra.mxu0 0.0
    %4314 = vmatprep.subr.mxu0 0.0
    %4315 = vmatpush1.msra.mxu0 0.0
    %4316 = vmatprep.subr.mxu0 0.0
    %4317 = vmatpush1.msra.mxu0 0.0
    %4318 = vmatprep.subr.mxu0 0.0
    %4319 = vmatpush1.msra.mxu0 0.0
    %4320 = vmatprep.subr.mxu0 0.0
    %4321 = vmatpush1.msra.mxu0 0.0
    %4322 = vmatprep.subr.mxu0 0.0
    %4323 = vmatpush1.msra.mxu0 0.0
    %4324 = vmatprep.subr.mxu0 0.0
    %4325 = vmatpush1.msra.mxu0 0.0
    %4326 = vmatprep.subr.mxu0 0.0
    %4327 = vmatpush1.msra.mxu0 0.0
    %4328 = vmatprep.subr.mxu0 0.0
    %4329 = vmatpush1.msra.mxu0 0.0
    %4330 = vmatprep.subr.mxu0 0.0
    %4331 = vmatpush1.msra.mxu0 0.0
    %4332 = vmatprep.subr.mxu0 0.0
    %4333 = vmatpush1.msra.mxu0 0.0
    %4334 = vmatprep.subr.mxu0 0.0
    %4335 = vmatpush1.msra.mxu0 0.0
    %4336 = vmatprep.subr.mxu0 0.0
    %4337 = vmatpush1.msra.mxu0 0.0
    %4338 = vmatprep.subr.mxu0 0.0
    %4339 = vmatpush1.msra.mxu0 0.0
    %4340 = vmatprep.subr.mxu0 0.0
    %4341 = vmatpush1.msra.mxu0 0.0
    %4342 = vmatprep.subr.mxu0 0.0
    %4343 = vmatpush1.msra.mxu0 0.0
    %4344 = vmatprep.mubr.f32.mxu0 0.0
    %4345 = vmatmul.mubr.f32.gmra.mrb[0].mxu0 %v4278
    %v4346 = vpop.f32.mrb[0].mxu0
    %v4347 = vadd.f32 %v4273, %v4346
    %v4348 = vpop.f32.mrb[0].mxu0
    %4349 = vdwg.mxu0
    %v4350 = vld [vmem:[%s69] sm:$0xff]
    %v4351 = vld [vmem:[%s69 + $0x8] sm:$0xff]
    %v4352 = vld [vmem:[%s69 + $0x10] sm:$0xff]
    %v4353 = vld [vmem:[%s69 + $0x18] sm:$0xff]
    %4354 = vmatprep.subr.mxu0 0.0
    %4355 = vmatpush1.msra.mxu0 %v4350
    %4356 = vmatprep.subr.mxu0 0.0
    %4357 = vmatpush1.msra.mxu0 %v4351
    %4358 = vmatprep.subr.mxu0 0.0
    %4359 = vmatpush1.msra.mxu0 %v4352
    %4360 = vmatprep.subr.mxu0 0.0
    %4361 = vmatpush1.msra.mxu0 %v4353
    %4362 = vmatprep.subr.mxu0 0.0
    %4363 = vmatpush1.msra.mxu0 0.0
    %4364 = vmatprep.subr.mxu0 0.0
    %4365 = vmatpush1.msra.mxu0 0.0
    %4366 = vmatprep.subr.mxu0 0.0
    %4367 = vmatpush1.msra.mxu0 0.0
    %4368 = vmatprep.subr.mxu0 0.0
    %4369 = vmatpush1.msra.mxu0 0.0
    %4370 = vmatprep.subr.mxu0 0.0
    %4371 = vmatpush1.msra.mxu0 0.0
    %4372 = vmatprep.subr.mxu0 0.0
    %4373 = vmatpush1.msra.mxu0 0.0
    %4374 = vmatprep.subr.mxu0 0.0
    %4375 = vmatpush1.msra.mxu0 0.0
    %4376 = vmatprep.subr.mxu0 0.0
    %4377 = vmatpush1.msra.mxu0 0.0
    %4378 = vmatprep.subr.mxu0 0.0
    %4379 = vmatpush1.msra.mxu0 0.0
    %4380 = vmatprep.subr.mxu0 0.0
    %4381 = vmatpush1.msra.mxu0 0.0
    %4382 = vmatprep.subr.mxu0 0.0
    %4383 = vmatpush1.msra.mxu0 0.0
    %4384 = vmatprep.subr.mxu0 0.0
    %4385 = vmatpush1.msra.mxu0 0.0
    %4386 = vmatprep.subr.mxu0 0.0
    %4387 = vmatpush1.msra.mxu0 0.0
    %4388 = vmatprep.subr.mxu0 0.0
    %4389 = vmatpush1.msra.mxu0 0.0
    %4390 = vmatprep.subr.mxu0 0.0
    %4391 = vmatpush1.msra.mxu0 0.0
    %4392 = vmatprep.subr.mxu0 0.0
    %4393 = vmatpush1.msra.mxu0 0.0
    %4394 = vmatprep.subr.mxu0 0.0
    %4395 = vmatpush1.msra.mxu0 0.0
    %4396 = vmatprep.subr.mxu0 0.0
    %4397 = vmatpush1.msra.mxu0 0.0
    %4398 = vmatprep.subr.mxu0 0.0
    %4399 = vmatpush1.msra.mxu0 0.0
    %4400 = vmatprep.subr.mxu0 0.0
    %4401 = vmatpush1.msra.mxu0 0.0
    %4402 = vmatprep.subr.mxu0 0.0
    %4403 = vmatpush1.msra.mxu0 0.0
    %4404 = vmatprep.subr.mxu0 0.0
    %4405 = vmatpush1.msra.mxu0 0.0
    %4406 = vmatprep.subr.mxu0 0.0
    %4407 = vmatpush1.msra.mxu0 0.0
    %4408 = vmatprep.subr.mxu0 0.0
    %4409 = vmatpush1.msra.mxu0 0.0
    %4410 = vmatprep.subr.mxu0 0.0
    %4411 = vmatpush1.msra.mxu0 0.0
    %4412 = vmatprep.subr.mxu0 0.0
    %4413 = vmatpush1.msra.mxu0 0.0
    %4414 = vmatprep.subr.mxu0 0.0
    %4415 = vmatpush1.msra.mxu0 0.0
    %4416 = vmatprep.subr.mxu0 0.0
    %4417 = vmatpush1.msra.mxu0 0.0
    %4418 = vmatprep.mubr.f32.mxu0 0.0
    %4419 = vmatmul.mubr.f32.gmra.mrb[0].mxu0 %v4167
    %v4420 = vpop.f32.mrb[0].mxu0
    %v4421 = vadd.f32 0.0, %v4420
    %v4422 = vpop.f32.mrb[0].mxu0
    %4423 = vdwg.mxu0
    %v4424 = vadd.f32 %v4347, %v4421
    %v4425 = vxor.u32 %v4424, 2147483648
    %v4426 = vmul.f32 %v4425, 1.442695
    %v4427 = vpow.pop %v4426
    %v4428 = vadd.f32 %v4427, 1.0
    %v4429 = vrcp.pop %v4428
    %v4430 = vmul.f32 1.0, %v4429
    %v4431 = vtanh.pop %v4424
    %v4432 = vmul.f32 %v4430, 0.0
    %4434 = vrot.lane.b32.xlu0 %v4431, 64
    %v4435 = vpop.permute.xlu0 %4434
    %v4437 = vmul.f32 %v4430, %v4435
    %4439 = vrot.lane.b32.xlu0 %v4437, 32
    %v4440 = vpop.permute.xlu0 %4439
    %v4442 = vadd.f32 %v4432, %v4440
    %v4443 = vtanh.pop %v4442
    %4445 = vrot.lane.b32.xlu0 %v4443, 64
    %v4446 = vpop.permute.xlu0 %4445
    %v4448 = vmul.f32 %v4430, %v4446
    %4449 = vmatprep.subr.mxu0 0.0
    %4450 = vmatpush1.msra.mxu0 %v4162
    %4451 = vmatprep.subr.mxu0 0.0
    %4452 = vmatpush1.msra.mxu0 %v4163
    %4453 = vmatprep.subr.mxu0 0.0
    %4454 = vmatpush1.msra.mxu0 %v4164
    %4455 = vmatprep.subr.mxu0 0.0
    %4456 = vmatpush1.msra.mxu0 %v4165
    %4457 = vmatprep.subr.mxu0 0.0
    %4458 = vmatpush1.msra.mxu0 0.0
    %4459 = vmatprep.subr.mxu0 0.0
    %4460 = vmatpush1.msra.mxu0 0.0
    %4461 = vmatprep.subr.mxu0 0.0
    %4462 = vmatpush1.msra.mxu0 0.0
    %4463 = vmatprep.subr.mxu0 0.0
    %4464 = vmatpush1.msra.mxu0 0.0
    %4465 = vmatprep.subr.mxu0 0.0
    %4466 = vmatpush1.msra.mxu0 0.0
    %4467 = vmatprep.subr.mxu0 0.0
    %4468 = vmatpush1.msra.mxu0 0.0
    %4469 = vmatprep.subr.mxu0 0.0
    %4470 = vmatpush1.msra.mxu0 0.0
    %4471 = vmatprep.subr.mxu0 0.0
    %4472 = vmatpush1.msra.mxu0 0.0
    %4473 = vmatprep.subr.mxu0 0.0
    %4474 = vmatpush1.msra.mxu0 0.0
    %4475 = vmatprep.subr.mxu0 0.0
    %4476 = vmatpush1.msra.mxu0 0.0
    %4477 = vmatprep.subr.mxu0 0.0
    %4478 = vmatpush1.msra.mxu0 0.0
    %4479 = vmatprep.subr.mxu0 0.0
    %4480 = vmatpush1.msra.mxu0 0.0
    %4481 = vmatprep.subr.mxu0 0.0
    %4482 = vmatpush1.msra.mxu0 0.0
    %4483 = vmatprep.subr.mxu0 0.0
    %4484 = vmatpush1.msra.mxu0 0.0
    %4485 = vmatprep.subr.mxu0 0.0
    %4486 = vmatpush1.msra.mxu0 0.0
    %4487 = vmatprep.subr.mxu0 0.0
    %4488 = vmatpush1.msra.mxu0 0.0
    %4489 = vmatprep.subr.mxu0 0.0
    %4490 = vmatpush1.msra.mxu0 0.0
    %4491 = vmatprep.subr.mxu0 0.0
    %4492 = vmatpush1.msra.mxu0 0.0
    %4493 = vmatprep.subr.mxu0 0.0
    %4494 = vmatpush1.msra.mxu0 0.0
    %4495 = vmatprep.subr.mxu0 0.0
    %4496 = vmatpush1.msra.mxu0 0.0
    %4497 = vmatprep.subr.mxu0 0.0
    %4498 = vmatpush1.msra.mxu0 0.0
    %4499 = vmatprep.subr.mxu0 0.0
    %4500 = vmatpush1.msra.mxu0 0.0
    %4501 = vmatprep.subr.mxu0 0.0
    %4502 = vmatpush1.msra.mxu0 0.0
    %4503 = vmatprep.subr.mxu0 0.0
    %4504 = vmatpush1.msra.mxu0 0.0
    %4505 = vmatprep.subr.mxu0 0.0
    %4506 = vmatpush1.msra.mxu0 0.0
    %4507 = vmatprep.subr.mxu0 0.0
    %4508 = vmatpush1.msra.mxu0 0.0
    %4509 = vmatprep.subr.mxu0 0.0
    %4510 = vmatpush1.msra.mxu0 0.0
    %4511 = vmatprep.subr.mxu0 0.0
    %4512 = vmatpush1.msra.mxu0 0.0
    %4513 = vmatprep.mubr.f32.mxu0 0.0
    %4514 = vmatmul.mubr.f32.gmra.mrb[0].mxu0 %v4278
    %v4515 = vpop.f32.mrb[0].mxu0
    %v4516 = vadd.f32 0.0, %v4515
    %v4517 = vpop.f32.mrb[0].mxu0
    %4518 = vdwg.mxu0
    %v4519 = vadd.f32 %v4159, %v4516
    %v4520 = vxor.u32 %v4519, 2147483648
    %v4521 = vmul.f32 %v4520, 1.442695
    %v4522 = vpow.pop %v4521
    %v4523 = vadd.f32 %v4522, 1.0
    %v4524 = vrcp.pop %v4523
    %v4525 = vmul.f32 1.0, %v4524
    %v4526 = vtanh.pop %v4519
    %v4527 = vmul.f32 %v4525, %v4257
    %4529 = vrot.lane.b32.xlu0 %v4526, 64
    %v4530 = vpop.permute.xlu0 %4529
    %v4532 = vmul.f32 %v4525, %v4530
    %4534 = vrot.lane.b32.xlu0 %v4532, 32
    %v4535 = vpop.permute.xlu0 %4534
    %v4537 = vadd.f32 %v4527, %v4535
    %v4538 = vtanh.pop %v4537
    %4540 = vrot.lane.b32.xlu0 %v4538, 64
    %v4541 = vpop.permute.xlu0 %4540
    %v4543 = vmul.f32 %v4525, %v4541
    %4545 = vrot.lane.b32.xlu0 %v4543, 32
    %v4546 = vpop.permute.xlu0 %4545
    %v4547 = vsel %vm346, %v4546, 0
    %4549 = vmatprep.subr.mxu0 0.0
    %4550 = vmatpush1.msra.mxu0 %v4264
    %4551 = vmatprep.subr.mxu0 0.0
    %4552 = vmatpush1.msra.mxu0 %v4265
    %4553 = vmatprep.subr.mxu0 0.0
    %4554 = vmatpush1.msra.mxu0 %v4266
    %4555 = vmatprep.subr.mxu0 0.0
    %4556 = vmatpush1.msra.mxu0 %v4267
    %4557 = vmatprep.subr.mxu0 0.0
    %4558 = vmatpush1.msra.mxu0 0.0
    %4559 = vmatprep.subr.mxu0 0.0
    %4560 = vmatpush1.msra.mxu0 0.0
    %4561 = vmatprep.subr.mxu0 0.0
    %4562 = vmatpush1.msra.mxu0 0.0
    %4563 = vmatprep.subr.mxu0 0.0
    %4564 = vmatpush1.msra.mxu0 0.0
    %4565 = vmatprep.subr.mxu0 0.0
    %4566 = vmatpush1.msra.mxu0 0.0
    %4567 = vmatprep.subr.mxu0 0.0
    %4568 = vmatpush1.msra.mxu0 0.0
    %4569 = vmatprep.subr.mxu0 0.0
    %4570 = vmatpush1.msra.mxu0 0.0
    %4571 = vmatprep.subr.mxu0 0.0
    %4572 = vmatpush1.msra.mxu0 0.0
    %4573 = vmatprep.subr.mxu0 0.0
    %4574 = vmatpush1.msra.mxu0 0.0
    %4575 = vmatprep.subr.mxu0 0.0
    %4576 = vmatpush1.msra.mxu0 0.0
    %4577 = vmatprep.subr.mxu0 0.0
    %4578 = vmatpush1.msra.mxu0 0.0
    %4579 = vmatprep.subr.mxu0 0.0
    %4580 = vmatpush1.msra.mxu0 0.0
    %4581 = vmatprep.subr.mxu0 0.0
    %4582 = vmatpush1.msra.mxu0 0.0
    %4583 = vmatprep.subr.mxu0 0.0
    %4584 = vmatpush1.msra.mxu0 0.0
    %4585 = vmatprep.subr.mxu0 0.0
    %4586 = vmatpush1.msra.mxu0 0.0
    %4587 = vmatprep.subr.mxu0 0.0
    %4588 = vmatpush1.msra.mxu0 0.0
    %4589 = vmatprep.subr.mxu0 0.0
    %4590 = vmatpush1.msra.mxu0 0.0
    %4591 = vmatprep.subr.mxu0 0.0
    %4592 = vmatpush1.msra.mxu0 0.0
    %4593 = vmatprep.subr.mxu0 0.0
    %4594 = vmatpush1.msra.mxu0 0.0
    %4595 = vmatprep.subr.mxu0 0.0
    %4596 = vmatpush1.msra.mxu0 0.0
    %4597 = vmatprep.subr.mxu0 0.0
    %4598 = vmatpush1.msra.mxu0 0.0
    %4599 = vmatprep.subr.mxu0 0.0
    %4600 = vmatpush1.msra.mxu0 0.0
    %4601 = vmatprep.subr.mxu0 0.0
    %4602 = vmatpush1.msra.mxu0 0.0
    %4603 = vmatprep.subr.mxu0 0.0
    %4604 = vmatpush1.msra.mxu0 0.0
    %4605 = vmatprep.subr.mxu0 0.0
    %4606 = vmatpush1.msra.mxu0 0.0
    %4607 = vmatprep.subr.mxu0 0.0
    %4608 = vmatpush1.msra.mxu0 0.0
    %4609 = vmatprep.subr.mxu0 0.0
    %4610 = vmatpush1.msra.mxu0 0.0
    %4611 = vmatprep.subr.mxu0 0.0
    %4612 = vmatpush1.msra.mxu0 0.0
    %4613 = vmatprep.mubr.f32.mxu0 0.0
    %4614 = vmatmul.mubr.f32.gmra.mrb[0].mxu0 %v4547
    %v4615 = vpop.f32.mrb[0].mxu0
    %v4616 = vadd.f32 %v4273, %v4615
    %v4617 = vpop.f32.mrb[0].mxu0
    %4618 = vdwg.mxu0
    %4620 = vrot.lane.b32.xlu0 %v4448, 32
    %v4621 = vpop.permute.xlu0 %4620
    %v4622 = vsel %vm346, %v4621, 0
    %4624 = vmatprep.subr.mxu0 0.0
    %4625 = vmatpush1.msra.mxu0 %v4350
    %4626 = vmatprep.subr.mxu0 0.0
    %4627 = vmatpush1.msra.mxu0 %v4351
    %4628 = vmatprep.subr.mxu0 0.0
    %4629 = vmatpush1.msra.mxu0 %v4352
    %4630 = vmatprep.subr.mxu0 0.0
    %4631 = vmatpush1.msra.mxu0 %v4353
    %4632 = vmatprep.subr.mxu0 0.0
    %4633 = vmatpush1.msra.mxu0 0.0
    %4634 = vmatprep.subr.mxu0 0.0
    %4635 = vmatpush1.msra.mxu0 0.0
    %4636 = vmatprep.subr.mxu0 0.0
    %4637 = vmatpush1.msra.mxu0 0.0
    %4638 = vmatprep.subr.mxu0 0.0
    %4639 = vmatpush1.msra.mxu0 0.0
    %4640 = vmatprep.subr.mxu0 0.0
    %4641 = vmatpush1.msra.mxu0 0.0
    %4642 = vmatprep.subr.mxu0 0.0
    %4643 = vmatpush1.msra.mxu0 0.0
    %4644 = vmatprep.subr.mxu0 0.0
    %4645 = vmatpush1.msra.mxu0 0.0
    %4646 = vmatprep.subr.mxu0 0.0
    %4647 = vmatpush1.msra.mxu0 0.0
    %4648 = vmatprep.subr.mxu0 0.0
    %4649 = vmatpush1.msra.mxu0 0.0
    %4650 = vmatprep.subr.mxu0 0.0
    %4651 = vmatpush1.msra.mxu0 0.0
    %4652 = vmatprep.subr.mxu0 0.0
    %4653 = vmatpush1.msra.mxu0 0.0
    %4654 = vmatprep.subr.mxu0 0.0
    %4655 = vmatpush1.msra.mxu0 0.0
    %4656 = vmatprep.subr.mxu0 0.0
    %4657 = vmatpush1.msra.mxu0 0.0
    %4658 = vmatprep.subr.mxu0 0.0
    %4659 = vmatpush1.msra.mxu0 0.0
    %4660 = vmatprep.subr.mxu0 0.0
    %4661 = vmatpush1.msra.mxu0 0.0
    %4662 = vmatprep.subr.mxu0 0.0
    %4663 = vmatpush1.msra.mxu0 0.0
    %4664 = vmatprep.subr.mxu0 0.0
    %4665 = vmatpush1.msra.mxu0 0.0
    %4666 = vmatprep.subr.mxu0 0.0
    %4667 = vmatpush1.msra.mxu0 0.0
    %4668 = vmatprep.subr.mxu0 0.0
    %4669 = vmatpush1.msra.mxu0 0.0
    %4670 = vmatprep.subr.mxu0 0.0
    %4671 = vmatpush1.msra.mxu0 0.0
    %4672 = vmatprep.subr.mxu0 0.0
    %4673 = vmatpush1.msra.mxu0 0.0
    %4674 = vmatprep.subr.mxu0 0.0
    %4675 = vmatpush1.msra.mxu0 0.0
    %4676 = vmatprep.subr.mxu0 0.0
    %4677 = vmatpush1.msra.mxu0 0.0
    %4678 = vmatprep.subr.mxu0 0.0
    %4679 = vmatpush1.msra.mxu0 0.0
    %4680 = vmatprep.subr.mxu0 0.0
    %4681 = vmatpush1.msra.mxu0 0.0
    %4682 = vmatprep.subr.mxu0 0.0
    %4683 = vmatpush1.msra.mxu0 0.0
    %4684 = vmatprep.subr.mxu0 0.0
    %4685 = vmatpush1.msra.mxu0 0.0
    %4686 = vmatprep.subr.mxu0 0.0
    %4687 = vmatpush1.msra.mxu0 0.0
    %4688 = vmatprep.mubr.f32.mxu0 0.0
    %4689 = vmatmul.mubr.f32.gmra.mrb[0].mxu0 %v4622
    %v4690 = vpop.f32.mrb[0].mxu0
    %v4691 = vadd.f32 0.0, %v4690
    %v4692 = vpop.f32.mrb[0].mxu0
    %4693 = vdwg.mxu0
    %v4694 = vadd.f32 %v4616, %v4691
    %v4695 = vxor.u32 %v4694, 2147483648
    %v4696 = vmul.f32 %v4695, 1.442695
    %v4697 = vpow.pop %v4696
    %v4698 = vadd.f32 %v4697, 1.0
    %v4699 = vrcp.pop %v4698
    %v4700 = vmul.f32 1.0, %v4699
    %v4701 = vtanh.pop %v4694
    %v4702 = vmul.f32 %v4700, %v4442
    %4704 = vrot.lane.b32.xlu0 %v4701, 64
    %v4705 = vpop.permute.xlu0 %4704
    %v4707 = vmul.f32 %v4700, %v4705
    %4709 = vrot.lane.b32.xlu0 %v4707, 32
    %v4710 = vpop.permute.xlu0 %4709
    %v4712 = vadd.f32 %v4702, %v4710
    %v4713 = vtanh.pop %v4712
    %4715 = vrot.lane.b32.xlu0 %v4713, 64
    %v4716 = vpop.permute.xlu0 %4715
    %v4718 = vmul.f32 %v4700, %v4716
    %4720 = vrot.lane.b32.xlu0 %v4718, 32
    %v4721 = vpop.permute.xlu0 %4720
    %4724 = vst.msk [vmem:[#allocation13] sm:$0xff] %vm346, %v4621
    %4725 = vst.msk [vmem:[#allocation13 + $0x8] sm:$0xff] %vm346, %v4721
    // Predicated region
    $region170: #{bert_lstm_forward.1} parent=1 // pred_check
      _
    $region171: #{bert_lstm_forward.1} parent=1 // pred_check_branch
      %4727 = sbr.rel (0) target = $region173
    $region172: #{bert_lstm_forward.1} parent=1 // pred_region
      %s4729 = ssub.s32 256, 256
      %4730 = vsyncadd [#allocation4], %s4729
      %s4731 = sshll.u32 [#allocation13], 4
      %s4732 = int_to_ptr.vmem [resolvable:$true] %s4731
      %4737 = dma.vmem_to_hbm [thread:$0]  %s4732, 256, %s73, [#allocation4], 128, 128, 8
    $region173: #{bert_lstm_forward.1} parent=1 // pred_fallthru
      _
    // Predicated region
    $region174: #{bert_lstm_forward.1} parent=1 // pred_check
      _
    $region175: #{bert_lstm_forward.1} parent=1 // pred_check_branch
      %4739 = sbr.rel (0) target = $region177
    $region176: #{bert_lstm_forward.1} parent=1 // pred_region
      %4740 = dma.done [#allocation4], 256
    $region177: #{bert_lstm_forward.1} parent=1 // pred_fallthru
      _
    %4741 = vsyncpa [#allocation3], 1
    %4742 = vsyncpa [#allocation6], 1
    %4743 = vsyncpa [#allocation9], 1
    %4744 = vsyncpa [#allocation12], 1
    %4745 = vsyncpa [#allocation4], 1

</llo_original>
